<compile_context>
chip_gen: v7x
topology: tpu7x:2x2x1
jax: 0.10.0
libtpu: 0.0.40
codegen_flags: <defaults>
</compile_context>

<pallas_src>
import functools
import math

import jax
import jax.numpy as jnp
from jax.experimental import pallas as pl
from jax.experimental.pallas import tpu as pltpu

LN_EPS = 1e-12      # BeitConfig.layer_norm_eps (LayerNorm stats stay in f32)
NORM_EPS = 1e-12    # epsilon for the final L2 normalization

PARAM_ORDER = (
    "ln1_g", "ln1_b",
    "wqkv", "bqkv", "wo", "bo",
    "ln2_g", "ln2_b",
    "w1", "b1", "w2", "b2",
)


# ------------------------------ chip-aware knobs ------------------------------


def _device_kind() -> str:
    try:
        return jax.devices()[0].device_kind.lower()
    except Exception:
        return ""


def _default_tb(B: int) -> int:
    kind = _device_kind()
    # v7x: 2 TensorCores per chip -> give the "parallel" batch axis 2 blocks
    # (costs one extra streaming pass over the weights, hidden by ~3.2 TB/s HBM).
    if "v7" in kind and B % 2 == 0 and (B // 2) % 8 == 0:
        return B // 2
    return B


def _vmem_limit_bytes():
    kind = _device_kind()
    if "v7" in kind:
        return 48 * 1024 * 1024          # 64 MiB physical VMEM per TC
    if "v5" in kind or "v6" in kind:
        return 100 * 1024 * 1024         # 128 MiB physical VMEM
    return None                          # unknown chip: keep compiler default


def _elementwise_dtype():
    kind = _device_kind()
    if "v6" in kind or "v7" in kind:
        return jnp.bfloat16              # bf16 VPU/EUP available
    return jnp.float32                   # v5e and older: no bf16 VPU/EUP


# --------------------------------- math helpers --------------------------------


def _layernorm(h, g, b):
    # h: (BS, D) f32; g, b: (1, D) f32 -- stats always in f32.
    mu = jnp.mean(h, axis=-1, keepdims=True)
    var = jnp.mean(jnp.square(h - mu), axis=-1, keepdims=True)
    return (h - mu) * jax.lax.rsqrt(var + LN_EPS) * g + b


def _gelu_tanh(x):
    # tanh-approx GELU (HF BEiT uses exact erf gelu -- tiny numeric diff).
    c = math.sqrt(2.0 / math.pi)
    return 0.5 * x * (1.0 + jnp.tanh(c * (x + 0.044715 * x * x * x)))


# --------------------- fused transformer stack + pool/norm ---------------------


def beit_stack_kernel(num_heads, f_chunk, ew_dtype,
                      x_ref,
                      ln1_g, ln1_b, wqkv, bqkv, wo, bo,
                      ln2_g, ln2_b, w1, b1, w2, b2,
                      pooled_ref,
                      act_ref):
    """Grid = (batch_blocks, L).

    The (tb,S,D) activation is carried across layers in the VMEM scratch
    `act_ref`; the only HBM output is the pooled, L2-normalized (tb,D) block,
    written at the last layer.  Per-layer weights are streamed via BlockSpec.
    """
    layer = pl.program_id(1)
    n_layers = pl.num_programs(1)

    TB, S, D = act_ref.shape
    H = num_heads
    dh = D // H
    scale = 1.0 / math.sqrt(float(dh))
    BS = TB * S
    bf16 = jnp.bfloat16
    f32 = jnp.float32

    @pl.when(layer == 0)
    def _():
        act_ref[...] = x_ref[...].astype(f32)

    # fold batch into sublanes -> lane/sublane-dense (BS, D) matmul operands
    x = act_ref[...].reshape(BS, D)

    # ---- multi-head self attention (pre-LN), fused QKV projection ----
    xn = _layernorm(x, ln1_g[0], ln1_b[0])
    qkv = jnp.dot(xn.astype(bf16), wqkv[0],
                  preferred_element_type=f32) + bqkv[0]            # (BS, 3D) f32
    q = qkv[:, 0:D].reshape(TB, S, D)
    k = qkv[:, D:2 * D].reshape(TB, S, D)
    v = qkv[:, 2 * D:3 * D].reshape(TB, S, D)

    wo_full = wo[0]                                                # (D, D) bf16
    attn = jnp.zeros((BS, D), f32)
    for h in range(H):                                             # static, small H
        sl = slice(h * dh, (h + 1) * dh)
        qh = q[:, :, sl].astype(bf16)
        kh = k[:, :, sl].astype(bf16)
        vh = v[:, :, sl].astype(bf16)
        s = jnp.einsum("bqd,bkd->bqk", qh, kh,
                       preferred_element_type=f32) * scale         # (TB, S, S) f32
        s = s - jnp.max(s, axis=-1, keepdims=True)
        e = jnp.exp(s)                                             # f32 softmax
        # approx reciprocal: fine for embeddings; use exact divide for bit-parity.
        p = e * pl.reciprocal(jnp.sum(e, axis=-1, keepdims=True), approx=True)
        ctx_h = jnp.einsum("bqk,bkd->bqd", p.astype(bf16), vh,
                           preferred_element_type=f32).reshape(BS, dh)
        # Fold the output projection into the head loop:
        #   ctx @ Wo == sum_h ctx_h @ Wo[h*dh:(h+1)*dh, :]
        # -> no lane-dim concatenate, no H live ctx tensors.
        attn = attn + jnp.dot(ctx_h.astype(bf16), wo_full[sl, :],
                              preferred_element_type=f32)
    x = x + attn + bo[0]

    # ---- MLP (pre-LN), tiled along F to bound the f32 hidden intermediate ----
    xn2 = _layernorm(x, ln2_g[0], ln2_b[0]).astype(bf16)
    w1_full = w1[0]                                                # (D, F) bf16
    w2_full = w2[0]                                                # (F, D) bf16
    b1_full = b1[0]                                                # (1, F) f32
    Fdim = w1_full.shape[-1]
    fc = f_chunk
    mlp = jnp.zeros((BS, D), f32)
    for c in range(Fdim // fc):                                    # static chunks
        lo, hi = c * fc, (c + 1) * fc
        hmid = (jnp.dot(xn2, w1_full[:, lo:hi], preferred_element_type=f32)
                + b1_full[:, lo:hi]).astype(ew_dtype)              # (BS, fc)
        hmid = _gelu_tanh(hmid)                                    # bf16 on v6e/v7x
        mlp = mlp + jnp.dot(hmid.astype(bf16), w2_full[lo:hi, :],
                            preferred_element_type=f32)
    x = x + mlp + b2[0]

    act_ref[...] = x.reshape(TB, S, D)

    # ---- fused mean-pool over S + L2 normalize over D at the last layer ----
    @pl.when(layer == n_layers - 1)
    def _():
        m = jnp.sum(x.reshape(TB, S, D), axis=1) * (1.0 / S)       # (TB, D)
        ss = jnp.sum(m * m, axis=-1, keepdims=True)
        pooled_ref[...] = (m * jax.lax.rsqrt(ss + NORM_EPS)).astype(pooled_ref.dtype)


def beit_encoder_pooled(x, params, num_heads, *, tb=None, f_chunk=1024):
    """All L transformer layers + mean-pool + L2-normalize in ONE pallas_call.

    x: (B, S, D) f32 embeddings.  Returns (B, D) L2-normalized features.
    """
    B, S, D = x.shape
    L = params["wqkv"].shape[0]
    F = params["w1"].shape[-1]
    if tb is None:
        tb = _default_tb(B)
    assert B % tb == 0, (B, tb)
    n_batch_blocks = B // tb

    fc = min(f_chunk, F)
    if F % fc != 0:
        fc = F                          # fall back to a single chunk

    weights = [params[key] for key in PARAM_ORDER]

    def wspec(w):
        rest = tuple(w.shape[1:])
        n = len(rest)
        # stream layer l's slice of the stacked weight each inner grid step
        return pl.BlockSpec((1,) + rest, lambda b, l, _n=n: (l,) + (0,) * _n)

    # x is only consumed at layer 0 (its block index is layer-invariant, so it
    # is DMA'd once per batch block; the double-buffered slot could be freed
    # with pl.Buffered(1) / pl.ANY + manual copy as a follow-up).
    in_specs = [pl.BlockSpec((tb, S, D), lambda b, l: (b, 0, 0))]
    in_specs += [wspec(w) for w in weights]

    dh = D // num_heads
    flops_per_layer = (2 * B * S * D * (3 * D + D + 2 * F)
                       + 4 * B * num_heads * S * S * dh)
    transc_per_layer = B * num_heads * S * S + B * S * F
    weight_bytes = sum(int(w.size) * w.dtype.itemsize for w in weights)
    cost = pl.CostEstimate(
        flops=int(L * flops_per_layer),
        transcendentals=int(L * transc_per_layer),
        # weights are re-streamed once per batch block
        bytes_accessed=int(x.size * x.dtype.itemsize
                           + B * D * x.dtype.itemsize
                           + n_batch_blocks * weight_bytes),
    )

    compiler_kwargs = dict(dimension_semantics=("parallel", "arbitrary"))
    vmem_limit = _vmem_limit_bytes()
    if vmem_limit is not None:
        compiler_kwargs["vmem_limit_bytes"] = vmem_limit

    kernel = functools.partial(beit_stack_kernel, num_heads, fc,
                               _elementwise_dtype())

    return pl.pallas_call(
        kernel,
        out_shape=jax.ShapeDtypeStruct((B, D), x.dtype),
        grid=(n_batch_blocks, L),
        in_specs=in_specs,
        out_specs=pl.BlockSpec((tb, D), lambda b, l: (b, 0)),
        scratch_shapes=[pltpu.VMEM((tb, S, D), jnp.float32)],
        compiler_params=pltpu.CompilerParams(**compiler_kwargs),
        cost_estimate=cost,
    )(x, *weights)


# ----------------------- parameter init (deterministic) -----------------------


def init_params(key, V, S, D, H, F, num_layers):
    f32, bf16 = jnp.float32, jnp.bfloat16
    s = 0.02
    k_tok, k_pos, k_qkv, k_o, k_w1, k_w2 = jax.random.split(key, 6)
    L = num_layers
    return dict(
        tok_emb=jax.random.normal(k_tok, (V, D), f32) * s,
        pos_emb=jax.random.normal(k_pos, (S, D), f32) * s,
        # LayerNorm params / biases stay f32; matmul weights stored bf16.
        ln1_g=jnp.ones((L, 1, D), f32), ln1_b=jnp.zeros((L, 1, D), f32),
        wqkv=(jax.random.normal(k_qkv, (L, D, 3 * D), f32) * s).astype(bf16),
        bqkv=jnp.zeros((L, 1, 3 * D), f32),
        wo=(jax.random.normal(k_o, (L, D, D), f32) * s).astype(bf16),
        bo=jnp.zeros((L, 1, D), f32),
        ln2_g=jnp.ones((L, 1, D), f32), ln2_b=jnp.zeros((L, 1, D), f32),
        w1=(jax.random.normal(k_w1, (L, D, F), f32) * s).astype(bf16),
        b1=jnp.zeros((L, 1, F), f32),
        w2=(jax.random.normal(k_w2, (L, F, D), f32) * s).astype(bf16),
        b2=jnp.zeros((L, 1, D), f32),
    )


# --------------------------------- forward ------------------------------------


def hugging_beit_text_forward(token_ids, params, num_per_batch, num_heads):
    """Equivalent of HuggingBeitImageBackbone.forward on pre-tokenized ids.

    token_ids: (B_flat, S) int32 where B_flat = batch * num_per_batch.
    Returns (batch, num_per_batch, D), L2-normalized over D.
    """
    # embedding gather + positional embedding: glue (plain JAX)
    x = jnp.take(params["tok_emb"], token_ids, axis=0) + params["pos_emb"][None, :, :]
    x = x.astype(jnp.float32)

    # transformer encoder + mean-pool + L2-norm: one fused Pallas call
    feats = beit_encoder_pooled(x, params, num_heads)              # (B_flat, D)
    return feats.reshape(-1, num_per_batch, feats.shape[-1])


if __name__ == "__main__":
    # small synthetic config (benchmark at S%128==0, D>=512 for real tuning)
    batch, num_per_batch = 2, 4        # 2 image batches, 4 text prompts each
    S, D, H, F = 8, 32, 4, 64          # seq, hidden, heads, mlp
    V, num_layers = 64, 2

    key = jax.random.PRNGKey(0)
    k_ids, k_params = jax.random.split(key)

    B_flat = batch * num_per_batch
    # stand-in for tokenizer output (padded/truncated token ids)
    token_ids = jax.random.randint(k_ids, (B_flat, S), 0, V, dtype=jnp.int32)
    params = init_params(k_params, V, S, D, H, F, num_layers)

    txt_feats = hugging_beit_text_forward(token_ids, params, num_per_batch, H)
    txt_feats = jax.block_until_ready(txt_feats)

    assert txt_feats.shape == (batch, num_per_batch, D), txt_feats.shape
    # sanity: rows are L2-normalized
    norms = jnp.linalg.norm(txt_feats, axis=-1)
    assert bool(jnp.all(jnp.abs(norms - 1.0) < 1e-3)), norms
    print("KERNEL_OK")
</pallas_src>

<mosaic_0001>
module attributes {stable_mosaic.version = 11 : i64} {
  func.func @beit_stack_kernel(%arg0: i32, %arg1: i32, %arg2: memref<8x8x32xf32, #tpu.memory_space<vmem>>, %arg3: memref<1x1x32xf32, #tpu.memory_space<vmem>>, %arg4: memref<1x1x32xf32, #tpu.memory_space<vmem>>, %arg5: memref<1x32x96xbf16, #tpu.memory_space<vmem>>, %arg6: memref<1x1x96xf32, #tpu.memory_space<vmem>>, %arg7: memref<1x32x32xbf16, #tpu.memory_space<vmem>>, %arg8: memref<1x1x32xf32, #tpu.memory_space<vmem>>, %arg9: memref<1x1x32xf32, #tpu.memory_space<vmem>>, %arg10: memref<1x1x32xf32, #tpu.memory_space<vmem>>, %arg11: memref<1x32x64xbf16, #tpu.memory_space<vmem>>, %arg12: memref<1x1x64xf32, #tpu.memory_space<vmem>>, %arg13: memref<1x64x32xbf16, #tpu.memory_space<vmem>>, %arg14: memref<1x1x32xf32, #tpu.memory_space<vmem>>, %arg15: memref<8x32xf32, #tpu.memory_space<vmem>>, %arg16: memref<8x8x32xf32, #tpu.memory_space<vmem>>) attributes {dimension_semantics = [#tpu.dimension_semantics<parallel>, #tpu.dimension_semantics<arbitrary>], iteration_bounds = array<i64: 1, 2>, scalar_prefetch = 0 : i64, scratch_operands = 1 : i64, tpu.core_type = #tpu.core_type<tc>, window_params = [{transform_indices = @transform_0, window_bounds = array<i64: 8, 8, 32>}, {transform_indices = @transform_1, window_bounds = array<i64: 1, 1, 32>}, {transform_indices = @transform_2, window_bounds = array<i64: 1, 1, 32>}, {transform_indices = @transform_3, window_bounds = array<i64: 1, 32, 96>}, {transform_indices = @transform_4, window_bounds = array<i64: 1, 1, 96>}, {transform_indices = @transform_5, window_bounds = array<i64: 1, 32, 32>}, {transform_indices = @transform_6, window_bounds = array<i64: 1, 1, 32>}, {transform_indices = @transform_7, window_bounds = array<i64: 1, 1, 32>}, {transform_indices = @transform_8, window_bounds = array<i64: 1, 1, 32>}, {transform_indices = @transform_9, window_bounds = array<i64: 1, 32, 64>}, {transform_indices = @transform_10, window_bounds = array<i64: 1, 1, 64>}, {transform_indices = @transform_11, window_bounds = array<i64: 1, 64, 32>}, {transform_indices = @transform_12, window_bounds = array<i64: 1, 1, 32>}, {transform_indices = @transform_13, window_bounds = array<i64: 8, 32>}]} {
    %c0_i32 = arith.constant 0 : i32
    %0 = arith.cmpi eq, %arg1, %c0_i32 : i32
    %1 = arith.extui %0 : i1 to i32
    %c0_i32_0 = arith.constant 0 : i32
    %2 = arith.cmpi ne, %1, %c0_i32_0 : i32
    scf.if %2 {
      %c0_85 = arith.constant 0 : index
      %c0_86 = arith.constant 0 : index
      %c0_87 = arith.constant 0 : index
      %220 = vector.load %arg2[%c0_85, %c0_86, %c0_87] : memref<8x8x32xf32, #tpu.memory_space<vmem>>, vector<8x8x32xf32>
      %c0_88 = arith.constant 0 : index
      %c0_89 = arith.constant 0 : index
      %c0_90 = arith.constant 0 : index
      %221 = vector.load %arg16[%c0_88, %c0_89, %c0_90] : memref<8x8x32xf32, #tpu.memory_space<vmem>>, vector<8x8x32xf32>
      tpu.vector_store %arg16[%c0_88, %c0_89, %c0_90], %220 {strides = array<i32>} : memref<8x8x32xf32, #tpu.memory_space<vmem>>, vector<8x8x32xf32>,
    } else {
    }
    %c0 = arith.constant 0 : index
    %c0_1 = arith.constant 0 : index
    %c0_2 = arith.constant 0 : index
    %3 = vector.load %arg16[%c0, %c0_1, %c0_2] : memref<8x8x32xf32, #tpu.memory_space<vmem>>, vector<8x8x32xf32>
    %4 = vector.shape_cast %3 : vector<8x8x32xf32> to vector<64x32xf32>
    %c0_3 = arith.constant 0 : index
    %c0_4 = arith.constant 0 : index
    %c0_5 = arith.constant 0 : index
    %5 = vector.load %arg3[%c0_3, %c0_4, %c0_5] : memref<1x1x32xf32, #tpu.memory_space<vmem>>, vector<1x1x32xf32>
    %6 = vector.shape_cast %5 : vector<1x1x32xf32> to vector<1x32xf32>
    %c0_6 = arith.constant 0 : index
    %c0_7 = arith.constant 0 : index
    %c0_8 = arith.constant 0 : index
    %7 = vector.load %arg4[%c0_6, %c0_7, %c0_8] : memref<1x1x32xf32, #tpu.memory_space<vmem>>, vector<1x1x32xf32>
    %8 = vector.shape_cast %7 : vector<1x1x32xf32> to vector<1x32xf32>
    %cst = arith.constant dense<0.000000e+00> : vector<64xf32>
    %9 = vector.multi_reduction <add>, %4, %cst [1] : vector<64x32xf32> to vector<64xf32>
    %10 = vector.shape_cast %9 : vector<64xf32> to vector<64x1xf32>
    %cst_9 = arith.constant 3.200000e+01 : f32
    %11 = vector.broadcast %cst_9 : f32 to vector<64x1xf32>
    %12 = arith.divf %10, %11 : vector<64x1xf32>
    %13 = vector.broadcast %12 : vector<64x1xf32> to vector<64x32xf32>
    %14 = arith.subf %4, %13 : vector<64x32xf32>
    %15 = arith.mulf %14, %14 : vector<64x32xf32>
    %cst_10 = arith.constant dense<0.000000e+00> : vector<64xf32>
    %16 = vector.multi_reduction <add>, %15, %cst_10 [1] : vector<64x32xf32> to vector<64xf32>
    %17 = vector.shape_cast %16 : vector<64xf32> to vector<64x1xf32>
    %cst_11 = arith.constant 3.200000e+01 : f32
    %18 = vector.broadcast %cst_11 : f32 to vector<64x1xf32>
    %19 = arith.divf %17, %18 : vector<64x1xf32>
    %20 = vector.broadcast %12 : vector<64x1xf32> to vector<64x32xf32>
    %21 = arith.subf %4, %20 : vector<64x32xf32>
    %cst_12 = arith.constant 9.99999996E-13 : f32
    %22 = vector.broadcast %cst_12 : f32 to vector<64x1xf32>
    %23 = arith.addf %19, %22 : vector<64x1xf32>
    %24 = math.rsqrt %23 : vector<64x1xf32>
    %25 = vector.broadcast %24 : vector<64x1xf32> to vector<64x32xf32>
    %26 = arith.mulf %21, %25 : vector<64x32xf32>
    %27 = vector.broadcast %6 : vector<1x32xf32> to vector<64x32xf32>
    %28 = arith.mulf %26, %27 : vector<64x32xf32>
    %29 = vector.broadcast %8 : vector<1x32xf32> to vector<64x32xf32>
    %30 = arith.addf %28, %29 : vector<64x32xf32>
    %31 = arith.truncf %30 : vector<64x32xf32> to vector<64x32xbf16>
    %c0_13 = arith.constant 0 : index
    %c0_14 = arith.constant 0 : index
    %c0_15 = arith.constant 0 : index
    %32 = vector.load %arg5[%c0_13, %c0_14, %c0_15] : memref<1x32x96xbf16, #tpu.memory_space<vmem>>, vector<1x32x96xbf16>
    %33 = vector.shape_cast %32 : vector<1x32x96xbf16> to vector<32x96xbf16>
    %cst_16 = arith.constant dense<0.000000e+00> : vector<64x96xf32>
    %34 = tpu.matmul %31, %33, %cst_16 {dimension_numbers = #tpu.dot_dimension_numbers<[1], [0], [0], [1], [0, 0, 1, 1], [], []>} : vector<64x32xbf16>, vector<32x96xbf16>, vector<64x96xf32> -> vector<64x96xf32>
    %c0_17 = arith.constant 0 : index
    %c0_18 = arith.constant 0 : index
    %c0_19 = arith.constant 0 : index
    %35 = vector.load %arg6[%c0_17, %c0_18, %c0_19] : memref<1x1x96xf32, #tpu.memory_space<vmem>>, vector<1x1x96xf32>
    %36 = vector.shape_cast %35 : vector<1x1x96xf32> to vector<1x96xf32>
    %37 = vector.broadcast %36 : vector<1x96xf32> to vector<64x96xf32>
    %38 = arith.addf %34, %37 : vector<64x96xf32>
    %39 = vector.extract_strided_slice %38 {offsets = [0, 0], sizes = [64, 32], strides = [1, 1]} : vector<64x96xf32> to vector<64x32xf32>
    %40 = vector.shape_cast %39 : vector<64x32xf32> to vector<8x8x32xf32>
    %41 = vector.extract_strided_slice %38 {offsets = [0, 32], sizes = [64, 32], strides = [1, 1]} : vector<64x96xf32> to vector<64x32xf32>
    %42 = vector.shape_cast %41 : vector<64x32xf32> to vector<8x8x32xf32>
    %43 = vector.extract_strided_slice %38 {offsets = [0, 64], sizes = [64, 32], strides = [1, 1]} : vector<64x96xf32> to vector<64x32xf32>
    %44 = vector.shape_cast %43 : vector<64x32xf32> to vector<8x8x32xf32>
    %c0_20 = arith.constant 0 : index
    %c0_21 = arith.constant 0 : index
    %c0_22 = arith.constant 0 : index
    %45 = vector.load %arg7[%c0_20, %c0_21, %c0_22] : memref<1x32x32xbf16, #tpu.memory_space<vmem>>, vector<1x32x32xbf16>
    %46 = vector.shape_cast %45 : vector<1x32x32xbf16> to vector<32x32xbf16>
    %cst_23 = arith.constant 0.000000e+00 : f32
    %47 = vector.broadcast %cst_23 : f32 to vector<64x32xf32>
    %48 = vector.extract_strided_slice %40 {offsets = [0, 0, 0], sizes = [8, 8, 8], strides = [1, 1, 1]} : vector<8x8x32xf32> to vector<8x8x8xf32>
    %49 = arith.truncf %48 : vector<8x8x8xf32> to vector<8x8x8xbf16>
    %50 = vector.extract_strided_slice %42 {offsets = [0, 0, 0], sizes = [8, 8, 8], strides = [1, 1, 1]} : vector<8x8x32xf32> to vector<8x8x8xf32>
    %51 = arith.truncf %50 : vector<8x8x8xf32> to vector<8x8x8xbf16>
    %52 = vector.extract_strided_slice %44 {offsets = [0, 0, 0], sizes = [8, 8, 8], strides = [1, 1, 1]} : vector<8x8x32xf32> to vector<8x8x8xf32>
    %53 = arith.truncf %52 : vector<8x8x8xf32> to vector<8x8x8xbf16>
    "tpu.trace_start"() <{level = 10 : i32, message = "bqd,bkd->bqk"}> : () -> ()
    %cst_24 = arith.constant dense<0.000000e+00> : vector<8x8x8xf32>
    %54 = tpu.matmul %49, %51, %cst_24 {dimension_numbers = #tpu.dot_dimension_numbers<[2], [2], [1], [1], [0, 0, 0, 1, 1, 1], [0], [0]>} : vector<8x8x8xbf16>, vector<8x8x8xbf16>, vector<8x8x8xf32> -> vector<8x8x8xf32>
    "tpu.trace_stop"() : () -> ()
    %cst_25 = arith.constant 0.353553385 : f32
    %55 = vector.broadcast %cst_25 : f32 to vector<8x8x8xf32>
    %56 = arith.mulf %54, %55 : vector<8x8x8xf32>
    %cst_26 = arith.constant dense<0xFF800000> : vector<8x8xf32>
    %57 = vector.multi_reduction <maximumf>, %56, %cst_26 [2] : vector<8x8x8xf32> to vector<8x8xf32>
    %58 = vector.shape_cast %57 : vector<8x8xf32> to vector<8x8x1xf32>
    %59 = vector.broadcast %58 : vector<8x8x1xf32> to vector<8x8x8xf32>
    %60 = arith.subf %56, %59 : vector<8x8x8xf32>
    %61 = math.exp %60 : vector<8x8x8xf32>
    %cst_27 = arith.constant dense<0.000000e+00> : vector<8x8xf32>
    %62 = vector.multi_reduction <add>, %61, %cst_27 [2] : vector<8x8x8xf32> to vector<8x8xf32>
    %63 = vector.shape_cast %62 : vector<8x8xf32> to vector<8x8x1xf32>
    %64 = tpu.reciprocal %63 {approx = true} : vector<8x8x1xf32> -> vector<8x8x1xf32>
    %65 = vector.broadcast %64 : vector<8x8x1xf32> to vector<8x8x8xf32>
    %66 = arith.mulf %61, %65 : vector<8x8x8xf32>
    %67 = arith.truncf %66 : vector<8x8x8xf32> to vector<8x8x8xbf16>
    "tpu.trace_start"() <{level = 10 : i32, message = "bqk,bkd->bqd"}> : () -> ()
    %cst_28 = arith.constant dense<0.000000e+00> : vector<8x8x8xf32>
    %68 = tpu.matmul %67, %53, %cst_28 {dimension_numbers = #tpu.dot_dimension_numbers<[2], [1], [1], [2], [0, 0, 0, 1, 1, 2], [0], [0]>} : vector<8x8x8xbf16>, vector<8x8x8xbf16>, vector<8x8x8xf32> -> vector<8x8x8xf32>
    "tpu.trace_stop"() : () -> ()
    %69 = vector.shape_cast %68 : vector<8x8x8xf32> to vector<64x8xf32>
    %70 = arith.truncf %69 : vector<64x8xf32> to vector<64x8xbf16>
    %71 = vector.extract_strided_slice %46 {offsets = [0, 0], sizes = [8, 32], strides = [1, 1]} : vector<32x32xbf16> to vector<8x32xbf16>
    %cst_29 = arith.constant dense<0.000000e+00> : vector<64x32xf32>
    %72 = tpu.matmul %70, %71, %cst_29 {dimension_numbers = #tpu.dot_dimension_numbers<[1], [0], [0], [1], [0, 0, 1, 1], [], []>} : vector<64x8xbf16>, vector<8x32xbf16>, vector<64x32xf32> -> vector<64x32xf32>
    %73 = arith.addf %47, %72 : vector<64x32xf32>
    %74 = vector.extract_strided_slice %40 {offsets = [0, 0, 8], sizes = [8, 8, 8], strides = [1, 1, 1]} : vector<8x8x32xf32> to vector<8x8x8xf32>
    %75 = arith.truncf %74 : vector<8x8x8xf32> to vector<8x8x8xbf16>
    %76 = vector.extract_strided_slice %42 {offsets = [0, 0, 8], sizes = [8, 8, 8], strides = [1, 1, 1]} : vector<8x8x32xf32> to vector<8x8x8xf32>
    %77 = arith.truncf %76 : vector<8x8x8xf32> to vector<8x8x8xbf16>
    %78 = vector.extract_strided_slice %44 {offsets = [0, 0, 8], sizes = [8, 8, 8], strides = [1, 1, 1]} : vector<8x8x32xf32> to vector<8x8x8xf32>
    %79 = arith.truncf %78 : vector<8x8x8xf32> to vector<8x8x8xbf16>
    "tpu.trace_start"() <{level = 10 : i32, message = "bqd,bkd->bqk"}> : () -> ()
    %cst_30 = arith.constant dense<0.000000e+00> : vector<8x8x8xf32>
    %80 = tpu.matmul %75, %77, %cst_30 {dimension_numbers = #tpu.dot_dimension_numbers<[2], [2], [1], [1], [0, 0, 0, 1, 1, 1], [0], [0]>} : vector<8x8x8xbf16>, vector<8x8x8xbf16>, vector<8x8x8xf32> -> vector<8x8x8xf32>
    "tpu.trace_stop"() : () -> ()
    %cst_31 = arith.constant 0.353553385 : f32
    %81 = vector.broadcast %cst_31 : f32 to vector<8x8x8xf32>
    %82 = arith.mulf %80, %81 : vector<8x8x8xf32>
    %cst_32 = arith.constant dense<0xFF800000> : vector<8x8xf32>
    %83 = vector.multi_reduction <maximumf>, %82, %cst_32 [2] : vector<8x8x8xf32> to vector<8x8xf32>
    %84 = vector.shape_cast %83 : vector<8x8xf32> to vector<8x8x1xf32>
    %85 = vector.broadcast %84 : vector<8x8x1xf32> to vector<8x8x8xf32>
    %86 = arith.subf %82, %85 : vector<8x8x8xf32>
    %87 = math.exp %86 : vector<8x8x8xf32>
    %cst_33 = arith.constant dense<0.000000e+00> : vector<8x8xf32>
    %88 = vector.multi_reduction <add>, %87, %cst_33 [2] : vector<8x8x8xf32> to vector<8x8xf32>
    %89 = vector.shape_cast %88 : vector<8x8xf32> to vector<8x8x1xf32>
    %90 = tpu.reciprocal %89 {approx = true} : vector<8x8x1xf32> -> vector<8x8x1xf32>
    %91 = vector.broadcast %90 : vector<8x8x1xf32> to vector<8x8x8xf32>
    %92 = arith.mulf %87, %91 : vector<8x8x8xf32>
    %93 = arith.truncf %92 : vector<8x8x8xf32> to vector<8x8x8xbf16>
    "tpu.trace_start"() <{level = 10 : i32, message = "bqk,bkd->bqd"}> : () -> ()
    %cst_34 = arith.constant dense<0.000000e+00> : vector<8x8x8xf32>
    %94 = tpu.matmul %93, %79, %cst_34 {dimension_numbers = #tpu.dot_dimension_numbers<[2], [1], [1], [2], [0, 0, 0, 1, 1, 2], [0], [0]>} : vector<8x8x8xbf16>, vector<8x8x8xbf16>, vector<8x8x8xf32> -> vector<8x8x8xf32>
    "tpu.trace_stop"() : () -> ()
    %95 = vector.shape_cast %94 : vector<8x8x8xf32> to vector<64x8xf32>
    %96 = arith.truncf %95 : vector<64x8xf32> to vector<64x8xbf16>
    %97 = vector.extract_strided_slice %46 {offsets = [8, 0], sizes = [8, 32], strides = [1, 1]} : vector<32x32xbf16> to vector<8x32xbf16>
    %cst_35 = arith.constant dense<0.000000e+00> : vector<64x32xf32>
    %98 = tpu.matmul %96, %97, %cst_35 {dimension_numbers = #tpu.dot_dimension_numbers<[1], [0], [0], [1], [0, 0, 1, 1], [], []>} : vector<64x8xbf16>, vector<8x32xbf16>, vector<64x32xf32> -> vector<64x32xf32>
    %99 = arith.addf %73, %98 : vector<64x32xf32>
    %100 = vector.extract_strided_slice %40 {offsets = [0, 0, 16], sizes = [8, 8, 8], strides = [1, 1, 1]} : vector<8x8x32xf32> to vector<8x8x8xf32>
    %101 = arith.truncf %100 : vector<8x8x8xf32> to vector<8x8x8xbf16>
    %102 = vector.extract_strided_slice %42 {offsets = [0, 0, 16], sizes = [8, 8, 8], strides = [1, 1, 1]} : vector<8x8x32xf32> to vector<8x8x8xf32>
    %103 = arith.truncf %102 : vector<8x8x8xf32> to vector<8x8x8xbf16>
    %104 = vector.extract_strided_slice %44 {offsets = [0, 0, 16], sizes = [8, 8, 8], strides = [1, 1, 1]} : vector<8x8x32xf32> to vector<8x8x8xf32>
    %105 = arith.truncf %104 : vector<8x8x8xf32> to vector<8x8x8xbf16>
    "tpu.trace_start"() <{level = 10 : i32, message = "bqd,bkd->bqk"}> : () -> ()
    %cst_36 = arith.constant dense<0.000000e+00> : vector<8x8x8xf32>
    %106 = tpu.matmul %101, %103, %cst_36 {dimension_numbers = #tpu.dot_dimension_numbers<[2], [2], [1], [1], [0, 0, 0, 1, 1, 1], [0], [0]>} : vector<8x8x8xbf16>, vector<8x8x8xbf16>, vector<8x8x8xf32> -> vector<8x8x8xf32>
    "tpu.trace_stop"() : () -> ()
    %cst_37 = arith.constant 0.353553385 : f32
    %107 = vector.broadcast %cst_37 : f32 to vector<8x8x8xf32>
    %108 = arith.mulf %106, %107 : vector<8x8x8xf32>
    %cst_38 = arith.constant dense<0xFF800000> : vector<8x8xf32>
    %109 = vector.multi_reduction <maximumf>, %108, %cst_38 [2] : vector<8x8x8xf32> to vector<8x8xf32>
    %110 = vector.shape_cast %109 : vector<8x8xf32> to vector<8x8x1xf32>
    %111 = vector.broadcast %110 : vector<8x8x1xf32> to vector<8x8x8xf32>
    %112 = arith.subf %108, %111 : vector<8x8x8xf32>
    %113 = math.exp %112 : vector<8x8x8xf32>
    %cst_39 = arith.constant dense<0.000000e+00> : vector<8x8xf32>
    %114 = vector.multi_reduction <add>, %113, %cst_39 [2] : vector<8x8x8xf32> to vector<8x8xf32>
    %115 = vector.shape_cast %114 : vector<8x8xf32> to vector<8x8x1xf32>
    %116 = tpu.reciprocal %115 {approx = true} : vector<8x8x1xf32> -> vector<8x8x1xf32>
    %117 = vector.broadcast %116 : vector<8x8x1xf32> to vector<8x8x8xf32>
    %118 = arith.mulf %113, %117 : vector<8x8x8xf32>
    %119 = arith.truncf %118 : vector<8x8x8xf32> to vector<8x8x8xbf16>
    "tpu.trace_start"() <{level = 10 : i32, message = "bqk,bkd->bqd"}> : () -> ()
    %cst_40 = arith.constant dense<0.000000e+00> : vector<8x8x8xf32>
    %120 = tpu.matmul %119, %105, %cst_40 {dimension_numbers = #tpu.dot_dimension_numbers<[2], [1], [1], [2], [0, 0, 0, 1, 1, 2], [0], [0]>} : vector<8x8x8xbf16>, vector<8x8x8xbf16>, vector<8x8x8xf32> -> vector<8x8x8xf32>
    "tpu.trace_stop"() : () -> ()
    %121 = vector.shape_cast %120 : vector<8x8x8xf32> to vector<64x8xf32>
    %122 = arith.truncf %121 : vector<64x8xf32> to vector<64x8xbf16>
    %123 = vector.extract_strided_slice %46 {offsets = [16, 0], sizes = [8, 32], strides = [1, 1]} : vector<32x32xbf16> to vector<8x32xbf16>
    %cst_41 = arith.constant dense<0.000000e+00> : vector<64x32xf32>
    %124 = tpu.matmul %122, %123, %cst_41 {dimension_numbers = #tpu.dot_dimension_numbers<[1], [0], [0], [1], [0, 0, 1, 1], [], []>} : vector<64x8xbf16>, vector<8x32xbf16>, vector<64x32xf32> -> vector<64x32xf32>
    %125 = arith.addf %99, %124 : vector<64x32xf32>
    %126 = vector.extract_strided_slice %40 {offsets = [0, 0, 24], sizes = [8, 8, 8], strides = [1, 1, 1]} : vector<8x8x32xf32> to vector<8x8x8xf32>
    %127 = arith.truncf %126 : vector<8x8x8xf32> to vector<8x8x8xbf16>
    %128 = vector.extract_strided_slice %42 {offsets = [0, 0, 24], sizes = [8, 8, 8], strides = [1, 1, 1]} : vector<8x8x32xf32> to vector<8x8x8xf32>
    %129 = arith.truncf %128 : vector<8x8x8xf32> to vector<8x8x8xbf16>
    %130 = vector.extract_strided_slice %44 {offsets = [0, 0, 24], sizes = [8, 8, 8], strides = [1, 1, 1]} : vector<8x8x32xf32> to vector<8x8x8xf32>
    %131 = arith.truncf %130 : vector<8x8x8xf32> to vector<8x8x8xbf16>
    "tpu.trace_start"() <{level = 10 : i32, message = "bqd,bkd->bqk"}> : () -> ()
    %cst_42 = arith.constant dense<0.000000e+00> : vector<8x8x8xf32>
    %132 = tpu.matmul %127, %129, %cst_42 {dimension_numbers = #tpu.dot_dimension_numbers<[2], [2], [1], [1], [0, 0, 0, 1, 1, 1], [0], [0]>} : vector<8x8x8xbf16>, vector<8x8x8xbf16>, vector<8x8x8xf32> -> vector<8x8x8xf32>
    "tpu.trace_stop"() : () -> ()
    %cst_43 = arith.constant 0.353553385 : f32
    %133 = vector.broadcast %cst_43 : f32 to vector<8x8x8xf32>
    %134 = arith.mulf %132, %133 : vector<8x8x8xf32>
    %cst_44 = arith.constant dense<0xFF800000> : vector<8x8xf32>
    %135 = vector.multi_reduction <maximumf>, %134, %cst_44 [2] : vector<8x8x8xf32> to vector<8x8xf32>
    %136 = vector.shape_cast %135 : vector<8x8xf32> to vector<8x8x1xf32>
    %137 = vector.broadcast %136 : vector<8x8x1xf32> to vector<8x8x8xf32>
    %138 = arith.subf %134, %137 : vector<8x8x8xf32>
    %139 = math.exp %138 : vector<8x8x8xf32>
    %cst_45 = arith.constant dense<0.000000e+00> : vector<8x8xf32>
    %140 = vector.multi_reduction <add>, %139, %cst_45 [2] : vector<8x8x8xf32> to vector<8x8xf32>
    %141 = vector.shape_cast %140 : vector<8x8xf32> to vector<8x8x1xf32>
    %142 = tpu.reciprocal %141 {approx = true} : vector<8x8x1xf32> -> vector<8x8x1xf32>
    %143 = vector.broadcast %142 : vector<8x8x1xf32> to vector<8x8x8xf32>
    %144 = arith.mulf %139, %143 : vector<8x8x8xf32>
    %145 = arith.truncf %144 : vector<8x8x8xf32> to vector<8x8x8xbf16>
    "tpu.trace_start"() <{level = 10 : i32, message = "bqk,bkd->bqd"}> : () -> ()
    %cst_46 = arith.constant dense<0.000000e+00> : vector<8x8x8xf32>
    %146 = tpu.matmul %145, %131, %cst_46 {dimension_numbers = #tpu.dot_dimension_numbers<[2], [1], [1], [2], [0, 0, 0, 1, 1, 2], [0], [0]>} : vector<8x8x8xbf16>, vector<8x8x8xbf16>, vector<8x8x8xf32> -> vector<8x8x8xf32>
    "tpu.trace_stop"() : () -> ()
    %147 = vector.shape_cast %146 : vector<8x8x8xf32> to vector<64x8xf32>
    %148 = arith.truncf %147 : vector<64x8xf32> to vector<64x8xbf16>
    %149 = vector.extract_strided_slice %46 {offsets = [24, 0], sizes = [8, 32], strides = [1, 1]} : vector<32x32xbf16> to vector<8x32xbf16>
    %cst_47 = arith.constant dense<0.000000e+00> : vector<64x32xf32>
    %150 = tpu.matmul %148, %149, %cst_47 {dimension_numbers = #tpu.dot_dimension_numbers<[1], [0], [0], [1], [0, 0, 1, 1], [], []>} : vector<64x8xbf16>, vector<8x32xbf16>, vector<64x32xf32> -> vector<64x32xf32>
    %151 = arith.addf %125, %150 : vector<64x32xf32>
    %152 = arith.addf %4, %151 : vector<64x32xf32>
    %c0_48 = arith.constant 0 : index
    %c0_49 = arith.constant 0 : index
    %c0_50 = arith.constant 0 : index
    %153 = vector.load %arg8[%c0_48, %c0_49, %c0_50] : memref<1x1x32xf32, #tpu.memory_space<vmem>>, vector<1x1x32xf32>
    %154 = vector.shape_cast %153 : vector<1x1x32xf32> to vector<1x32xf32>
    %155 = vector.broadcast %154 : vector<1x32xf32> to vector<64x32xf32>
    %156 = arith.addf %152, %155 : vector<64x32xf32>
    %c0_51 = arith.constant 0 : index
    %c0_52 = arith.constant 0 : index
    %c0_53 = arith.constant 0 : index
    %157 = vector.load %arg9[%c0_51, %c0_52, %c0_53] : memref<1x1x32xf32, #tpu.memory_space<vmem>>, vector<1x1x32xf32>
    %158 = vector.shape_cast %157 : vector<1x1x32xf32> to vector<1x32xf32>
    %c0_54 = arith.constant 0 : index
    %c0_55 = arith.constant 0 : index
    %c0_56 = arith.constant 0 : index
    %159 = vector.load %arg10[%c0_54, %c0_55, %c0_56] : memref<1x1x32xf32, #tpu.memory_space<vmem>>, vector<1x1x32xf32>
    %160 = vector.shape_cast %159 : vector<1x1x32xf32> to vector<1x32xf32>
    %cst_57 = arith.constant dense<0.000000e+00> : vector<64xf32>
    %161 = vector.multi_reduction <add>, %156, %cst_57 [1] : vector<64x32xf32> to vector<64xf32>
    %162 = vector.shape_cast %161 : vector<64xf32> to vector<64x1xf32>
    %cst_58 = arith.constant 3.200000e+01 : f32
    %163 = vector.broadcast %cst_58 : f32 to vector<64x1xf32>
    %164 = arith.divf %162, %163 : vector<64x1xf32>
    %165 = vector.broadcast %164 : vector<64x1xf32> to vector<64x32xf32>
    %166 = arith.subf %156, %165 : vector<64x32xf32>
    %167 = arith.mulf %166, %166 : vector<64x32xf32>
    %cst_59 = arith.constant dense<0.000000e+00> : vector<64xf32>
    %168 = vector.multi_reduction <add>, %167, %cst_59 [1] : vector<64x32xf32> to vector<64xf32>
    %169 = vector.shape_cast %168 : vector<64xf32> to vector<64x1xf32>
    %cst_60 = arith.constant 3.200000e+01 : f32
    %170 = vector.broadcast %cst_60 : f32 to vector<64x1xf32>
    %171 = arith.divf %169, %170 : vector<64x1xf32>
    %172 = vector.broadcast %164 : vector<64x1xf32> to vector<64x32xf32>
    %173 = arith.subf %156, %172 : vector<64x32xf32>
    %cst_61 = arith.constant 9.99999996E-13 : f32
    %174 = vector.broadcast %cst_61 : f32 to vector<64x1xf32>
    %175 = arith.addf %171, %174 : vector<64x1xf32>
    %176 = math.rsqrt %175 : vector<64x1xf32>
    %177 = vector.broadcast %176 : vector<64x1xf32> to vector<64x32xf32>
    %178 = arith.mulf %173, %177 : vector<64x32xf32>
    %179 = vector.broadcast %158 : vector<1x32xf32> to vector<64x32xf32>
    %180 = arith.mulf %178, %179 : vector<64x32xf32>
    %181 = vector.broadcast %160 : vector<1x32xf32> to vector<64x32xf32>
    %182 = arith.addf %180, %181 : vector<64x32xf32>
    %183 = arith.truncf %182 : vector<64x32xf32> to vector<64x32xbf16>
    %c0_62 = arith.constant 0 : index
    %c0_63 = arith.constant 0 : index
    %c0_64 = arith.constant 0 : index
    %184 = vector.load %arg11[%c0_62, %c0_63, %c0_64] : memref<1x32x64xbf16, #tpu.memory_space<vmem>>, vector<1x32x64xbf16>
    %185 = vector.shape_cast %184 : vector<1x32x64xbf16> to vector<32x64xbf16>
    %c0_65 = arith.constant 0 : index
    %c0_66 = arith.constant 0 : index
    %c0_67 = arith.constant 0 : index
    %186 = vector.load %arg13[%c0_65, %c0_66, %c0_67] : memref<1x64x32xbf16, #tpu.memory_space<vmem>>, vector<1x64x32xbf16>
    %187 = vector.shape_cast %186 : vector<1x64x32xbf16> to vector<64x32xbf16>
    %c0_68 = arith.constant 0 : index
    %c0_69 = arith.constant 0 : index
    %c0_70 = arith.constant 0 : index
    %188 = vector.load %arg12[%c0_68, %c0_69, %c0_70] : memref<1x1x64xf32, #tpu.memory_space<vmem>>, vector<1x1x64xf32>
    %189 = vector.shape_cast %188 : vector<1x1x64xf32> to vector<1x64xf32>
    %cst_71 = arith.constant 0.000000e+00 : f32
    %190 = vector.broadcast %cst_71 : f32 to vector<64x32xf32>
    %cst_72 = arith.constant dense<0.000000e+00> : vector<64x64xf32>
    %191 = tpu.matmul %183, %185, %cst_72 {dimension_numbers = #tpu.dot_dimension_numbers<[1], [0], [0], [1], [0, 0, 1, 1], [], []>} : vector<64x32xbf16>, vector<32x64xbf16>, vector<64x64xf32> -> vector<64x64xf32>
    %192 = vector.broadcast %189 : vector<1x64xf32> to vector<64x64xf32>
    %193 = arith.addf %191, %192 : vector<64x64xf32>
    %cst_73 = arith.constant 5.000000e-01 : f32
    %194 = vector.broadcast %cst_73 : f32 to vector<64x64xf32>
    %195 = arith.mulf %194, %193 : vector<64x64xf32>
    %cst_74 = arith.constant 4.471500e-02 : f32
    %196 = vector.broadcast %cst_74 : f32 to vector<64x64xf32>
    %197 = arith.mulf %196, %193 : vector<64x64xf32>
    %198 = arith.mulf %197, %193 : vector<64x64xf32>
    %199 = arith.mulf %198, %193 : vector<64x64xf32>
    %200 = arith.addf %193, %199 : vector<64x64xf32>
    %cst_75 = arith.constant 0.797884583 : f32
    %201 = vector.broadcast %cst_75 : f32 to vector<64x64xf32>
    %202 = arith.mulf %201, %200 : vector<64x64xf32>
    %203 = math.tanh %202 : vector<64x64xf32>
    %cst_76 = arith.constant 1.000000e+00 : f32
    %204 = vector.broadcast %cst_76 : f32 to vector<64x64xf32>
    %205 = arith.addf %204, %203 : vector<64x64xf32>
    %206 = arith.mulf %195, %205 : vector<64x64xf32>
    %207 = arith.truncf %206 : vector<64x64xf32> to vector<64x64xbf16>
    %cst_77 = arith.constant dense<0.000000e+00> : vector<64x32xf32>
    %208 = tpu.matmul %207, %187, %cst_77 {dimension_numbers = #tpu.dot_dimension_numbers<[1], [0], [0], [1], [0, 0, 1, 1], [], []>} : vector<64x64xbf16>, vector<64x32xbf16>, vector<64x32xf32> -> vector<64x32xf32>
    %209 = arith.addf %190, %208 : vector<64x32xf32>
    %210 = arith.addf %156, %209 : vector<64x32xf32>
    %c0_78 = arith.constant 0 : index
    %c0_79 = arith.constant 0 : index
    %c0_80 = arith.constant 0 : index
    %211 = vector.load %arg14[%c0_78, %c0_79, %c0_80] : memref<1x1x32xf32, #tpu.memory_space<vmem>>, vector<1x1x32xf32>
    %212 = vector.shape_cast %211 : vector<1x1x32xf32> to vector<1x32xf32>
    %213 = vector.broadcast %212 : vector<1x32xf32> to vector<64x32xf32>
    %214 = arith.addf %210, %213 : vector<64x32xf32>
    %215 = vector.shape_cast %214 : vector<64x32xf32> to vector<8x8x32xf32>
    %c0_81 = arith.constant 0 : index
    %c0_82 = arith.constant 0 : index
    %c0_83 = arith.constant 0 : index
    %216 = vector.load %arg16[%c0_81, %c0_82, %c0_83] : memref<8x8x32xf32, #tpu.memory_space<vmem>>, vector<8x8x32xf32>
    tpu.vector_store %arg16[%c0_81, %c0_82, %c0_83], %215 {strides = array<i32>} : memref<8x8x32xf32, #tpu.memory_space<vmem>>, vector<8x8x32xf32>,
    %c1_i32 = arith.constant 1 : i32
    %217 = arith.cmpi eq, %arg1, %c1_i32 : i32
    %218 = arith.extui %217 : i1 to i32
    %c0_i32_84 = arith.constant 0 : i32
    %219 = arith.cmpi ne, %218, %c0_i32_84 : i32
    scf.if %219 {
      %220 = vector.shape_cast %214 : vector<64x32xf32> to vector<8x8x32xf32>
      %cst_85 = arith.constant dense<0.000000e+00> : vector<8x32xf32>
      %221 = vector.multi_reduction <add>, %220, %cst_85 [1] : vector<8x8x32xf32> to vector<8x32xf32>
      %cst_86 = arith.constant 1.250000e-01 : f32
      %222 = vector.broadcast %cst_86 : f32 to vector<8x32xf32>
      %223 = arith.mulf %221, %222 : vector<8x32xf32>
      %224 = arith.mulf %223, %223 : vector<8x32xf32>
      %cst_87 = arith.constant dense<0.000000e+00> : vector<8xf32>
      %225 = vector.multi_reduction <add>, %224, %cst_87 [1] : vector<8x32xf32> to vector<8xf32>
      %226 = vector.shape_cast %225 : vector<8xf32> to vector<8x1xf32>
      %cst_88 = arith.constant 9.99999996E-13 : f32
      %227 = vector.broadcast %cst_88 : f32 to vector<8x1xf32>
      %228 = arith.addf %226, %227 : vector<8x1xf32>
      %229 = math.rsqrt %228 : vector<8x1xf32>
      %230 = vector.broadcast %229 : vector<8x1xf32> to vector<8x32xf32>
      %231 = arith.mulf %223, %230 : vector<8x32xf32>
      %c0_89 = arith.constant 0 : index
      %c0_90 = arith.constant 0 : index
      %232 = vector.load %arg15[%c0_89, %c0_90] : memref<8x32xf32, #tpu.memory_space<vmem>>, vector<8x32xf32>
      tpu.vector_store %arg15[%c0_89, %c0_90], %231 {strides = array<i32>} : memref<8x32xf32, #tpu.memory_space<vmem>>, vector<8x32xf32>,
    } else {
    }
    return
  }
  func.func @transform_0(%arg0: i32, %arg1: i32) -> (i32, i32, i32) {
    %c0_i32 = arith.constant 0 : i32
    %c0_i32_0 = arith.constant 0 : i32
    %c0_i32_1 = arith.constant 0 : i32
    return %arg0, %c0_i32, %c0_i32_0 : i32, i32, i32
  }
  func.func @transform_1(%arg0: i32, %arg1: i32) -> (i32, i32, i32) {
    %c0_i32 = arith.constant 0 : i32
    %c0_i32_0 = arith.constant 0 : i32
    %c0_i32_1 = arith.constant 0 : i32
    return %arg1, %c0_i32, %c0_i32_0 : i32, i32, i32
  }
  func.func @transform_2(%arg0: i32, %arg1: i32) -> (i32, i32, i32) {
    %c0_i32 = arith.constant 0 : i32
    %c0_i32_0 = arith.constant 0 : i32
    %c0_i32_1 = arith.constant 0 : i32
    return %arg1, %c0_i32, %c0_i32_0 : i32, i32, i32
  }
  func.func @transform_3(%arg0: i32, %arg1: i32) -> (i32, i32, i32) {
    %c0_i32 = arith.constant 0 : i32
    %c0_i32_0 = arith.constant 0 : i32
    %c0_i32_1 = arith.constant 0 : i32
    return %arg1, %c0_i32, %c0_i32_0 : i32, i32, i32
  }
  func.func @transform_4(%arg0: i32, %arg1: i32) -> (i32, i32, i32) {
    %c0_i32 = arith.constant 0 : i32
    %c0_i32_0 = arith.constant 0 : i32
    %c0_i32_1 = arith.constant 0 : i32
    return %arg1, %c0_i32, %c0_i32_0 : i32, i32, i32
  }
  func.func @transform_5(%arg0: i32, %arg1: i32) -> (i32, i32, i32) {
    %c0_i32 = arith.constant 0 : i32
    %c0_i32_0 = arith.constant 0 : i32
    %c0_i32_1 = arith.constant 0 : i32
    return %arg1, %c0_i32, %c0_i32_0 : i32, i32, i32
  }
  func.func @transform_6(%arg0: i32, %arg1: i32) -> (i32, i32, i32) {
    %c0_i32 = arith.constant 0 : i32
    %c0_i32_0 = arith.constant 0 : i32
    %c0_i32_1 = arith.constant 0 : i32
    return %arg1, %c0_i32, %c0_i32_0 : i32, i32, i32
  }
  func.func @transform_7(%arg0: i32, %arg1: i32) -> (i32, i32, i32) {
    %c0_i32 = arith.constant 0 : i32
    %c0_i32_0 = arith.constant 0 : i32
    %c0_i32_1 = arith.constant 0 : i32
    return %arg1, %c0_i32, %c0_i32_0 : i32, i32, i32
  }
  func.func @transform_8(%arg0: i32, %arg1: i32) -> (i32, i32, i32) {
    %c0_i32 = arith.constant 0 : i32
    %c0_i32_0 = arith.constant 0 : i32
    %c0_i32_1 = arith.constant 0 : i32
    return %arg1, %c0_i32, %c0_i32_0 : i32, i32, i32
  }
  func.func @transform_9(%arg0: i32, %arg1: i32) -> (i32, i32, i32) {
    %c0_i32 = arith.constant 0 : i32
    %c0_i32_0 = arith.constant 0 : i32
    %c0_i32_1 = arith.constant 0 : i32
    return %arg1, %c0_i32, %c0_i32_0 : i32, i32, i32
  }
  func.func @transform_10(%arg0: i32, %arg1: i32) -> (i32, i32, i32) {
    %c0_i32 = arith.constant 0 : i32
    %c0_i32_0 = arith.constant 0 : i32
    %c0_i32_1 = arith.constant 0 : i32
    return %arg1, %c0_i32, %c0_i32_0 : i32, i32, i32
  }
  func.func @transform_11(%arg0: i32, %arg1: i32) -> (i32, i32, i32) {
    %c0_i32 = arith.constant 0 : i32
    %c0_i32_0 = arith.constant 0 : i32
    %c0_i32_1 = arith.constant 0 : i32
    return %arg1, %c0_i32, %c0_i32_0 : i32, i32, i32
  }
  func.func @transform_12(%arg0: i32, %arg1: i32) -> (i32, i32, i32) {
    %c0_i32 = arith.constant 0 : i32
    %c0_i32_0 = arith.constant 0 : i32
    %c0_i32_1 = arith.constant 0 : i32
    return %arg1, %c0_i32, %c0_i32_0 : i32, i32, i32
  }
  func.func @transform_13(%arg0: i32, %arg1: i32) -> (i32, i32) {
    %c0_i32 = arith.constant 0 : i32
    %c0_i32_0 = arith.constant 0 : i32
    return %arg0, %c0_i32 : i32, i32
  }
}

</mosaic_0001>

<llo_original>
// kernel: tpu_custom_call.1
$region0: #{tpu_custom_call.1}
  #allocation0 [shape = 'u32[]', space=smem, size = 0x4, offset = 0x4, fixed_abs, tag = 'smem constant byte address 0x4 - core index']
  #allocation1 [shape = 'u32[144,128]{1,0:T(1,128)}', space=vmem, size = 0x12000, scoped, tag = 'internal scratch']
  #allocation2 [shape = 'f32[8,8,32]{2,1,0:T(8,128)}', space=vmem, size = 0x8000, scoped, tag = 'scratch operand']
  %s0 = inlined_call_operand.vmem [shape: f32[8,8,32], index: 0, kind: input, shape index: {}]
  %s1 = inlined_call_operand.vmem [shape: f32[2,1,32], index: 1, kind: input, shape index: {}]
  %s2 = inlined_call_operand.vmem [shape: f32[2,1,32], index: 2, kind: input, shape index: {}]
  %s3 = inlined_call_operand.vmem [shape: bf16[2,32,96], index: 3, kind: input, shape index: {}]
  %s4 = inlined_call_operand.vmem [shape: f32[2,1,96], index: 4, kind: input, shape index: {}]
  %s5 = inlined_call_operand.hbm [shape: bf16[2,32,32], index: 5, kind: input, shape index: {}]
  %s6 = inlined_call_operand.vmem [shape: f32[2,1,32], index: 6, kind: input, shape index: {}]
  %s7 = inlined_call_operand.hbm [shape: f32[2,1,32], index: 7, kind: input, shape index: {}]
  %s8 = inlined_call_operand.hbm [shape: f32[2,1,32], index: 8, kind: input, shape index: {}]
  %s9 = inlined_call_operand.hbm [shape: bf16[2,32,64], index: 9, kind: input, shape index: {}]
  %s10 = inlined_call_operand.hbm [shape: f32[2,1,64], index: 10, kind: input, shape index: {}]
  %s11 = inlined_call_operand.vmem [shape: bf16[2,64,32], index: 11, kind: input, shape index: {}]
  %s12 = inlined_call_operand.vmem [shape: f32[2,1,32], index: 12, kind: input, shape index: {}]
  %s13 = inlined_call_operand.hbm [shape: f32[8,32], index: 13, kind: output, shape index: {}]
  %s14 = sld [smem:[#allocation0]]
  $region113: #{tpu_custom_call.1} parent=0
    _
  %s16 = ssub.s32 1, %s14
  %s17 = scalar_select 0, %s16, %s14
  $region1: #{tpu_custom_call.1} parent=0
    #allocation3 [shape = 'u8[16384]{0}', space=vmem, size = 0x4000, scoped, tag = 'input window, operand 5']
    #allocation4 [shape = 's32[2]{0}', space=sflag, size = 0x8, scoped, tag = 'scoped memory for tpu_custom_call.1']
    #allocation5 [shape = 's32[2]{0}', space=sflag, size = 0x8, scoped, tag = 'scoped memory for tpu_custom_call.1']
    #allocation6 [shape = 'u8[1024]{0}', space=vmem, size = 0x400, scoped, tag = 'input window, operand 7']
    #allocation7 [shape = 's32[2]{0}', space=sflag, size = 0x8, scoped, tag = 'scoped memory for tpu_custom_call.1']
    #allocation8 [shape = 'u8[1024]{0}', space=vmem, size = 0x400, scoped, tag = 'input window, operand 8']
    #allocation9 [shape = 'u8[16384]{0}', space=vmem, size = 0x4000, scoped, tag = 'input window, operand 9']
    #allocation10 [shape = 's32[2]{0}', space=sflag, size = 0x8, scoped, tag = 'scoped memory for tpu_custom_call.1']
    #allocation11 [shape = 'u8[1024]{0}', space=vmem, size = 0x400, scoped, tag = 'input window, operand 10']
    #allocation12 [shape = 'u8[4096]{0}', space=vmem, size = 0x1000, scoped, tag = 'output window, operand 0, single buffered']
    %18 = vsyncpa [#allocation4], 0
    %s19 = scalar_lea.sflag [#allocation4], 1
    %20 = vsyncpa %s19, 0
    %21 = vsyncpa [#allocation7], 0
    %s22 = scalar_lea.sflag [#allocation7], 1
    %23 = vsyncpa %s22, 0
    %24 = vsyncpa [#allocation10], 0
    %s25 = scalar_lea.sflag [#allocation10], 1
    %26 = vsyncpa %s25, 0
    %27 = vsyncpa [#allocation5], 0
    loop: start=0, step=1, limit=4
    $region2: #{tpu_custom_call.1} parent=1 // loop_pre_header
      _
    $region3: #{tpu_custom_call.1} parent=1 // loop_header
      %s29 = sphi 0, %s33
      %p30 = scmp.ge.s32.totalorder %s29, 4
      %s36 = sphi 0, %s48
      %s37 = sphi 0, %s44
      %s38 = sphi 0, %s36
      %s39 = sphi 0, %s37
      %s40 = sphi 0, %s38
      %s41 = sphi 0, %s39
      %s51 = sphi 0, %s53
      %s54 = sphi 0, %s51
      %s55 = sphi 0, %s54
      %s71 = sphi 0, %s55
      %s77 = sphi 0, %s79
      %s80 = sphi 0, %s77
      %s81 = sphi 0, %s80
      %s97 = sphi 0, %s81
      %s103 = sphi 0, %s105
      %s106 = sphi 0, %s103
      %s107 = sphi 0, %s106
      %s123 = sphi 0, %s107
      %s129 = sphi 0, %s131
      %s132 = sphi 0, %s129
      %s133 = sphi 0, %s132
      %s149 = sphi 0, %s133
      %s155 = sphi 0, %s157
      %s158 = sphi 0, %s155
      %s159 = sphi 0, %s158
      %s175 = sphi 0, %s159
      %s181 = sphi 0, %s183
      %s184 = sphi 0, %s181
      %s185 = sphi 0, %s184
      %s201 = sphi 0, %s185
      %s207 = sphi 0, %s209
      %s210 = sphi 0, %s207
      %s211 = sphi 0, %s210
      %s227 = sphi 0, %s211
      %s233 = sphi 0, %s235
      %s236 = sphi 0, %s233
      %s237 = sphi 0, %s236
      %s253 = sphi 0, %s237
      %s259 = sphi 0, %s261
      %s262 = sphi 0, %s259
      %s263 = sphi 0, %s262
      %s279 = sphi 0, %s263
      %s285 = sphi 0, %s287
      %s288 = sphi 0, %s285
      %s289 = sphi 0, %s288
      %s305 = sphi 0, %s289
      %s311 = sphi 0, %s313
      %s314 = sphi 0, %s311
      %s315 = sphi 0, %s314
      %s331 = sphi 0, %s315
      %s337 = sphi 0, %s339
      %s340 = sphi 0, %s337
      %s341 = sphi 0, %s340
      %s357 = sphi 0, %s341
      %s363 = sphi 0, %s365
      %s366 = sphi 0, %s363
      %s367 = sphi 0, %s366
      %s383 = sphi 0, %s367
      %s389 = sphi 0, %s391
      %s392 = sphi 0, %s389
      %s393 = sphi 0, %s392
      %s409 = sphi 0, %s393
    $region4: #{tpu_custom_call.1} parent=1 // loop_header_branch
      %32 = sbr.rel (%p30) target = $region8
    $region5: #{tpu_custom_call.1} parent=1 // loop_body
      %s34 = ssub.s32 %s29, 1
      %s35 = ssub.s32 %s29, 2
      %s42 = sadd.s32 1, %s37
      %p43 = scmp.ge.s32.totalorder %s42, 2
      %s44 = scalar_select %p43, 0, %s42
      %s45 = sadd.s32 1, %s36
      %s46 = scalar_select %p43, %s45, %s36
      %p47 = scmp.ge.s32.totalorder %s46, 1
      %s48 = scalar_select %p47, 0, %s46
      %s49 = ssub.s32 %s36, %s48
      %p50 = scmp.eq.s32.totalorder %s49, 0
      %s52 = sadd.s32 %s51, 1
      %s53 = scalar_select %p50, %s51, %s52
      %p56 = pneg %p50
      %p57 = scmp.eq.s32.totalorder %s29, 1
      %p58 = por %p56, %p57
      %p59 = scmp.ne.s32.totalorder %s51, %s54
      %p60 = scmp.eq.s32.totalorder %s29, 0
      %p61 = por %p59, %p60
      %p62 = scmp.ne.s32.totalorder %s51, %s54
      %p63 = scmp.eq.s32.totalorder %s34, 1
      %p64 = por %p62, %p63
      %p65 = scmp.ne.s32.totalorder %s54, %s55
      %p66 = scmp.eq.s32.totalorder %s34, 0
      %p67 = por %p65, %p66
      %p68 = scmp.ne.s32.totalorder %s54, %s55
      %p69 = scmp.eq.s32.totalorder %s35, 1
      %p70 = por %p68, %p69
      %p72 = scmp.ne.s32.totalorder %s55, %s71
      %p73 = scmp.eq.s32.totalorder %s35, 0
      %p74 = por %p72, %p73
      %s75 = ssub.s32 %s37, %s44
      %p76 = scmp.eq.s32.totalorder %s75, 0
      %s78 = sadd.s32 %s77, 1
      %s79 = scalar_select %p76, %s77, %s78
      %p82 = pneg %p76
      %p83 = scmp.eq.s32.totalorder %s29, 1
      %p84 = por %p82, %p83
      %p85 = scmp.ne.s32.totalorder %s77, %s80
      %p86 = scmp.eq.s32.totalorder %s29, 0
      %p87 = por %p85, %p86
      %p88 = scmp.ne.s32.totalorder %s77, %s80
      %p89 = scmp.eq.s32.totalorder %s34, 1
      %p90 = por %p88, %p89
      %p91 = scmp.ne.s32.totalorder %s80, %s81
      %p92 = scmp.eq.s32.totalorder %s34, 0
      %p93 = por %p91, %p92
      %p94 = scmp.ne.s32.totalorder %s80, %s81
      %p95 = scmp.eq.s32.totalorder %s35, 1
      %p96 = por %p94, %p95
      %p98 = scmp.ne.s32.totalorder %s81, %s97
      %p99 = scmp.eq.s32.totalorder %s35, 0
      %p100 = por %p98, %p99
      %s101 = ssub.s32 %s37, %s44
      %p102 = scmp.eq.s32.totalorder %s101, 0
      %s104 = sadd.s32 %s103, 1
      %s105 = scalar_select %p102, %s103, %s104
      %p108 = pneg %p102
      %p109 = scmp.eq.s32.totalorder %s29, 1
      %p110 = por %p108, %p109
      %p111 = scmp.ne.s32.totalorder %s103, %s106
      %p112 = scmp.eq.s32.totalorder %s29, 0
      %p113 = por %p111, %p112
      %p114 = scmp.ne.s32.totalorder %s103, %s106
      %p115 = scmp.eq.s32.totalorder %s34, 1
      %p116 = por %p114, %p115
      %p117 = scmp.ne.s32.totalorder %s106, %s107
      %p118 = scmp.eq.s32.totalorder %s34, 0
      %p119 = por %p117, %p118
      %p120 = scmp.ne.s32.totalorder %s106, %s107
      %p121 = scmp.eq.s32.totalorder %s35, 1
      %p122 = por %p120, %p121
      %p124 = scmp.ne.s32.totalorder %s107, %s123
      %p125 = scmp.eq.s32.totalorder %s35, 0
      %p126 = por %p124, %p125
      %s127 = ssub.s32 %s37, %s44
      %p128 = scmp.eq.s32.totalorder %s127, 0
      %s130 = sadd.s32 %s129, 1
      %s131 = scalar_select %p128, %s129, %s130
      %p134 = pneg %p128
      %p135 = scmp.eq.s32.totalorder %s29, 1
      %p136 = por %p134, %p135
      %p137 = scmp.ne.s32.totalorder %s129, %s132
      %p138 = scmp.eq.s32.totalorder %s29, 0
      %p139 = por %p137, %p138
      %p140 = scmp.ne.s32.totalorder %s129, %s132
      %p141 = scmp.eq.s32.totalorder %s34, 1
      %p142 = por %p140, %p141
      %p143 = scmp.ne.s32.totalorder %s132, %s133
      %p144 = scmp.eq.s32.totalorder %s34, 0
      %p145 = por %p143, %p144
      %p146 = scmp.ne.s32.totalorder %s132, %s133
      %p147 = scmp.eq.s32.totalorder %s35, 1
      %p148 = por %p146, %p147
      %p150 = scmp.ne.s32.totalorder %s133, %s149
      %p151 = scmp.eq.s32.totalorder %s35, 0
      %p152 = por %p150, %p151
      %s153 = ssub.s32 %s37, %s44
      %p154 = scmp.eq.s32.totalorder %s153, 0
      %s156 = sadd.s32 %s155, 1
      %s157 = scalar_select %p154, %s155, %s156
      %p160 = pneg %p154
      %p161 = scmp.eq.s32.totalorder %s29, 1
      %p162 = por %p160, %p161
      %p163 = scmp.ne.s32.totalorder %s155, %s158
      %p164 = scmp.eq.s32.totalorder %s29, 0
      %p165 = por %p163, %p164
      %p166 = scmp.ne.s32.totalorder %s155, %s158
      %p167 = scmp.eq.s32.totalorder %s34, 1
      %p168 = por %p166, %p167
      %p169 = scmp.ne.s32.totalorder %s158, %s159
      %p170 = scmp.eq.s32.totalorder %s34, 0
      %p171 = por %p169, %p170
      %p172 = scmp.ne.s32.totalorder %s158, %s159
      %p173 = scmp.eq.s32.totalorder %s35, 1
      %p174 = por %p172, %p173
      %p176 = scmp.ne.s32.totalorder %s159, %s175
      %p177 = scmp.eq.s32.totalorder %s35, 0
      %p178 = por %p176, %p177
      %s179 = ssub.s32 %s37, %s44
      %p180 = scmp.eq.s32.totalorder %s179, 0
      %s182 = sadd.s32 %s181, 1
      %s183 = scalar_select %p180, %s181, %s182
      %p186 = pneg %p180
      %p187 = scmp.eq.s32.totalorder %s29, 1
      %p188 = por %p186, %p187
      %p189 = scmp.ne.s32.totalorder %s181, %s184
      %p190 = scmp.eq.s32.totalorder %s29, 0
      %p191 = por %p189, %p190
      %p192 = scmp.ne.s32.totalorder %s181, %s184
      %p193 = scmp.eq.s32.totalorder %s34, 1
      %p194 = por %p192, %p193
      %p195 = scmp.ne.s32.totalorder %s184, %s185
      %p196 = scmp.eq.s32.totalorder %s34, 0
      %p197 = por %p195, %p196
      %p198 = scmp.ne.s32.totalorder %s184, %s185
      %p199 = scmp.eq.s32.totalorder %s35, 1
      %p200 = por %p198, %p199
      %p202 = scmp.ne.s32.totalorder %s185, %s201
      %p203 = scmp.eq.s32.totalorder %s35, 0
      %p204 = por %p202, %p203
      %s205 = ssub.s32 %s37, %s44
      %p206 = scmp.eq.s32.totalorder %s205, 0
      %s208 = sadd.s32 %s207, 1
      %s209 = scalar_select %p206, %s207, %s208
      %p212 = pneg %p206
      %p213 = scmp.eq.s32.totalorder %s29, 1
      %p214 = por %p212, %p213
      %p215 = scmp.ne.s32.totalorder %s207, %s210
      %p216 = scmp.eq.s32.totalorder %s29, 0
      %p217 = por %p215, %p216
      %p218 = scmp.ne.s32.totalorder %s207, %s210
      %p219 = scmp.eq.s32.totalorder %s34, 1
      %p220 = por %p218, %p219
      %p221 = scmp.ne.s32.totalorder %s210, %s211
      %p222 = scmp.eq.s32.totalorder %s34, 0
      %p223 = por %p221, %p222
      %p224 = scmp.ne.s32.totalorder %s210, %s211
      %p225 = scmp.eq.s32.totalorder %s35, 1
      %p226 = por %p224, %p225
      %p228 = scmp.ne.s32.totalorder %s211, %s227
      %p229 = scmp.eq.s32.totalorder %s35, 0
      %p230 = por %p228, %p229
      %s231 = ssub.s32 %s37, %s44
      %p232 = scmp.eq.s32.totalorder %s231, 0
      %s234 = sadd.s32 %s233, 1
      %s235 = scalar_select %p232, %s233, %s234
      %p238 = pneg %p232
      %p239 = scmp.eq.s32.totalorder %s29, 1
      %p240 = por %p238, %p239
      %p241 = scmp.ne.s32.totalorder %s233, %s236
      %p242 = scmp.eq.s32.totalorder %s29, 0
      %p243 = por %p241, %p242
      %p244 = scmp.ne.s32.totalorder %s233, %s236
      %p245 = scmp.eq.s32.totalorder %s34, 1
      %p246 = por %p244, %p245
      %p247 = scmp.ne.s32.totalorder %s236, %s237
      %p248 = scmp.eq.s32.totalorder %s34, 0
      %p249 = por %p247, %p248
      %p250 = scmp.ne.s32.totalorder %s236, %s237
      %p251 = scmp.eq.s32.totalorder %s35, 1
      %p252 = por %p250, %p251
      %p254 = scmp.ne.s32.totalorder %s237, %s253
      %p255 = scmp.eq.s32.totalorder %s35, 0
      %p256 = por %p254, %p255
      %s257 = ssub.s32 %s37, %s44
      %p258 = scmp.eq.s32.totalorder %s257, 0
      %s260 = sadd.s32 %s259, 1
      %s261 = scalar_select %p258, %s259, %s260
      %p264 = pneg %p258
      %p265 = scmp.eq.s32.totalorder %s29, 1
      %p266 = por %p264, %p265
      %p267 = scmp.ne.s32.totalorder %s259, %s262
      %p268 = scmp.eq.s32.totalorder %s29, 0
      %p269 = por %p267, %p268
      %p270 = scmp.ne.s32.totalorder %s259, %s262
      %p271 = scmp.eq.s32.totalorder %s34, 1
      %p272 = por %p270, %p271
      %p273 = scmp.ne.s32.totalorder %s262, %s263
      %p274 = scmp.eq.s32.totalorder %s34, 0
      %p275 = por %p273, %p274
      %p276 = scmp.ne.s32.totalorder %s262, %s263
      %p277 = scmp.eq.s32.totalorder %s35, 1
      %p278 = por %p276, %p277
      %p280 = scmp.ne.s32.totalorder %s263, %s279
      %p281 = scmp.eq.s32.totalorder %s35, 0
      %p282 = por %p280, %p281
      %s283 = ssub.s32 %s37, %s44
      %p284 = scmp.eq.s32.totalorder %s283, 0
      %s286 = sadd.s32 %s285, 1
      %s287 = scalar_select %p284, %s285, %s286
      %p290 = pneg %p284
      %p291 = scmp.eq.s32.totalorder %s29, 1
      %p292 = por %p290, %p291
      %p293 = scmp.ne.s32.totalorder %s285, %s288
      %p294 = scmp.eq.s32.totalorder %s29, 0
      %p295 = por %p293, %p294
      %p296 = scmp.ne.s32.totalorder %s285, %s288
      %p297 = scmp.eq.s32.totalorder %s34, 1
      %p298 = por %p296, %p297
      %p299 = scmp.ne.s32.totalorder %s288, %s289
      %p300 = scmp.eq.s32.totalorder %s34, 0
      %p301 = por %p299, %p300
      %p302 = scmp.ne.s32.totalorder %s288, %s289
      %p303 = scmp.eq.s32.totalorder %s35, 1
      %p304 = por %p302, %p303
      %p306 = scmp.ne.s32.totalorder %s289, %s305
      %p307 = scmp.eq.s32.totalorder %s35, 0
      %p308 = por %p306, %p307
      %s309 = ssub.s32 %s37, %s44
      %p310 = scmp.eq.s32.totalorder %s309, 0
      %s312 = sadd.s32 %s311, 1
      %s313 = scalar_select %p310, %s311, %s312
      %p316 = pneg %p310
      %p317 = scmp.eq.s32.totalorder %s29, 1
      %p318 = por %p316, %p317
      %p319 = scmp.ne.s32.totalorder %s311, %s314
      %p320 = scmp.eq.s32.totalorder %s29, 0
      %p321 = por %p319, %p320
      %p322 = scmp.ne.s32.totalorder %s311, %s314
      %p323 = scmp.eq.s32.totalorder %s34, 1
      %p324 = por %p322, %p323
      %p325 = scmp.ne.s32.totalorder %s314, %s315
      %p326 = scmp.eq.s32.totalorder %s34, 0
      %p327 = por %p325, %p326
      %p328 = scmp.ne.s32.totalorder %s314, %s315
      %p329 = scmp.eq.s32.totalorder %s35, 1
      %p330 = por %p328, %p329
      %p332 = scmp.ne.s32.totalorder %s315, %s331
      %p333 = scmp.eq.s32.totalorder %s35, 0
      %p334 = por %p332, %p333
      %s335 = ssub.s32 %s37, %s44
      %p336 = scmp.eq.s32.totalorder %s335, 0
      %s338 = sadd.s32 %s337, 1
      %s339 = scalar_select %p336, %s337, %s338
      %p342 = pneg %p336
      %p343 = scmp.eq.s32.totalorder %s29, 1
      %p344 = por %p342, %p343
      %p345 = scmp.ne.s32.totalorder %s337, %s340
      %p346 = scmp.eq.s32.totalorder %s29, 0
      %p347 = por %p345, %p346
      %p348 = scmp.ne.s32.totalorder %s337, %s340
      %p349 = scmp.eq.s32.totalorder %s34, 1
      %p350 = por %p348, %p349
      %p351 = scmp.ne.s32.totalorder %s340, %s341
      %p352 = scmp.eq.s32.totalorder %s34, 0
      %p353 = por %p351, %p352
      %p354 = scmp.ne.s32.totalorder %s340, %s341
      %p355 = scmp.eq.s32.totalorder %s35, 1
      %p356 = por %p354, %p355
      %p358 = scmp.ne.s32.totalorder %s341, %s357
      %p359 = scmp.eq.s32.totalorder %s35, 0
      %p360 = por %p358, %p359
      %s361 = ssub.s32 %s37, %s44
      %p362 = scmp.eq.s32.totalorder %s361, 0
      %s364 = sadd.s32 %s363, 1
      %s365 = scalar_select %p362, %s363, %s364
      %p368 = pneg %p362
      %p369 = scmp.eq.s32.totalorder %s29, 1
      %p370 = por %p368, %p369
      %p371 = scmp.ne.s32.totalorder %s363, %s366
      %p372 = scmp.eq.s32.totalorder %s29, 0
      %p373 = por %p371, %p372
      %p374 = scmp.ne.s32.totalorder %s363, %s366
      %p375 = scmp.eq.s32.totalorder %s34, 1
      %p376 = por %p374, %p375
      %p377 = scmp.ne.s32.totalorder %s366, %s367
      %p378 = scmp.eq.s32.totalorder %s34, 0
      %p379 = por %p377, %p378
      %p380 = scmp.ne.s32.totalorder %s366, %s367
      %p381 = scmp.eq.s32.totalorder %s35, 1
      %p382 = por %p380, %p381
      %p384 = scmp.ne.s32.totalorder %s367, %s383
      %p385 = scmp.eq.s32.totalorder %s35, 0
      %p386 = por %p384, %p385
      %s387 = ssub.s32 %s36, %s48
      %p388 = scmp.eq.s32.totalorder %s387, 0
      %s390 = sadd.s32 %s389, 1
      %s391 = scalar_select %p388, %s389, %s390
      %p394 = pneg %p388
      %p395 = scmp.eq.s32.totalorder %s29, 1
      %p396 = por %p394, %p395
      %p397 = scmp.ne.s32.totalorder %s389, %s392
      %p398 = scmp.eq.s32.totalorder %s29, 0
      %p399 = por %p397, %p398
      %p400 = scmp.ne.s32.totalorder %s389, %s392
      %p401 = scmp.eq.s32.totalorder %s34, 1
      %p402 = por %p400, %p401
      %p403 = scmp.ne.s32.totalorder %s392, %s393
      %p404 = scmp.eq.s32.totalorder %s34, 0
      %p405 = por %p403, %p404
      %p406 = scmp.ne.s32.totalorder %s392, %s393
      %p407 = scmp.eq.s32.totalorder %s35, 1
      %p408 = por %p406, %p407
      %p410 = scmp.ne.s32.totalorder %s393, %s409
      %p411 = scmp.eq.s32.totalorder %s35, 0
      %p412 = por %p410, %p411
      %p413 = scmp.le.s32.totalorder 1, %s29
      %p414 = scmp.lt.s32.totalorder %s29, 3
      %p415 = pnand %p413, %p414
      %p416 = pneg %p415
      // Predicated region
      $region9: #{tpu_custom_call.1} parent=5 // pred_check
        _
      $region10: #{tpu_custom_call.1} parent=5 // pred_check_branch
        %418 = sbr.rel (%p415) target = $region12
      $region11: #{tpu_custom_call.1} parent=5 // pred_region
        %s419 = ssub.s32 %s29, 1
        // Predicated region
        $region13: #{tpu_custom_call.1} parent=11 // pred_check
          %p420 = pneg %p67
        $region14: #{tpu_custom_call.1} parent=11 // pred_check_branch
          %422 = sbr.rel (%p420) target = $region16
        $region15: #{tpu_custom_call.1} parent=11 // pred_region
          %s423 = smul.u32 8, %s38
          %p424 = scmp.lt.s32.totalorder %s423, 7
          %s425 = scalar_select %p424, %s423, 7
          %s426 = smul.addr %s425, 8
          %s427 = scalar_lea.vmem %s0, %s426
          %s428 = smul.u32 8, %s38
        $region16: #{tpu_custom_call.1} parent=11 // pred_fallthru
          _
      $region12: #{tpu_custom_call.1} parent=5 // pred_fallthru
        _
      %p429 = scmp.lt.s32.totalorder %s29, 2
      // Predicated region
      $region17: #{tpu_custom_call.1} parent=5 // pred_check
        %p430 = pneg %p429
      $region18: #{tpu_custom_call.1} parent=5 // pred_check_branch
        %432 = sbr.rel (%p430) target = $region20
      $region19: #{tpu_custom_call.1} parent=5 // pred_region
        // Predicated region
        $region21: #{tpu_custom_call.1} parent=19 // pred_check
          %p433 = pneg %p87
        $region22: #{tpu_custom_call.1} parent=19 // pred_check_branch
          %435 = sbr.rel (%p433) target = $region24
        $region23: #{tpu_custom_call.1} parent=19 // pred_region
          %p436 = scmp.lt.s32.totalorder %s37, 1
          %s437 = scalar_select %p436, %s37, 1
          %s438 = scalar_lea.vmem %s1, %s437
        $region24: #{tpu_custom_call.1} parent=19 // pred_fallthru
          _
        // Predicated region
        $region25: #{tpu_custom_call.1} parent=19 // pred_check
          %p439 = pneg %p113
        $region26: #{tpu_custom_call.1} parent=19 // pred_check_branch
          %441 = sbr.rel (%p439) target = $region28
        $region27: #{tpu_custom_call.1} parent=19 // pred_region
          %p442 = scmp.lt.s32.totalorder %s37, 1
          %s443 = scalar_select %p442, %s37, 1
          %s444 = scalar_lea.vmem %s2, %s443
        $region28: #{tpu_custom_call.1} parent=19 // pred_fallthru
          _
        // Predicated region
        $region29: #{tpu_custom_call.1} parent=19 // pred_check
          %p445 = pneg %p139
        $region30: #{tpu_custom_call.1} parent=19 // pred_check_branch
          %447 = sbr.rel (%p445) target = $region32
        $region31: #{tpu_custom_call.1} parent=19 // pred_region
          %p448 = scmp.lt.s32.totalorder %s37, 1
          %s449 = scalar_select %p448, %s37, 1
          %s450 = smul.addr %s449, 4
          %s451 = smul.addr %s450, 4
          %s452 = scalar_lea.vmem %s3, %s451
        $region32: #{tpu_custom_call.1} parent=19 // pred_fallthru
          _
        // Predicated region
        $region33: #{tpu_custom_call.1} parent=19 // pred_check
          %p453 = pneg %p165
        $region34: #{tpu_custom_call.1} parent=19 // pred_check_branch
          %455 = sbr.rel (%p453) target = $region36
        $region35: #{tpu_custom_call.1} parent=19 // pred_region
          %p456 = scmp.lt.s32.totalorder %s37, 1
          %s457 = scalar_select %p456, %s37, 1
          %s458 = scalar_lea.vmem %s4, %s457
        $region36: #{tpu_custom_call.1} parent=19 // pred_fallthru
          _
        // Predicated region
        $region37: #{tpu_custom_call.1} parent=19 // pred_check
          %p459 = pneg %p191
        $region38: #{tpu_custom_call.1} parent=19 // pred_check_branch
          %461 = sbr.rel (%p459) target = $region40
        $region39: #{tpu_custom_call.1} parent=19 // pred_region
          %s462 = sand.u32 %s181, 1
          %s463 = scalar_lea.sflag [#allocation4], %s462
          %s464 = sand.u32 %s181, 1
          %s465 = smul.addr %s464, 16
          %s466 = scalar_lea.vmem [#allocation3], %s465
          %s468 = ssub.s32 256, 256
          %469 = vsyncadd %s463, %s468
          %s470 = smul.addr %s37, 4
          %s471 = smul.addr %s470, 64
          %s472 = scalar_lea.hbm %s5, %s471
          %s473 = sshll.u32 %s466, 4
          %s474 = int_to_ptr.vmem [resolvable:$true] %s473
          %479 = dma.hbm_to_vmem [thread:$0]  %s472, 256, %s474, %s463, 64, 64, 4
        $region40: #{tpu_custom_call.1} parent=19 // pred_fallthru
          _
        // Predicated region
        $region41: #{tpu_custom_call.1} parent=19 // pred_check
          %p480 = pneg %p217
        $region42: #{tpu_custom_call.1} parent=19 // pred_check_branch
          %482 = sbr.rel (%p480) target = $region44
        $region43: #{tpu_custom_call.1} parent=19 // pred_region
          %p483 = scmp.lt.s32.totalorder %s37, 1
          %s484 = scalar_select %p483, %s37, 1
          %s485 = scalar_lea.vmem %s6, %s484
        $region44: #{tpu_custom_call.1} parent=19 // pred_fallthru
          _
        // Predicated region
        $region45: #{tpu_custom_call.1} parent=19 // pred_check
          %p486 = pneg %p243
        $region46: #{tpu_custom_call.1} parent=19 // pred_check_branch
          %488 = sbr.rel (%p486) target = $region48
        $region47: #{tpu_custom_call.1} parent=19 // pred_region
          %s489 = sand.u32 %s29, 1
          %s490 = scalar_lea.sflag [#allocation7], %s489
          %s491 = sand.u32 %s233, 1
          %s492 = scalar_lea.vmem [#allocation6], %s491
          %s494 = ssub.s32 16, 16
          %495 = vsyncadd %s490, %s494
          %s496 = smul.addr %s37, 16
          %s497 = scalar_lea.hbm %s7, %s496
          %s499 = sshll.u32 %s492, 4
          %s500 = int_to_ptr.vmem [resolvable:$true] %s499
          %502 = dma.hbm_to_vmem [thread:$0]  %s497, 16, %s500, %s490
        $region48: #{tpu_custom_call.1} parent=19 // pred_fallthru
          _
        // Predicated region
        $region49: #{tpu_custom_call.1} parent=19 // pred_check
          %p503 = pneg %p269
        $region50: #{tpu_custom_call.1} parent=19 // pred_check_branch
          %505 = sbr.rel (%p503) target = $region52
        $region51: #{tpu_custom_call.1} parent=19 // pred_region
          %s506 = sand.u32 %s29, 1
          %s507 = scalar_lea.sflag [#allocation7], %s506
          %s508 = sand.u32 %s259, 1
          %s509 = scalar_lea.vmem [#allocation8], %s508
          %s511 = ssub.s32 16, 16
          %512 = vsyncadd %s507, %s511
          %s513 = smul.addr %s37, 16
          %s514 = scalar_lea.hbm %s8, %s513
          %s516 = sshll.u32 %s509, 4
          %s517 = int_to_ptr.vmem [resolvable:$true] %s516
          %519 = dma.hbm_to_vmem [thread:$0]  %s514, 16, %s517, %s507
        $region52: #{tpu_custom_call.1} parent=19 // pred_fallthru
          _
        // Predicated region
        $region53: #{tpu_custom_call.1} parent=19 // pred_check
          %p520 = pneg %p295
        $region54: #{tpu_custom_call.1} parent=19 // pred_check_branch
          %522 = sbr.rel (%p520) target = $region56
        $region55: #{tpu_custom_call.1} parent=19 // pred_region
          %s523 = sand.u32 %s29, 1
          %s524 = scalar_lea.sflag [#allocation10], %s523
          %s525 = sand.u32 %s285, 1
          %s526 = smul.addr %s525, 16
          %s527 = scalar_lea.vmem [#allocation9], %s526
          %s529 = ssub.s32 256, 256
          %530 = vsyncadd %s524, %s529
          %s531 = smul.addr %s37, 4
          %s532 = smul.addr %s531, 64
          %s533 = scalar_lea.hbm %s9, %s532
          %s534 = sshll.u32 %s527, 4
          %s535 = int_to_ptr.vmem [resolvable:$true] %s534
          %540 = dma.hbm_to_vmem [thread:$0]  %s533, 256, %s535, %s524, 64, 64, 4
        $region56: #{tpu_custom_call.1} parent=19 // pred_fallthru
          _
        // Predicated region
        $region57: #{tpu_custom_call.1} parent=19 // pred_check
          %p541 = pneg %p321
        $region58: #{tpu_custom_call.1} parent=19 // pred_check_branch
          %543 = sbr.rel (%p541) target = $region60
        $region59: #{tpu_custom_call.1} parent=19 // pred_region
          %s544 = sand.u32 %s29, 1
          %s545 = scalar_lea.sflag [#allocation10], %s544
          %s546 = sand.u32 %s311, 1
          %s547 = scalar_lea.vmem [#allocation11], %s546
          %s549 = ssub.s32 16, 16
          %550 = vsyncadd %s545, %s549
          %s551 = smul.addr %s37, 16
          %s552 = scalar_lea.hbm %s10, %s551
          %s554 = sshll.u32 %s547, 4
          %s555 = int_to_ptr.vmem [resolvable:$true] %s554
          %557 = dma.hbm_to_vmem [thread:$0]  %s552, 16, %s555, %s545
        $region60: #{tpu_custom_call.1} parent=19 // pred_fallthru
          _
        // Predicated region
        $region61: #{tpu_custom_call.1} parent=19 // pred_check
          %p558 = pneg %p347
        $region62: #{tpu_custom_call.1} parent=19 // pred_check_branch
          %560 = sbr.rel (%p558) target = $region64
        $region63: #{tpu_custom_call.1} parent=19 // pred_region
          %p561 = scmp.lt.s32.totalorder %s37, 1
          %s562 = scalar_select %p561, %s37, 1
          %s563 = smul.addr %s562, 8
          %s564 = smul.addr %s563, 4
          %s565 = scalar_lea.vmem %s11, %s564
        $region64: #{tpu_custom_call.1} parent=19 // pred_fallthru
          _
        // Predicated region
        $region65: #{tpu_custom_call.1} parent=19 // pred_check
          %p566 = pneg %p373
        $region66: #{tpu_custom_call.1} parent=19 // pred_check_branch
          %568 = sbr.rel (%p566) target = $region68
        $region67: #{tpu_custom_call.1} parent=19 // pred_region
          %p569 = scmp.lt.s32.totalorder %s37, 1
          %s570 = scalar_select %p569, %s37, 1
          %s571 = scalar_lea.vmem %s12, %s570
        $region68: #{tpu_custom_call.1} parent=19 // pred_fallthru
          _
      $region20: #{tpu_custom_call.1} parent=5 // pred_fallthru
        _
      %p572 = scmp.le.s32.totalorder 1, %s29
      %p573 = scmp.lt.s32.totalorder %s29, 3
      %p574 = pnand %p572, %p573
      %p575 = pneg %p574
      // Predicated region
      $region69: #{tpu_custom_call.1} parent=5 // pred_check
        _
      $region70: #{tpu_custom_call.1} parent=5 // pred_check_branch
        %577 = sbr.rel (%p574) target = $region72
      $region71: #{tpu_custom_call.1} parent=5 // pred_region
        %s578 = ssub.s32 %s29, 1
        %s579 = sand.u32 %s184, 1
        %s580 = scalar_lea.sflag [#allocation4], %s579
        %s581 = sand.u32 %s184, 1
        %s582 = smul.addr %s581, 16
        %s583 = scalar_lea.vmem [#allocation3], %s582
        // Predicated region
        $region73: #{tpu_custom_call.1} parent=71 // pred_check
          %p584 = pneg %p197
        $region74: #{tpu_custom_call.1} parent=71 // pred_check_branch
          %586 = sbr.rel (%p584) target = $region76
        $region75: #{tpu_custom_call.1} parent=71 // pred_region
          %587 = dma.done %s580, 256
        $region76: #{tpu_custom_call.1} parent=71 // pred_fallthru
          _
        %s588 = sand.u32 %s34, 1
        %s589 = scalar_lea.sflag [#allocation7], %s588
        %s590 = sand.u32 %s236, 1
        %s591 = scalar_lea.vmem [#allocation6], %s590
        // Predicated region
        $region77: #{tpu_custom_call.1} parent=71 // pred_check
          %p592 = pneg %p249
        $region78: #{tpu_custom_call.1} parent=71 // pred_check_branch
          %594 = sbr.rel (%p592) target = $region80
        $region79: #{tpu_custom_call.1} parent=71 // pred_region
          %595 = dma.done %s589, 16
        $region80: #{tpu_custom_call.1} parent=71 // pred_fallthru
          _
        %s596 = sand.u32 %s34, 1
        %s597 = scalar_lea.sflag [#allocation7], %s596
        %s598 = sand.u32 %s262, 1
        %s599 = scalar_lea.vmem [#allocation8], %s598
        // Predicated region
        $region81: #{tpu_custom_call.1} parent=71 // pred_check
          %p600 = pneg %p275
        $region82: #{tpu_custom_call.1} parent=71 // pred_check_branch
          %602 = sbr.rel (%p600) target = $region84
        $region83: #{tpu_custom_call.1} parent=71 // pred_region
          %603 = dma.done %s597, 16
        $region84: #{tpu_custom_call.1} parent=71 // pred_fallthru
          _
        %s604 = sand.u32 %s34, 1
        %s605 = scalar_lea.sflag [#allocation10], %s604
        %s606 = sand.u32 %s288, 1
        %s607 = smul.addr %s606, 16
        %s608 = scalar_lea.vmem [#allocation9], %s607
        // Predicated region
        $region85: #{tpu_custom_call.1} parent=71 // pred_check
          %p609 = pneg %p301
        $region86: #{tpu_custom_call.1} parent=71 // pred_check_branch
          %611 = sbr.rel (%p609) target = $region88
        $region87: #{tpu_custom_call.1} parent=71 // pred_region
          %612 = dma.done %s605, 256
        $region88: #{tpu_custom_call.1} parent=71 // pred_fallthru
          _
        %s613 = sand.u32 %s34, 1
        %s614 = scalar_lea.sflag [#allocation10], %s613
        %s615 = sand.u32 %s314, 1
        %s616 = scalar_lea.vmem [#allocation11], %s615
        // Predicated region
        $region89: #{tpu_custom_call.1} parent=71 // pred_check
          %p617 = pneg %p327
        $region90: #{tpu_custom_call.1} parent=71 // pred_check_branch
          %619 = sbr.rel (%p617) target = $region92
        $region91: #{tpu_custom_call.1} parent=71 // pred_region
          %620 = dma.done %s614, 16
        $region92: #{tpu_custom_call.1} parent=71 // pred_fallthru
          _
        %s621 = smul.u32 8, %s38
        %p622 = scmp.lt.s32.totalorder %s621, 7
        %s623 = scalar_select %p622, %s621, 7
        %s624 = smul.addr %s623, 8
        %s625 = scalar_lea.vmem %s0, %s624
        %p626 = pneg %p67
        %p627 = pneg %p64
        %p628 = scmp.lt.s32.totalorder %s39, 1
        %s629 = scalar_select %p628, %s39, 1
        %s630 = scalar_lea.vmem %s1, %s629
        %p631 = pneg %p93
        %p632 = pneg %p90
        %p633 = scmp.lt.s32.totalorder %s39, 1
        %s634 = scalar_select %p633, %s39, 1
        %s635 = scalar_lea.vmem %s2, %s634
        %p636 = pneg %p119
        %p637 = pneg %p116
        %p638 = scmp.lt.s32.totalorder %s39, 1
        %s639 = scalar_select %p638, %s39, 1
        %s640 = smul.addr %s639, 4
        %s641 = smul.addr %s640, 4
        %s642 = scalar_lea.vmem %s3, %s641
        %p643 = pneg %p145
        %p644 = pneg %p142
        %p645 = scmp.lt.s32.totalorder %s39, 1
        %s646 = scalar_select %p645, %s39, 1
        %s647 = scalar_lea.vmem %s4, %s646
        %p648 = pneg %p171
        %p649 = pneg %p168
        %s650 = sand.u32 %s184, 1
        %s651 = scalar_lea.sflag [#allocation4], %s650
        %s652 = sand.u32 %s184, 1
        %s653 = smul.addr %s652, 16
        %s654 = scalar_lea.vmem [#allocation3], %s653
        %p655 = pneg %p197
        %p656 = pneg %p194
        %p657 = scmp.lt.s32.totalorder %s39, 1
        %s658 = scalar_select %p657, %s39, 1
        %s659 = scalar_lea.vmem %s6, %s658
        %p660 = pneg %p223
        %p661 = pneg %p220
        %s662 = sand.u32 %s34, 1
        %s663 = scalar_lea.sflag [#allocation7], %s662
        %s664 = sand.u32 %s236, 1
        %s665 = scalar_lea.vmem [#allocation6], %s664
        %p666 = pneg %p249
        %p667 = pneg %p246
        %s668 = sand.u32 %s34, 1
        %s669 = scalar_lea.sflag [#allocation7], %s668
        %s670 = sand.u32 %s262, 1
        %s671 = scalar_lea.vmem [#allocation8], %s670
        %p672 = pneg %p275
        %p673 = pneg %p272
        %s674 = sand.u32 %s34, 1
        %s675 = scalar_lea.sflag [#allocation10], %s674
        %s676 = sand.u32 %s288, 1
        %s677 = smul.addr %s676, 16
        %s678 = scalar_lea.vmem [#allocation9], %s677
        %p679 = pneg %p301
        %p680 = pneg %p298
        %s681 = sand.u32 %s34, 1
        %s682 = scalar_lea.sflag [#allocation10], %s681
        %s683 = sand.u32 %s314, 1
        %s684 = scalar_lea.vmem [#allocation11], %s683
        %p685 = pneg %p327
        %p686 = pneg %p324
        %p687 = scmp.lt.s32.totalorder %s39, 1
        %s688 = scalar_select %p687, %s39, 1
        %s689 = smul.addr %s688, 8
        %s690 = smul.addr %s689, 4
        %s691 = scalar_lea.vmem %s11, %s690
        %p692 = pneg %p353
        %p693 = pneg %p350
        %p694 = scmp.lt.s32.totalorder %s39, 1
        %s695 = scalar_select %p694, %s39, 1
        %s696 = scalar_lea.vmem %s12, %s695
        %p697 = pneg %p379
        %p698 = pneg %p376
        %p699 = pneg %p405
        %p700 = pneg %p402
        %s701 = smul.u32 8, %s38
        %p702 = scmp.lt.s32.totalorder %s701, 7
        %s703 = scalar_select %p702, %s701, 7
        %s704 = smul.addr %s703, 8
        %s705 = scalar_lea.vmem %s0, %s704
        %s706 = smul.u32 8, %s38
        %p707 = scmp.lt.s32.totalorder %s39, 1
        %s708 = scalar_select %p707, %s39, 1
        %s709 = scalar_lea.vmem %s1, %s708
        %p710 = scmp.lt.s32.totalorder %s39, 1
        %s711 = scalar_select %p710, %s39, 1
        %s712 = scalar_lea.vmem %s2, %s711
        %p713 = scmp.lt.s32.totalorder %s39, 1
        %s714 = scalar_select %p713, %s39, 1
        %s715 = smul.addr %s714, 4
        %s716 = smul.addr %s715, 4
        %s717 = scalar_lea.vmem %s3, %s716
        %p718 = scmp.lt.s32.totalorder %s39, 1
        %s719 = scalar_select %p718, %s39, 1
        %s720 = scalar_lea.vmem %s4, %s719
        %p721 = scmp.lt.s32.totalorder %s39, 1
        %s722 = scalar_select %p721, %s39, 1
        %s723 = scalar_lea.vmem %s6, %s722
        %p724 = scmp.lt.s32.totalorder %s39, 1
        %s725 = scalar_select %p724, %s39, 1
        %s726 = smul.addr %s725, 8
        %s727 = smul.addr %s726, 4
        %s728 = scalar_lea.vmem %s11, %s727
        %p729 = scmp.lt.s32.totalorder %s39, 1
        %s730 = scalar_select %p729, %s39, 1
        %s731 = scalar_lea.vmem %s12, %s730
        %p733 = scmp.eq.s32.totalorder %s39, 0
        // Predicated region
        $region93: #{tpu_custom_call.1} parent=71 // pred_check
          %p734 = pneg %p733
        $region94: #{tpu_custom_call.1} parent=71 // pred_check_branch
          %736 = sbr.rel (%p734) target = $region96
        $region95: #{tpu_custom_call.1} parent=71 // pred_region
          %v737 = vld [vmem:[%s705] sm:$0xff]
          %v738 = vld [vmem:[%s705 + $0x8] sm:$0xff]
          %v739 = vld [vmem:[%s705 + $0x10] sm:$0xff]
          %v740 = vld [vmem:[%s705 + $0x18] sm:$0xff]
          %v741 = vld [vmem:[%s705 + $0x20] sm:$0xff]
          %v742 = vld [vmem:[%s705 + $0x28] sm:$0xff]
          %v743 = vld [vmem:[%s705 + $0x30] sm:$0xff]
          %v744 = vld [vmem:[%s705 + $0x38] sm:$0xff]
          %vm745 = vcmask 261120
          %746 = vst.msk [vmem:[#allocation2] sm:$0xff] %vm745, %v737
          %747 = vst.msk [vmem:[#allocation2 + $0x8] sm:$0xff] %vm745, %v738
          %748 = vst.msk [vmem:[#allocation2 + $0x10] sm:$0xff] %vm745, %v739
          %749 = vst.msk [vmem:[#allocation2 + $0x18] sm:$0xff] %vm745, %v740
          %750 = vst.msk [vmem:[#allocation2 + $0x20] sm:$0xff] %vm745, %v741
          %751 = vst.msk [vmem:[#allocation2 + $0x28] sm:$0xff] %vm745, %v742
          %752 = vst.msk [vmem:[#allocation2 + $0x30] sm:$0xff] %vm745, %v743
          %753 = vst.msk [vmem:[#allocation2 + $0x38] sm:$0xff] %vm745, %v744
        $region96: #{tpu_custom_call.1} parent=71 // pred_fallthru
          _
        %v754 = vld [vmem:[#allocation2] sm:$0xff]
        %v755 = vld [vmem:[#allocation2 + $0x8] sm:$0xff]
        %v756 = vld [vmem:[#allocation2 + $0x10] sm:$0xff]
        %v757 = vld [vmem:[#allocation2 + $0x18] sm:$0xff]
        %v758 = vld [vmem:[#allocation2 + $0x20] sm:$0xff]
        %v759 = vld [vmem:[#allocation2 + $0x28] sm:$0xff]
        %v760 = vld [vmem:[#allocation2 + $0x30] sm:$0xff]
        %v761 = vld [vmem:[#allocation2 + $0x38] sm:$0xff]
        %v762 = vld [vmem:[%s709] sm:$0x1]
        %v763 = vld [vmem:[%s712] sm:$0x1]
        %vm764 = vcmask 261120
        %v765 = vsel %vm764, %v754, 0.0
        %766 = vadd.xlane.f32.xlu0 %v765
        %v767 = vpop.xlane.xlu0 %766
        %v768 = vsel %vm764, %v755, 0.0
        %769 = vadd.xlane.f32.xlu0 %v768
        %v770 = vpop.xlane.xlu0 %769
        %v771 = vsel %vm764, %v756, 0.0
        %772 = vadd.xlane.f32.xlu0 %v771
        %v773 = vpop.xlane.xlu0 %772
        %v774 = vsel %vm764, %v757, 0.0
        %775 = vadd.xlane.f32.xlu0 %v774
        %v776 = vpop.xlane.xlu0 %775
        %v777 = vsel %vm764, %v758, 0.0
        %778 = vadd.xlane.f32.xlu0 %v777
        %v779 = vpop.xlane.xlu0 %778
        %v780 = vsel %vm764, %v759, 0.0
        %781 = vadd.xlane.f32.xlu0 %v780
        %v782 = vpop.xlane.xlu0 %781
        %v783 = vsel %vm764, %v760, 0.0
        %784 = vadd.xlane.f32.xlu0 %v783
        %v785 = vpop.xlane.xlu0 %784
        %v786 = vsel %vm764, %v761, 0.0
        %787 = vadd.xlane.f32.xlu0 %v786
        %v788 = vpop.xlane.xlu0 %787
        %v789 = vrcp.pop 32.0
        %v790 = vmul.f32 %v767, %v789
        %v791 = vmul.f32 %v770, %v789
        %v792 = vmul.f32 %v773, %v789
        %v793 = vmul.f32 %v776, %v789
        %v794 = vmul.f32 %v779, %v789
        %v795 = vmul.f32 %v782, %v789
        %v796 = vmul.f32 %v785, %v789
        %v797 = vmul.f32 %v788, %v789
        %v798 = vsub.f32 %v754, %v790
        %v799 = vsub.f32 %v755, %v791
        %v800 = vsub.f32 %v756, %v792
        %v801 = vsub.f32 %v757, %v793
        %v802 = vsub.f32 %v758, %v794
        %v803 = vsub.f32 %v759, %v795
        %v804 = vsub.f32 %v760, %v796
        %v805 = vsub.f32 %v761, %v797
        %v806 = vmul.f32 %v798, %v798
        %v807 = vmul.f32 %v799, %v799
        %v808 = vmul.f32 %v800, %v800
        %v809 = vmul.f32 %v801, %v801
        %v810 = vmul.f32 %v802, %v802
        %v811 = vmul.f32 %v803, %v803
        %v812 = vmul.f32 %v804, %v804
        %v813 = vmul.f32 %v805, %v805
        %v814 = vsel %vm764, %v806, 0.0
        %815 = vadd.xlane.f32.xlu0 %v814
        %v816 = vpop.xlane.xlu0 %815
        %v817 = vsel %vm764, %v807, 0.0
        %818 = vadd.xlane.f32.xlu0 %v817
        %v819 = vpop.xlane.xlu0 %818
        %v820 = vsel %vm764, %v808, 0.0
        %821 = vadd.xlane.f32.xlu0 %v820
        %v822 = vpop.xlane.xlu0 %821
        %v823 = vsel %vm764, %v809, 0.0
        %824 = vadd.xlane.f32.xlu0 %v823
        %v825 = vpop.xlane.xlu0 %824
        %v826 = vsel %vm764, %v810, 0.0
        %827 = vadd.xlane.f32.xlu0 %v826
        %v828 = vpop.xlane.xlu0 %827
        %v829 = vsel %vm764, %v811, 0.0
        %830 = vadd.xlane.f32.xlu0 %v829
        %v831 = vpop.xlane.xlu0 %830
        %v832 = vsel %vm764, %v812, 0.0
        %833 = vadd.xlane.f32.xlu0 %v832
        %v834 = vpop.xlane.xlu0 %833
        %v835 = vsel %vm764, %v813, 0.0
        %836 = vadd.xlane.f32.xlu0 %v835
        %v837 = vpop.xlane.xlu0 %836
        %v838 = vmul.f32 %v816, %v789
        %v839 = vmul.f32 %v819, %v789
        %v840 = vmul.f32 %v822, %v789
        %v841 = vmul.f32 %v825, %v789
        %v842 = vmul.f32 %v828, %v789
        %v843 = vmul.f32 %v831, %v789
        %v844 = vmul.f32 %v834, %v789
        %v845 = vmul.f32 %v837, %v789
        %v846 = vadd.f32 %v838, 1e-12
        %v847 = vadd.f32 %v839, 1e-12
        %v848 = vadd.f32 %v840, 1e-12
        %v849 = vadd.f32 %v841, 1e-12
        %v850 = vadd.f32 %v842, 1e-12
        %v851 = vadd.f32 %v843, 1e-12
        %v852 = vadd.f32 %v844, 1e-12
        %v853 = vadd.f32 %v845, 1e-12
        %v854 = vrsqrt.pop %v846
        %v855 = vrsqrt.pop %v847
        %v856 = vrsqrt.pop %v848
        %v857 = vrsqrt.pop %v849
        %v858 = vrsqrt.pop %v850
        %v859 = vrsqrt.pop %v851
        %v860 = vrsqrt.pop %v852
        %v861 = vrsqrt.pop %v853
        %v862 = vmul.f32 %v798, %v854
        %v863 = vmul.f32 %v799, %v855
        %v864 = vmul.f32 %v800, %v856
        %v865 = vmul.f32 %v801, %v857
        %v866 = vmul.f32 %v802, %v858
        %v867 = vmul.f32 %v803, %v859
        %v868 = vmul.f32 %v804, %v860
        %v869 = vmul.f32 %v805, %v861
        %v871 = vlaneseq
        %v872 = vshrl.u32 %v871, 7
        %v873 = vsub.s32 0, %v872
        %v874 = vrot.slane %v762, %v873
        %v876 = vmul.f32 %v862, %v874
        %v877 = vmul.f32 %v863, %v874
        %v878 = vmul.f32 %v864, %v874
        %v879 = vmul.f32 %v865, %v874
        %v880 = vmul.f32 %v866, %v874
        %v881 = vmul.f32 %v867, %v874
        %v882 = vmul.f32 %v868, %v874
        %v883 = vmul.f32 %v869, %v874
        %v885 = vlaneseq
        %v886 = vshrl.u32 %v885, 7
        %v887 = vsub.s32 0, %v886
        %v888 = vrot.slane %v763, %v887
        %v890 = vadd.f32 %v876, %v888
        %v891 = vadd.f32 %v877, %v888
        %v892 = vadd.f32 %v878, %v888
        %v893 = vadd.f32 %v879, %v888
        %v894 = vadd.f32 %v880, %v888
        %v895 = vadd.f32 %v881, %v888
        %v896 = vadd.f32 %v882, %v888
        %v897 = vadd.f32 %v883, %v888
        %v898 = vpack.c.bf16 %v891, %v890
        %v899 = vpack.c.bf16 %v893, %v892
        %v900 = vpack.c.bf16 %v895, %v894
        %v901 = vpack.c.bf16 %v897, %v896
        %v902 = vld [vmem:[%s717] sm:$0xf]
        %v903 = vld [vmem:[%s717 + $0x4] sm:$0xf]
        %v904 = vld [vmem:[%s717 + $0x8] sm:$0xf]
        %v905 = vld [vmem:[%s717 + $0xc] sm:$0xf]
        %v906 = vld [vmem:[%s720] sm:$0x1]
        %v908 = vlaneseq
        %v909 = vshrl.u32 %v908, 7
        %v910 = vsub.s32 0, %v909
        %v911 = vrot.slane %v906, %v910
        %v917 = vunpack.c.l.b16 %v902
        %v918 = vunpack.c.l.b16 %v903
        %v919 = vunpack.c.l.b16 %v904
        %v920 = vunpack.c.l.b16 %v905
        %v921 = vpack.c.b16 %v918, %v917
        %v922 = vpack.c.b16 %v920, %v919
        %v926 = vsel %vm764, %v898, 0
        %v929 = vsel %vm764, %v899, 0
        %v932 = vsel %vm764, %v900, 0
        %v935 = vsel %vm764, %v901, 0
        %937 = vmatprep.subr.bf16.mxu0 0
        %938 = vmatpush1.bf16.msra.mxu0 %v921
        %939 = vmatprep.subr.bf16.mxu0 0
        %940 = vmatpush1.bf16.msra.mxu0 %v922
        %941 = vmatprep.subr.bf16.mxu0 0
        %942 = vmatpush1.bf16.msra.mxu0 0
        %943 = vmatprep.subr.bf16.mxu0 0
        %944 = vmatpush1.bf16.msra.mxu0 0
        %945 = vmatprep.subr.bf16.mxu0 0
        %946 = vmatpush1.bf16.msra.mxu0 0
        %947 = vmatprep.subr.bf16.mxu0 0
        %948 = vmatpush1.bf16.msra.mxu0 0
        %949 = vmatprep.subr.bf16.mxu0 0
        %950 = vmatpush1.bf16.msra.mxu0 0
        %951 = vmatprep.subr.bf16.mxu0 0
        %952 = vmatpush1.bf16.msra.mxu0 0
        %953 = vmatprep.subr.bf16.mxu0 0
        %954 = vmatpush1.bf16.msra.mxu0 0
        %955 = vmatprep.subr.bf16.mxu0 0
        %956 = vmatpush1.bf16.msra.mxu0 0
        %957 = vmatprep.subr.bf16.mxu0 0
        %958 = vmatpush1.bf16.msra.mxu0 0
        %959 = vmatprep.subr.bf16.mxu0 0
        %960 = vmatpush1.bf16.msra.mxu0 0
        %961 = vmatprep.subr.bf16.mxu0 0
        %962 = vmatpush1.bf16.msra.mxu0 0
        %963 = vmatprep.subr.bf16.mxu0 0
        %964 = vmatpush1.bf16.msra.mxu0 0
        %965 = vmatprep.subr.bf16.mxu0 0
        %966 = vmatpush1.bf16.msra.mxu0 0
        %967 = vmatprep.subr.bf16.mxu0 0
        %968 = vmatpush1.bf16.msra.mxu0 0
        %969 = vmatprep.mubr.bf16.mxu0 0
        %970 = vmatmul.mubr.bf16.gmra.mrb[0].mxu0 %v926
        %v971 = vpop.f32.mrb[0].mxu0
        %v972 = vadd.f32 %v911, %v971
        %v973 = vpop.f32.mrb[0].mxu0
        %v974 = vpop.f32.mrb[0].mxu0
        %v975 = vadd.f32 %v911, %v974
        %v976 = vpop.f32.mrb[0].mxu0
        %977 = vmatprep.mubr.bf16.mxu0 0
        %978 = vmatmul.mubr.bf16.gmra.mrb[0].mxu0 %v929
        %v979 = vpop.f32.mrb[0].mxu0
        %v980 = vadd.f32 %v911, %v979
        %v981 = vpop.f32.mrb[0].mxu0
        %v982 = vpop.f32.mrb[0].mxu0
        %v983 = vadd.f32 %v911, %v982
        %v984 = vpop.f32.mrb[0].mxu0
        %985 = vmatprep.mubr.bf16.mxu0 0
        %986 = vmatmul.mubr.bf16.gmra.mrb[0].mxu0 %v932
        %v987 = vpop.f32.mrb[0].mxu0
        %v988 = vadd.f32 %v911, %v987
        %v989 = vpop.f32.mrb[0].mxu0
        %v990 = vpop.f32.mrb[0].mxu0
        %v991 = vadd.f32 %v911, %v990
        %v992 = vpop.f32.mrb[0].mxu0
        %993 = vmatprep.mubr.bf16.mxu0 0
        %994 = vmatmul.mubr.bf16.gmra.mrb[0].mxu0 %v935
        %v995 = vpop.f32.mrb[0].mxu0
        %v996 = vadd.f32 %v911, %v995
        %v997 = vpop.f32.mrb[0].mxu0
        %v998 = vpop.f32.mrb[0].mxu0
        %v999 = vadd.f32 %v911, %v998
        %v1000 = vpop.f32.mrb[0].mxu0
        %1001 = vdwg.mxu0
        %v1002 = vld [vmem:[%s583] sm:$0xf]
        %v1003 = vld [vmem:[%s583 + $0x4] sm:$0xf]
        %v1004 = vld [vmem:[%s583 + $0x8] sm:$0xf]
        %v1005 = vld [vmem:[%s583 + $0xc] sm:$0xf]
        %v1006 = vpack.c.bf16 %v972, %v972
        %v1007 = vpack.c.bf16 %v975, %v975
        %v1008 = vpack.c.bf16 %v980, %v980
        %v1009 = vpack.c.bf16 %v983, %v983
        %v1010 = vpack.c.bf16 %v988, %v988
        %v1011 = vpack.c.bf16 %v991, %v991
        %v1012 = vpack.c.bf16 %v996, %v996
        %v1013 = vpack.c.bf16 %v999, %v999
        %1015 = vrot.lane.b32.xlu0 %v1006, 96
        %v1016 = vpop.permute.xlu0 %1015
        %vm1017 = vcmask 64512
        %v1019 = vsel %vm1017, %v1006, 0
        %v1022 = vsel %vm1017, %v1016, 0
        %1024 = vmatprep.subr.bf16.mxu0 0
        %1025 = vmatpush1.bf16.xpose.msra.mxu0 %v1022
        %1026 = vmatprep.subr.bf16.mxu0 0
        %1027 = vmatpush1.bf16.xpose.msra.mxu0 0
        %1028 = vmatprep.subr.bf16.mxu0 0
        %1029 = vmatpush1.bf16.xpose.msra.mxu0 0
        %1030 = vmatprep.subr.bf16.mxu0 0
        %1031 = vmatpush1.bf16.xpose.msra.mxu0 0
        %1032 = vmatprep.subr.bf16.mxu0 0
        %1033 = vmatpush1.bf16.xpose.msra.mxu0 0
        %1034 = vmatprep.subr.bf16.mxu0 0
        %1035 = vmatpush1.bf16.xpose.msra.mxu0 0
        %1036 = vmatprep.subr.bf16.mxu0 0
        %1037 = vmatpush1.bf16.xpose.msra.mxu0 0
        %1038 = vmatprep.subr.bf16.mxu0 0
        %1039 = vmatpush1.bf16.xpose.msra.mxu0 0
        %1040 = vmatprep.subr.bf16.mxu0 0
        %1041 = vmatpush1.bf16.xpose.msra.mxu0 0
        %1042 = vmatprep.subr.bf16.mxu0 0
        %1043 = vmatpush1.bf16.xpose.msra.mxu0 0
        %1044 = vmatprep.subr.bf16.mxu0 0
        %1045 = vmatpush1.bf16.xpose.msra.mxu0 0
        %1046 = vmatprep.subr.bf16.mxu0 0
        %1047 = vmatpush1.bf16.xpose.msra.mxu0 0
        %1048 = vmatprep.subr.bf16.mxu0 0
        %1049 = vmatpush1.bf16.xpose.msra.mxu0 0
        %1050 = vmatprep.subr.bf16.mxu0 0
        %1051 = vmatpush1.bf16.xpose.msra.mxu0 0
        %1052 = vmatprep.subr.bf16.mxu0 0
        %1053 = vmatpush1.bf16.xpose.msra.mxu0 0
        %1054 = vmatprep.subr.bf16.mxu0 0
        %1055 = vmatpush1.bf16.xpose.msra.mxu0 0
        %1056 = vmatprep.mubr.bf16.mxu0 0
        %1057 = vmatmul.mubr.bf16.gmra.mrb[0].mxu0 %v1019
        %v1058 = vpop.f32.mrb[0].mxu0
        %v1059 = vadd.f32 0.0, %v1058
        %v1060 = vpop.f32.mrb[0].mxu0
        %v1061 = vpop.f32.mrb[0].mxu0
        %v1062 = vpop.f32.mrb[0].mxu0
        %1063 = vdwg.mxu0
        %1065 = vrot.lane.b32.xlu0 %v1007, 96
        %v1066 = vpop.permute.xlu0 %1065
        %v1068 = vsel %vm1017, %v1007, 0
        %v1071 = vsel %vm1017, %v1066, 0
        %1073 = vmatprep.subr.bf16.mxu0 0
        %1074 = vmatpush1.bf16.xpose.msra.mxu0 %v1071
        %1075 = vmatprep.subr.bf16.mxu0 0
        %1076 = vmatpush1.bf16.xpose.msra.mxu0 0
        %1077 = vmatprep.subr.bf16.mxu0 0
        %1078 = vmatpush1.bf16.xpose.msra.mxu0 0
        %1079 = vmatprep.subr.bf16.mxu0 0
        %1080 = vmatpush1.bf16.xpose.msra.mxu0 0
        %1081 = vmatprep.subr.bf16.mxu0 0
        %1082 = vmatpush1.bf16.xpose.msra.mxu0 0
        %1083 = vmatprep.subr.bf16.mxu0 0
        %1084 = vmatpush1.bf16.xpose.msra.mxu0 0
        %1085 = vmatprep.subr.bf16.mxu0 0
        %1086 = vmatpush1.bf16.xpose.msra.mxu0 0
        %1087 = vmatprep.subr.bf16.mxu0 0
        %1088 = vmatpush1.bf16.xpose.msra.mxu0 0
        %1089 = vmatprep.subr.bf16.mxu0 0
        %1090 = vmatpush1.bf16.xpose.msra.mxu0 0
        %1091 = vmatprep.subr.bf16.mxu0 0
        %1092 = vmatpush1.bf16.xpose.msra.mxu0 0
        %1093 = vmatprep.subr.bf16.mxu0 0
        %1094 = vmatpush1.bf16.xpose.msra.mxu0 0
        %1095 = vmatprep.subr.bf16.mxu0 0
        %1096 = vmatpush1.bf16.xpose.msra.mxu0 0
        %1097 = vmatprep.subr.bf16.mxu0 0
        %1098 = vmatpush1.bf16.xpose.msra.mxu0 0
        %1099 = vmatprep.subr.bf16.mxu0 0
        %1100 = vmatpush1.bf16.xpose.msra.mxu0 0
        %1101 = vmatprep.subr.bf16.mxu0 0
        %1102 = vmatpush1.bf16.xpose.msra.mxu0 0
        %1103 = vmatprep.subr.bf16.mxu0 0
        %1104 = vmatpush1.bf16.xpose.msra.mxu0 0
        %1105 = vmatprep.mubr.bf16.mxu0 0
        %1106 = vmatmul.mubr.bf16.gmra.mrb[0].mxu0 %v1068
        %v1107 = vpop.f32.mrb[0].mxu0
        %v1108 = vadd.f32 0.0, %v1107
        %v1109 = vpop.f32.mrb[0].mxu0
        %v1110 = vpop.f32.mrb[0].mxu0
        %v1111 = vpop.f32.mrb[0].mxu0
        %1112 = vdwg.mxu0
        %1114 = vrot.lane.b32.xlu0 %v1008, 96
        %v1115 = vpop.permute.xlu0 %1114
        %v1117 = vsel %vm1017, %v1008, 0
        %v1120 = vsel %vm1017, %v1115, 0
        %1122 = vmatprep.subr.bf16.mxu0 0
        %1123 = vmatpush1.bf16.xpose.msra.mxu0 %v1120
        %1124 = vmatprep.subr.bf16.mxu0 0
        %1125 = vmatpush1.bf16.xpose.msra.mxu0 0
        %1126 = vmatprep.subr.bf16.mxu0 0
        %1127 = vmatpush1.bf16.xpose.msra.mxu0 0
        %1128 = vmatprep.subr.bf16.mxu0 0
        %1129 = vmatpush1.bf16.xpose.msra.mxu0 0
        %1130 = vmatprep.subr.bf16.mxu0 0
        %1131 = vmatpush1.bf16.xpose.msra.mxu0 0
        %1132 = vmatprep.subr.bf16.mxu0 0
        %1133 = vmatpush1.bf16.xpose.msra.mxu0 0
        %1134 = vmatprep.subr.bf16.mxu0 0
        %1135 = vmatpush1.bf16.xpose.msra.mxu0 0
        %1136 = vmatprep.subr.bf16.mxu0 0
        %1137 = vmatpush1.bf16.xpose.msra.mxu0 0
        %1138 = vmatprep.subr.bf16.mxu0 0
        %1139 = vmatpush1.bf16.xpose.msra.mxu0 0
        %1140 = vmatprep.subr.bf16.mxu0 0
        %1141 = vmatpush1.bf16.xpose.msra.mxu0 0
        %1142 = vmatprep.subr.bf16.mxu0 0
        %1143 = vmatpush1.bf16.xpose.msra.mxu0 0
        %1144 = vmatprep.subr.bf16.mxu0 0
        %1145 = vmatpush1.bf16.xpose.msra.mxu0 0
        %1146 = vmatprep.subr.bf16.mxu0 0
        %1147 = vmatpush1.bf16.xpose.msra.mxu0 0
        %1148 = vmatprep.subr.bf16.mxu0 0
        %1149 = vmatpush1.bf16.xpose.msra.mxu0 0
        %1150 = vmatprep.subr.bf16.mxu0 0
        %1151 = vmatpush1.bf16.xpose.msra.mxu0 0
        %1152 = vmatprep.subr.bf16.mxu0 0
        %1153 = vmatpush1.bf16.xpose.msra.mxu0 0
        %1154 = vmatprep.mubr.bf16.mxu0 0
        %1155 = vmatmul.mubr.bf16.gmra.mrb[0].mxu0 %v1117
        %v1156 = vpop.f32.mrb[0].mxu0
        %v1157 = vadd.f32 0.0, %v1156
        %v1158 = vpop.f32.mrb[0].mxu0
        %v1159 = vpop.f32.mrb[0].mxu0
        %v1160 = vpop.f32.mrb[0].mxu0
        %1161 = vdwg.mxu0
        %1163 = vrot.lane.b32.xlu0 %v1009, 96
        %v1164 = vpop.permute.xlu0 %1163
        %v1166 = vsel %vm1017, %v1009, 0
        %v1169 = vsel %vm1017, %v1164, 0
        %1171 = vmatprep.subr.bf16.mxu0 0
        %1172 = vmatpush1.bf16.xpose.msra.mxu0 %v1169
        %1173 = vmatprep.subr.bf16.mxu0 0
        %1174 = vmatpush1.bf16.xpose.msra.mxu0 0
        %1175 = vmatprep.subr.bf16.mxu0 0
        %1176 = vmatpush1.bf16.xpose.msra.mxu0 0
        %1177 = vmatprep.subr.bf16.mxu0 0
        %1178 = vmatpush1.bf16.xpose.msra.mxu0 0
        %1179 = vmatprep.subr.bf16.mxu0 0
        %1180 = vmatpush1.bf16.xpose.msra.mxu0 0
        %1181 = vmatprep.subr.bf16.mxu0 0
        %1182 = vmatpush1.bf16.xpose.msra.mxu0 0
        %1183 = vmatprep.subr.bf16.mxu0 0
        %1184 = vmatpush1.bf16.xpose.msra.mxu0 0
        %1185 = vmatprep.subr.bf16.mxu0 0
        %1186 = vmatpush1.bf16.xpose.msra.mxu0 0
        %1187 = vmatprep.subr.bf16.mxu0 0
        %1188 = vmatpush1.bf16.xpose.msra.mxu0 0
        %1189 = vmatprep.subr.bf16.mxu0 0
        %1190 = vmatpush1.bf16.xpose.msra.mxu0 0
        %1191 = vmatprep.subr.bf16.mxu0 0
        %1192 = vmatpush1.bf16.xpose.msra.mxu0 0
        %1193 = vmatprep.subr.bf16.mxu0 0
        %1194 = vmatpush1.bf16.xpose.msra.mxu0 0
        %1195 = vmatprep.subr.bf16.mxu0 0
        %1196 = vmatpush1.bf16.xpose.msra.mxu0 0
        %1197 = vmatprep.subr.bf16.mxu0 0
        %1198 = vmatpush1.bf16.xpose.msra.mxu0 0
        %1199 = vmatprep.subr.bf16.mxu0 0
        %1200 = vmatpush1.bf16.xpose.msra.mxu0 0
        %1201 = vmatprep.subr.bf16.mxu0 0
        %1202 = vmatpush1.bf16.xpose.msra.mxu0 0
        %1203 = vmatprep.mubr.bf16.mxu0 0
        %1204 = vmatmul.mubr.bf16.gmra.mrb[0].mxu0 %v1166
        %v1205 = vpop.f32.mrb[0].mxu0
        %v1206 = vadd.f32 0.0, %v1205
        %v1207 = vpop.f32.mrb[0].mxu0
        %v1208 = vpop.f32.mrb[0].mxu0
        %v1209 = vpop.f32.mrb[0].mxu0
        %1210 = vdwg.mxu0
        %1212 = vrot.lane.b32.xlu0 %v1010, 96
        %v1213 = vpop.permute.xlu0 %1212
        %v1215 = vsel %vm1017, %v1010, 0
        %v1218 = vsel %vm1017, %v1213, 0
        %1220 = vmatprep.subr.bf16.mxu0 0
        %1221 = vmatpush1.bf16.xpose.msra.mxu0 %v1218
        %1222 = vmatprep.subr.bf16.mxu0 0
        %1223 = vmatpush1.bf16.xpose.msra.mxu0 0
        %1224 = vmatprep.subr.bf16.mxu0 0
        %1225 = vmatpush1.bf16.xpose.msra.mxu0 0
        %1226 = vmatprep.subr.bf16.mxu0 0
        %1227 = vmatpush1.bf16.xpose.msra.mxu0 0
        %1228 = vmatprep.subr.bf16.mxu0 0
        %1229 = vmatpush1.bf16.xpose.msra.mxu0 0
        %1230 = vmatprep.subr.bf16.mxu0 0
        %1231 = vmatpush1.bf16.xpose.msra.mxu0 0
        %1232 = vmatprep.subr.bf16.mxu0 0
        %1233 = vmatpush1.bf16.xpose.msra.mxu0 0
        %1234 = vmatprep.subr.bf16.mxu0 0
        %1235 = vmatpush1.bf16.xpose.msra.mxu0 0
        %1236 = vmatprep.subr.bf16.mxu0 0
        %1237 = vmatpush1.bf16.xpose.msra.mxu0 0
        %1238 = vmatprep.subr.bf16.mxu0 0
        %1239 = vmatpush1.bf16.xpose.msra.mxu0 0
        %1240 = vmatprep.subr.bf16.mxu0 0
        %1241 = vmatpush1.bf16.xpose.msra.mxu0 0
        %1242 = vmatprep.subr.bf16.mxu0 0
        %1243 = vmatpush1.bf16.xpose.msra.mxu0 0
        %1244 = vmatprep.subr.bf16.mxu0 0
        %1245 = vmatpush1.bf16.xpose.msra.mxu0 0
        %1246 = vmatprep.subr.bf16.mxu0 0
        %1247 = vmatpush1.bf16.xpose.msra.mxu0 0
        %1248 = vmatprep.subr.bf16.mxu0 0
        %1249 = vmatpush1.bf16.xpose.msra.mxu0 0
        %1250 = vmatprep.subr.bf16.mxu0 0
        %1251 = vmatpush1.bf16.xpose.msra.mxu0 0
        %1252 = vmatprep.mubr.bf16.mxu0 0
        %1253 = vmatmul.mubr.bf16.gmra.mrb[0].mxu0 %v1215
        %v1254 = vpop.f32.mrb[0].mxu0
        %v1255 = vadd.f32 0.0, %v1254
        %v1256 = vpop.f32.mrb[0].mxu0
        %v1257 = vpop.f32.mrb[0].mxu0
        %v1258 = vpop.f32.mrb[0].mxu0
        %1259 = vdwg.mxu0
        %1261 = vrot.lane.b32.xlu0 %v1011, 96
        %v1262 = vpop.permute.xlu0 %1261
        %v1264 = vsel %vm1017, %v1011, 0
        %v1267 = vsel %vm1017, %v1262, 0
        %1269 = vmatprep.subr.bf16.mxu0 0
        %1270 = vmatpush1.bf16.xpose.msra.mxu0 %v1267
        %1271 = vmatprep.subr.bf16.mxu0 0
        %1272 = vmatpush1.bf16.xpose.msra.mxu0 0
        %1273 = vmatprep.subr.bf16.mxu0 0
        %1274 = vmatpush1.bf16.xpose.msra.mxu0 0
        %1275 = vmatprep.subr.bf16.mxu0 0
        %1276 = vmatpush1.bf16.xpose.msra.mxu0 0
        %1277 = vmatprep.subr.bf16.mxu0 0
        %1278 = vmatpush1.bf16.xpose.msra.mxu0 0
        %1279 = vmatprep.subr.bf16.mxu0 0
        %1280 = vmatpush1.bf16.xpose.msra.mxu0 0
        %1281 = vmatprep.subr.bf16.mxu0 0
        %1282 = vmatpush1.bf16.xpose.msra.mxu0 0
        %1283 = vmatprep.subr.bf16.mxu0 0
        %1284 = vmatpush1.bf16.xpose.msra.mxu0 0
        %1285 = vmatprep.subr.bf16.mxu0 0
        %1286 = vmatpush1.bf16.xpose.msra.mxu0 0
        %1287 = vmatprep.subr.bf16.mxu0 0
        %1288 = vmatpush1.bf16.xpose.msra.mxu0 0
        %1289 = vmatprep.subr.bf16.mxu0 0
        %1290 = vmatpush1.bf16.xpose.msra.mxu0 0
        %1291 = vmatprep.subr.bf16.mxu0 0
        %1292 = vmatpush1.bf16.xpose.msra.mxu0 0
        %1293 = vmatprep.subr.bf16.mxu0 0
        %1294 = vmatpush1.bf16.xpose.msra.mxu0 0
        %1295 = vmatprep.subr.bf16.mxu0 0
        %1296 = vmatpush1.bf16.xpose.msra.mxu0 0
        %1297 = vmatprep.subr.bf16.mxu0 0
        %1298 = vmatpush1.bf16.xpose.msra.mxu0 0
        %1299 = vmatprep.subr.bf16.mxu0 0
        %1300 = vmatpush1.bf16.xpose.msra.mxu0 0
        %1301 = vmatprep.mubr.bf16.mxu0 0
        %1302 = vmatmul.mubr.bf16.gmra.mrb[0].mxu0 %v1264
        %v1303 = vpop.f32.mrb[0].mxu0
        %v1304 = vadd.f32 0.0, %v1303
        %v1305 = vpop.f32.mrb[0].mxu0
        %v1306 = vpop.f32.mrb[0].mxu0
        %v1307 = vpop.f32.mrb[0].mxu0
        %1308 = vdwg.mxu0
        %1310 = vrot.lane.b32.xlu0 %v1012, 96
        %v1311 = vpop.permute.xlu0 %1310
        %v1313 = vsel %vm1017, %v1012, 0
        %v1316 = vsel %vm1017, %v1311, 0
        %1318 = vmatprep.subr.bf16.mxu0 0
        %1319 = vmatpush1.bf16.xpose.msra.mxu0 %v1316
        %1320 = vmatprep.subr.bf16.mxu0 0
        %1321 = vmatpush1.bf16.xpose.msra.mxu0 0
        %1322 = vmatprep.subr.bf16.mxu0 0
        %1323 = vmatpush1.bf16.xpose.msra.mxu0 0
        %1324 = vmatprep.subr.bf16.mxu0 0
        %1325 = vmatpush1.bf16.xpose.msra.mxu0 0
        %1326 = vmatprep.subr.bf16.mxu0 0
        %1327 = vmatpush1.bf16.xpose.msra.mxu0 0
        %1328 = vmatprep.subr.bf16.mxu0 0
        %1329 = vmatpush1.bf16.xpose.msra.mxu0 0
        %1330 = vmatprep.subr.bf16.mxu0 0
        %1331 = vmatpush1.bf16.xpose.msra.mxu0 0
        %1332 = vmatprep.subr.bf16.mxu0 0
        %1333 = vmatpush1.bf16.xpose.msra.mxu0 0
        %1334 = vmatprep.subr.bf16.mxu0 0
        %1335 = vmatpush1.bf16.xpose.msra.mxu0 0
        %1336 = vmatprep.subr.bf16.mxu0 0
        %1337 = vmatpush1.bf16.xpose.msra.mxu0 0
        %1338 = vmatprep.subr.bf16.mxu0 0
        %1339 = vmatpush1.bf16.xpose.msra.mxu0 0
        %1340 = vmatprep.subr.bf16.mxu0 0
        %1341 = vmatpush1.bf16.xpose.msra.mxu0 0
        %1342 = vmatprep.subr.bf16.mxu0 0
        %1343 = vmatpush1.bf16.xpose.msra.mxu0 0
        %1344 = vmatprep.subr.bf16.mxu0 0
        %1345 = vmatpush1.bf16.xpose.msra.mxu0 0
        %1346 = vmatprep.subr.bf16.mxu0 0
        %1347 = vmatpush1.bf16.xpose.msra.mxu0 0
        %1348 = vmatprep.subr.bf16.mxu0 0
        %1349 = vmatpush1.bf16.xpose.msra.mxu0 0
        %1350 = vmatprep.mubr.bf16.mxu0 0
        %1351 = vmatmul.mubr.bf16.gmra.mrb[0].mxu0 %v1313
        %v1352 = vpop.f32.mrb[0].mxu0
        %v1353 = vadd.f32 0.0, %v1352
        %v1354 = vpop.f32.mrb[0].mxu0
        %v1355 = vpop.f32.mrb[0].mxu0
        %v1356 = vpop.f32.mrb[0].mxu0
        %1357 = vdwg.mxu0
        %1359 = vrot.lane.b32.xlu0 %v1013, 96
        %v1360 = vpop.permute.xlu0 %1359
        %v1362 = vsel %vm1017, %v1013, 0
        %v1365 = vsel %vm1017, %v1360, 0
        %1367 = vmatprep.subr.bf16.mxu0 0
        %1368 = vmatpush1.bf16.xpose.msra.mxu0 %v1365
        %1369 = vmatprep.subr.bf16.mxu0 0
        %1370 = vmatpush1.bf16.xpose.msra.mxu0 0
        %1371 = vmatprep.subr.bf16.mxu0 0
        %1372 = vmatpush1.bf16.xpose.msra.mxu0 0
        %1373 = vmatprep.subr.bf16.mxu0 0
        %1374 = vmatpush1.bf16.xpose.msra.mxu0 0
        %1375 = vmatprep.subr.bf16.mxu0 0
        %1376 = vmatpush1.bf16.xpose.msra.mxu0 0
        %1377 = vmatprep.subr.bf16.mxu0 0
        %1378 = vmatpush1.bf16.xpose.msra.mxu0 0
        %1379 = vmatprep.subr.bf16.mxu0 0
        %1380 = vmatpush1.bf16.xpose.msra.mxu0 0
        %1381 = vmatprep.subr.bf16.mxu0 0
        %1382 = vmatpush1.bf16.xpose.msra.mxu0 0
        %1383 = vmatprep.subr.bf16.mxu0 0
        %1384 = vmatpush1.bf16.xpose.msra.mxu0 0
        %1385 = vmatprep.subr.bf16.mxu0 0
        %1386 = vmatpush1.bf16.xpose.msra.mxu0 0
        %1387 = vmatprep.subr.bf16.mxu0 0
        %1388 = vmatpush1.bf16.xpose.msra.mxu0 0
        %1389 = vmatprep.subr.bf16.mxu0 0
        %1390 = vmatpush1.bf16.xpose.msra.mxu0 0
        %1391 = vmatprep.subr.bf16.mxu0 0
        %1392 = vmatpush1.bf16.xpose.msra.mxu0 0
        %1393 = vmatprep.subr.bf16.mxu0 0
        %1394 = vmatpush1.bf16.xpose.msra.mxu0 0
        %1395 = vmatprep.subr.bf16.mxu0 0
        %1396 = vmatpush1.bf16.xpose.msra.mxu0 0
        %1397 = vmatprep.subr.bf16.mxu0 0
        %1398 = vmatpush1.bf16.xpose.msra.mxu0 0
        %1399 = vmatprep.mubr.bf16.mxu0 0
        %1400 = vmatmul.mubr.bf16.gmra.mrb[0].mxu0 %v1362
        %v1401 = vpop.f32.mrb[0].mxu0
        %v1402 = vadd.f32 0.0, %v1401
        %v1403 = vpop.f32.mrb[0].mxu0
        %v1404 = vpop.f32.mrb[0].mxu0
        %v1405 = vpop.f32.mrb[0].mxu0
        %1406 = vdwg.mxu0
        %v1407 = vmul.f32 %v1059, 0.35355338
        %v1408 = vmul.f32 %v1108, 0.35355338
        %v1409 = vmul.f32 %v1157, 0.35355338
        %v1410 = vmul.f32 %v1206, 0.35355338
        %v1411 = vmul.f32 %v1255, 0.35355338
        %v1412 = vmul.f32 %v1304, 0.35355338
        %v1413 = vmul.f32 %v1353, 0.35355338
        %v1414 = vmul.f32 %v1402, 0.35355338
        %v1415 = vsel %vm1017, %v1407, -inf
        %1416 = vmax.xlane.f32.xlu0 %v1415
        %v1417 = vpop.xlane.xlu0 %1416
        %v1418 = vsel %vm1017, %v1408, -inf
        %1419 = vmax.xlane.f32.xlu0 %v1418
        %v1420 = vpop.xlane.xlu0 %1419
        %v1421 = vsel %vm1017, %v1409, -inf
        %1422 = vmax.xlane.f32.xlu0 %v1421
        %v1423 = vpop.xlane.xlu0 %1422
        %v1424 = vsel %vm1017, %v1410, -inf
        %1425 = vmax.xlane.f32.xlu0 %v1424
        %v1426 = vpop.xlane.xlu0 %1425
        %v1427 = vsel %vm1017, %v1411, -inf
        %1428 = vmax.xlane.f32.xlu0 %v1427
        %v1429 = vpop.xlane.xlu0 %1428
        %v1430 = vsel %vm1017, %v1412, -inf
        %1431 = vmax.xlane.f32.xlu0 %v1430
        %v1432 = vpop.xlane.xlu0 %1431
        %v1433 = vsel %vm1017, %v1413, -inf
        %1434 = vmax.xlane.f32.xlu0 %v1433
        %v1435 = vpop.xlane.xlu0 %1434
        %v1436 = vsel %vm1017, %v1414, -inf
        %1437 = vmax.xlane.f32.xlu0 %v1436
        %v1438 = vpop.xlane.xlu0 %1437
        %v1439 = vsub.f32 %v1407, %v1417
        %v1440 = vsub.f32 %v1408, %v1420
        %v1441 = vsub.f32 %v1409, %v1423
        %v1442 = vsub.f32 %v1410, %v1426
        %v1443 = vsub.f32 %v1411, %v1429
        %v1444 = vsub.f32 %v1412, %v1432
        %v1445 = vsub.f32 %v1413, %v1435
        %v1446 = vsub.f32 %v1414, %v1438
        %v1447 = vmul.f32 %v1439, 1.442695
        %v1448 = vpow.pop %v1447
        %v1449 = vmul.f32 %v1440, 1.442695
        %v1450 = vpow.pop %v1449
        %v1451 = vmul.f32 %v1441, 1.442695
        %v1452 = vpow.pop %v1451
        %v1453 = vmul.f32 %v1442, 1.442695
        %v1454 = vpow.pop %v1453
        %v1455 = vmul.f32 %v1443, 1.442695
        %v1456 = vpow.pop %v1455
        %v1457 = vmul.f32 %v1444, 1.442695
        %v1458 = vpow.pop %v1457
        %v1459 = vmul.f32 %v1445, 1.442695
        %v1460 = vpow.pop %v1459
        %v1461 = vmul.f32 %v1446, 1.442695
        %v1462 = vpow.pop %v1461
        %v1463 = vsel %vm1017, %v1448, 0.0
        %1464 = vadd.xlane.f32.xlu0 %v1463
        %v1465 = vpop.xlane.xlu0 %1464
        %v1466 = vsel %vm1017, %v1450, 0.0
        %1467 = vadd.xlane.f32.xlu0 %v1466
        %v1468 = vpop.xlane.xlu0 %1467
        %v1469 = vsel %vm1017, %v1452, 0.0
        %1470 = vadd.xlane.f32.xlu0 %v1469
        %v1471 = vpop.xlane.xlu0 %1470
        %v1472 = vsel %vm1017, %v1454, 0.0
        %1473 = vadd.xlane.f32.xlu0 %v1472
        %v1474 = vpop.xlane.xlu0 %1473
        %v1475 = vsel %vm1017, %v1456, 0.0
        %1476 = vadd.xlane.f32.xlu0 %v1475
        %v1477 = vpop.xlane.xlu0 %1476
        %v1478 = vsel %vm1017, %v1458, 0.0
        %1479 = vadd.xlane.f32.xlu0 %v1478
        %v1480 = vpop.xlane.xlu0 %1479
        %v1481 = vsel %vm1017, %v1460, 0.0
        %1482 = vadd.xlane.f32.xlu0 %v1481
        %v1483 = vpop.xlane.xlu0 %1482
        %v1484 = vsel %vm1017, %v1462, 0.0
        %1485 = vadd.xlane.f32.xlu0 %v1484
        %v1486 = vpop.xlane.xlu0 %1485
        %v1487 = vrcp.pop %v1465
        %v1488 = vrcp.pop %v1468
        %v1489 = vrcp.pop %v1471
        %v1490 = vrcp.pop %v1474
        %v1491 = vrcp.pop %v1477
        %v1492 = vrcp.pop %v1480
        %v1493 = vrcp.pop %v1483
        %v1494 = vrcp.pop %v1486
        %v1495 = vmul.f32 %v1448, %v1487
        %v1496 = vmul.f32 %v1450, %v1488
        %v1497 = vmul.f32 %v1452, %v1489
        %v1498 = vmul.f32 %v1454, %v1490
        %v1499 = vmul.f32 %v1456, %v1491
        %v1500 = vmul.f32 %v1458, %v1492
        %v1501 = vmul.f32 %v1460, %v1493
        %v1502 = vmul.f32 %v1462, %v1494
        %v1503 = vpack.c.bf16 %v1495, %v1495
        %v1504 = vpack.c.bf16 %v1496, %v1496
        %v1505 = vpack.c.bf16 %v1497, %v1497
        %v1506 = vpack.c.bf16 %v1498, %v1498
        %v1507 = vpack.c.bf16 %v1499, %v1499
        %v1508 = vpack.c.bf16 %v1500, %v1500
        %v1509 = vpack.c.bf16 %v1501, %v1501
        %v1510 = vpack.c.bf16 %v1502, %v1502
        %1511 = vrot.lane.b32.xlu0 %v1006, 64
        %v1512 = vpop.permute.xlu0 %1511
        %v1514 = vsel %vm1017, %v1503, 0
        %vm1516 = vcmask 1043456
        %v1518 = vsel %vm1516, %v1512, 0
        %1520 = vmatprep.subr.bf16.mxu0 0
        %1521 = vmatpush1.bf16.msra.mxu0 %v1518
        %1522 = vmatprep.subr.bf16.mxu0 0
        %1523 = vmatpush1.bf16.msra.mxu0 0
        %1524 = vmatprep.subr.bf16.mxu0 0
        %1525 = vmatpush1.bf16.msra.mxu0 0
        %1526 = vmatprep.subr.bf16.mxu0 0
        %1527 = vmatpush1.bf16.msra.mxu0 0
        %1528 = vmatprep.subr.bf16.mxu0 0
        %1529 = vmatpush1.bf16.msra.mxu0 0
        %1530 = vmatprep.subr.bf16.mxu0 0
        %1531 = vmatpush1.bf16.msra.mxu0 0
        %1532 = vmatprep.subr.bf16.mxu0 0
        %1533 = vmatpush1.bf16.msra.mxu0 0
        %1534 = vmatprep.subr.bf16.mxu0 0
        %1535 = vmatpush1.bf16.msra.mxu0 0
        %1536 = vmatprep.subr.bf16.mxu0 0
        %1537 = vmatpush1.bf16.msra.mxu0 0
        %1538 = vmatprep.subr.bf16.mxu0 0
        %1539 = vmatpush1.bf16.msra.mxu0 0
        %1540 = vmatprep.subr.bf16.mxu0 0
        %1541 = vmatpush1.bf16.msra.mxu0 0
        %1542 = vmatprep.subr.bf16.mxu0 0
        %1543 = vmatpush1.bf16.msra.mxu0 0
        %1544 = vmatprep.subr.bf16.mxu0 0
        %1545 = vmatpush1.bf16.msra.mxu0 0
        %1546 = vmatprep.subr.bf16.mxu0 0
        %1547 = vmatpush1.bf16.msra.mxu0 0
        %1548 = vmatprep.subr.bf16.mxu0 0
        %1549 = vmatpush1.bf16.msra.mxu0 0
        %1550 = vmatprep.subr.bf16.mxu0 0
        %1551 = vmatpush1.bf16.msra.mxu0 0
        %1552 = vmatprep.mubr.bf16.mxu0 0
        %1553 = vmatmul.mubr.bf16.gmra.mrb[0].mxu0 %v1514
        %v1554 = vpop.f32.mrb[0].mxu0
        %v1555 = vadd.f32 0.0, %v1554
        %v1556 = vpop.f32.mrb[0].mxu0
        %v1557 = vpop.f32.mrb[0].mxu0
        %v1558 = vpop.f32.mrb[0].mxu0
        %1559 = vdwg.mxu0
        %1560 = vrot.lane.b32.xlu0 %v1007, 64
        %v1561 = vpop.permute.xlu0 %1560
        %v1563 = vsel %vm1017, %v1504, 0
        %v1566 = vsel %vm1516, %v1561, 0
        %1568 = vmatprep.subr.bf16.mxu0 0
        %1569 = vmatpush1.bf16.msra.mxu0 %v1566
        %1570 = vmatprep.subr.bf16.mxu0 0
        %1571 = vmatpush1.bf16.msra.mxu0 0
        %1572 = vmatprep.subr.bf16.mxu0 0
        %1573 = vmatpush1.bf16.msra.mxu0 0
        %1574 = vmatprep.subr.bf16.mxu0 0
        %1575 = vmatpush1.bf16.msra.mxu0 0
        %1576 = vmatprep.subr.bf16.mxu0 0
        %1577 = vmatpush1.bf16.msra.mxu0 0
        %1578 = vmatprep.subr.bf16.mxu0 0
        %1579 = vmatpush1.bf16.msra.mxu0 0
        %1580 = vmatprep.subr.bf16.mxu0 0
        %1581 = vmatpush1.bf16.msra.mxu0 0
        %1582 = vmatprep.subr.bf16.mxu0 0
        %1583 = vmatpush1.bf16.msra.mxu0 0
        %1584 = vmatprep.subr.bf16.mxu0 0
        %1585 = vmatpush1.bf16.msra.mxu0 0
        %1586 = vmatprep.subr.bf16.mxu0 0
        %1587 = vmatpush1.bf16.msra.mxu0 0
        %1588 = vmatprep.subr.bf16.mxu0 0
        %1589 = vmatpush1.bf16.msra.mxu0 0
        %1590 = vmatprep.subr.bf16.mxu0 0
        %1591 = vmatpush1.bf16.msra.mxu0 0
        %1592 = vmatprep.subr.bf16.mxu0 0
        %1593 = vmatpush1.bf16.msra.mxu0 0
        %1594 = vmatprep.subr.bf16.mxu0 0
        %1595 = vmatpush1.bf16.msra.mxu0 0
        %1596 = vmatprep.subr.bf16.mxu0 0
        %1597 = vmatpush1.bf16.msra.mxu0 0
        %1598 = vmatprep.subr.bf16.mxu0 0
        %1599 = vmatpush1.bf16.msra.mxu0 0
        %1600 = vmatprep.mubr.bf16.mxu0 0
        %1601 = vmatmul.mubr.bf16.gmra.mrb[0].mxu0 %v1563
        %v1602 = vpop.f32.mrb[0].mxu0
        %v1603 = vadd.f32 0.0, %v1602
        %v1604 = vpop.f32.mrb[0].mxu0
        %v1605 = vpop.f32.mrb[0].mxu0
        %v1606 = vpop.f32.mrb[0].mxu0
        %1607 = vdwg.mxu0
        %1608 = vrot.lane.b32.xlu0 %v1008, 64
        %v1609 = vpop.permute.xlu0 %1608
        %v1611 = vsel %vm1017, %v1505, 0
        %v1614 = vsel %vm1516, %v1609, 0
        %1616 = vmatprep.subr.bf16.mxu0 0
        %1617 = vmatpush1.bf16.msra.mxu0 %v1614
        %1618 = vmatprep.subr.bf16.mxu0 0
        %1619 = vmatpush1.bf16.msra.mxu0 0
        %1620 = vmatprep.subr.bf16.mxu0 0
        %1621 = vmatpush1.bf16.msra.mxu0 0
        %1622 = vmatprep.subr.bf16.mxu0 0
        %1623 = vmatpush1.bf16.msra.mxu0 0
        %1624 = vmatprep.subr.bf16.mxu0 0
        %1625 = vmatpush1.bf16.msra.mxu0 0
        %1626 = vmatprep.subr.bf16.mxu0 0
        %1627 = vmatpush1.bf16.msra.mxu0 0
        %1628 = vmatprep.subr.bf16.mxu0 0
        %1629 = vmatpush1.bf16.msra.mxu0 0
        %1630 = vmatprep.subr.bf16.mxu0 0
        %1631 = vmatpush1.bf16.msra.mxu0 0
        %1632 = vmatprep.subr.bf16.mxu0 0
        %1633 = vmatpush1.bf16.msra.mxu0 0
        %1634 = vmatprep.subr.bf16.mxu0 0
        %1635 = vmatpush1.bf16.msra.mxu0 0
        %1636 = vmatprep.subr.bf16.mxu0 0
        %1637 = vmatpush1.bf16.msra.mxu0 0
        %1638 = vmatprep.subr.bf16.mxu0 0
        %1639 = vmatpush1.bf16.msra.mxu0 0
        %1640 = vmatprep.subr.bf16.mxu0 0
        %1641 = vmatpush1.bf16.msra.mxu0 0
        %1642 = vmatprep.subr.bf16.mxu0 0
        %1643 = vmatpush1.bf16.msra.mxu0 0
        %1644 = vmatprep.subr.bf16.mxu0 0
        %1645 = vmatpush1.bf16.msra.mxu0 0
        %1646 = vmatprep.subr.bf16.mxu0 0
        %1647 = vmatpush1.bf16.msra.mxu0 0
        %1648 = vmatprep.mubr.bf16.mxu0 0
        %1649 = vmatmul.mubr.bf16.gmra.mrb[0].mxu0 %v1611
        %v1650 = vpop.f32.mrb[0].mxu0
        %v1651 = vadd.f32 0.0, %v1650
        %v1652 = vpop.f32.mrb[0].mxu0
        %v1653 = vpop.f32.mrb[0].mxu0
        %v1654 = vpop.f32.mrb[0].mxu0
        %1655 = vdwg.mxu0
        %1656 = vrot.lane.b32.xlu0 %v1009, 64
        %v1657 = vpop.permute.xlu0 %1656
        %v1659 = vsel %vm1017, %v1506, 0
        %v1662 = vsel %vm1516, %v1657, 0
        %1664 = vmatprep.subr.bf16.mxu0 0
        %1665 = vmatpush1.bf16.msra.mxu0 %v1662
        %1666 = vmatprep.subr.bf16.mxu0 0
        %1667 = vmatpush1.bf16.msra.mxu0 0
        %1668 = vmatprep.subr.bf16.mxu0 0
        %1669 = vmatpush1.bf16.msra.mxu0 0
        %1670 = vmatprep.subr.bf16.mxu0 0
        %1671 = vmatpush1.bf16.msra.mxu0 0
        %1672 = vmatprep.subr.bf16.mxu0 0
        %1673 = vmatpush1.bf16.msra.mxu0 0
        %1674 = vmatprep.subr.bf16.mxu0 0
        %1675 = vmatpush1.bf16.msra.mxu0 0
        %1676 = vmatprep.subr.bf16.mxu0 0
        %1677 = vmatpush1.bf16.msra.mxu0 0
        %1678 = vmatprep.subr.bf16.mxu0 0
        %1679 = vmatpush1.bf16.msra.mxu0 0
        %1680 = vmatprep.subr.bf16.mxu0 0
        %1681 = vmatpush1.bf16.msra.mxu0 0
        %1682 = vmatprep.subr.bf16.mxu0 0
        %1683 = vmatpush1.bf16.msra.mxu0 0
        %1684 = vmatprep.subr.bf16.mxu0 0
        %1685 = vmatpush1.bf16.msra.mxu0 0
        %1686 = vmatprep.subr.bf16.mxu0 0
        %1687 = vmatpush1.bf16.msra.mxu0 0
        %1688 = vmatprep.subr.bf16.mxu0 0
        %1689 = vmatpush1.bf16.msra.mxu0 0
        %1690 = vmatprep.subr.bf16.mxu0 0
        %1691 = vmatpush1.bf16.msra.mxu0 0
        %1692 = vmatprep.subr.bf16.mxu0 0
        %1693 = vmatpush1.bf16.msra.mxu0 0
        %1694 = vmatprep.subr.bf16.mxu0 0
        %1695 = vmatpush1.bf16.msra.mxu0 0
        %1696 = vmatprep.mubr.bf16.mxu0 0
        %1697 = vmatmul.mubr.bf16.gmra.mrb[0].mxu0 %v1659
        %v1698 = vpop.f32.mrb[0].mxu0
        %v1699 = vadd.f32 0.0, %v1698
        %v1700 = vpop.f32.mrb[0].mxu0
        %v1701 = vpop.f32.mrb[0].mxu0
        %v1702 = vpop.f32.mrb[0].mxu0
        %1703 = vdwg.mxu0
        %1704 = vrot.lane.b32.xlu0 %v1010, 64
        %v1705 = vpop.permute.xlu0 %1704
        %v1707 = vsel %vm1017, %v1507, 0
        %v1710 = vsel %vm1516, %v1705, 0
        %1712 = vmatprep.subr.bf16.mxu0 0
        %1713 = vmatpush1.bf16.msra.mxu0 %v1710
        %1714 = vmatprep.subr.bf16.mxu0 0
        %1715 = vmatpush1.bf16.msra.mxu0 0
        %1716 = vmatprep.subr.bf16.mxu0 0
        %1717 = vmatpush1.bf16.msra.mxu0 0
        %1718 = vmatprep.subr.bf16.mxu0 0
        %1719 = vmatpush1.bf16.msra.mxu0 0
        %1720 = vmatprep.subr.bf16.mxu0 0
        %1721 = vmatpush1.bf16.msra.mxu0 0
        %1722 = vmatprep.subr.bf16.mxu0 0
        %1723 = vmatpush1.bf16.msra.mxu0 0
        %1724 = vmatprep.subr.bf16.mxu0 0
        %1725 = vmatpush1.bf16.msra.mxu0 0
        %1726 = vmatprep.subr.bf16.mxu0 0
        %1727 = vmatpush1.bf16.msra.mxu0 0
        %1728 = vmatprep.subr.bf16.mxu0 0
        %1729 = vmatpush1.bf16.msra.mxu0 0
        %1730 = vmatprep.subr.bf16.mxu0 0
        %1731 = vmatpush1.bf16.msra.mxu0 0
        %1732 = vmatprep.subr.bf16.mxu0 0
        %1733 = vmatpush1.bf16.msra.mxu0 0
        %1734 = vmatprep.subr.bf16.mxu0 0
        %1735 = vmatpush1.bf16.msra.mxu0 0
        %1736 = vmatprep.subr.bf16.mxu0 0
        %1737 = vmatpush1.bf16.msra.mxu0 0
        %1738 = vmatprep.subr.bf16.mxu0 0
        %1739 = vmatpush1.bf16.msra.mxu0 0
        %1740 = vmatprep.subr.bf16.mxu0 0
        %1741 = vmatpush1.bf16.msra.mxu0 0
        %1742 = vmatprep.subr.bf16.mxu0 0
        %1743 = vmatpush1.bf16.msra.mxu0 0
        %1744 = vmatprep.mubr.bf16.mxu0 0
        %1745 = vmatmul.mubr.bf16.gmra.mrb[0].mxu0 %v1707
        %v1746 = vpop.f32.mrb[0].mxu0
        %v1747 = vadd.f32 0.0, %v1746
        %v1748 = vpop.f32.mrb[0].mxu0
        %v1749 = vpop.f32.mrb[0].mxu0
        %v1750 = vpop.f32.mrb[0].mxu0
        %1751 = vdwg.mxu0
        %1752 = vrot.lane.b32.xlu0 %v1011, 64
        %v1753 = vpop.permute.xlu0 %1752
        %v1755 = vsel %vm1017, %v1508, 0
        %v1758 = vsel %vm1516, %v1753, 0
        %1760 = vmatprep.subr.bf16.mxu0 0
        %1761 = vmatpush1.bf16.msra.mxu0 %v1758
        %1762 = vmatprep.subr.bf16.mxu0 0
        %1763 = vmatpush1.bf16.msra.mxu0 0
        %1764 = vmatprep.subr.bf16.mxu0 0
        %1765 = vmatpush1.bf16.msra.mxu0 0
        %1766 = vmatprep.subr.bf16.mxu0 0
        %1767 = vmatpush1.bf16.msra.mxu0 0
        %1768 = vmatprep.subr.bf16.mxu0 0
        %1769 = vmatpush1.bf16.msra.mxu0 0
        %1770 = vmatprep.subr.bf16.mxu0 0
        %1771 = vmatpush1.bf16.msra.mxu0 0
        %1772 = vmatprep.subr.bf16.mxu0 0
        %1773 = vmatpush1.bf16.msra.mxu0 0
        %1774 = vmatprep.subr.bf16.mxu0 0
        %1775 = vmatpush1.bf16.msra.mxu0 0
        %1776 = vmatprep.subr.bf16.mxu0 0
        %1777 = vmatpush1.bf16.msra.mxu0 0
        %1778 = vmatprep.subr.bf16.mxu0 0
        %1779 = vmatpush1.bf16.msra.mxu0 0
        %1780 = vmatprep.subr.bf16.mxu0 0
        %1781 = vmatpush1.bf16.msra.mxu0 0
        %1782 = vmatprep.subr.bf16.mxu0 0
        %1783 = vmatpush1.bf16.msra.mxu0 0
        %1784 = vmatprep.subr.bf16.mxu0 0
        %1785 = vmatpush1.bf16.msra.mxu0 0
        %1786 = vmatprep.subr.bf16.mxu0 0
        %1787 = vmatpush1.bf16.msra.mxu0 0
        %1788 = vmatprep.subr.bf16.mxu0 0
        %1789 = vmatpush1.bf16.msra.mxu0 0
        %1790 = vmatprep.subr.bf16.mxu0 0
        %1791 = vmatpush1.bf16.msra.mxu0 0
        %1792 = vmatprep.mubr.bf16.mxu0 0
        %1793 = vmatmul.mubr.bf16.gmra.mrb[0].mxu0 %v1755
        %v1794 = vpop.f32.mrb[0].mxu0
        %v1795 = vadd.f32 0.0, %v1794
        %v1796 = vpop.f32.mrb[0].mxu0
        %v1797 = vpop.f32.mrb[0].mxu0
        %v1798 = vpop.f32.mrb[0].mxu0
        %1799 = vdwg.mxu0
        %1800 = vrot.lane.b32.xlu0 %v1012, 64
        %v1801 = vpop.permute.xlu0 %1800
        %v1803 = vsel %vm1017, %v1509, 0
        %v1806 = vsel %vm1516, %v1801, 0
        %1808 = vmatprep.subr.bf16.mxu0 0
        %1809 = vmatpush1.bf16.msra.mxu0 %v1806
        %1810 = vmatprep.subr.bf16.mxu0 0
        %1811 = vmatpush1.bf16.msra.mxu0 0
        %1812 = vmatprep.subr.bf16.mxu0 0
        %1813 = vmatpush1.bf16.msra.mxu0 0
        %1814 = vmatprep.subr.bf16.mxu0 0
        %1815 = vmatpush1.bf16.msra.mxu0 0
        %1816 = vmatprep.subr.bf16.mxu0 0
        %1817 = vmatpush1.bf16.msra.mxu0 0
        %1818 = vmatprep.subr.bf16.mxu0 0
        %1819 = vmatpush1.bf16.msra.mxu0 0
        %1820 = vmatprep.subr.bf16.mxu0 0
        %1821 = vmatpush1.bf16.msra.mxu0 0
        %1822 = vmatprep.subr.bf16.mxu0 0
        %1823 = vmatpush1.bf16.msra.mxu0 0
        %1824 = vmatprep.subr.bf16.mxu0 0
        %1825 = vmatpush1.bf16.msra.mxu0 0
        %1826 = vmatprep.subr.bf16.mxu0 0
        %1827 = vmatpush1.bf16.msra.mxu0 0
        %1828 = vmatprep.subr.bf16.mxu0 0
        %1829 = vmatpush1.bf16.msra.mxu0 0
        %1830 = vmatprep.subr.bf16.mxu0 0
        %1831 = vmatpush1.bf16.msra.mxu0 0
        %1832 = vmatprep.subr.bf16.mxu0 0
        %1833 = vmatpush1.bf16.msra.mxu0 0
        %1834 = vmatprep.subr.bf16.mxu0 0
        %1835 = vmatpush1.bf16.msra.mxu0 0
        %1836 = vmatprep.subr.bf16.mxu0 0
        %1837 = vmatpush1.bf16.msra.mxu0 0
        %1838 = vmatprep.subr.bf16.mxu0 0
        %1839 = vmatpush1.bf16.msra.mxu0 0
        %1840 = vmatprep.mubr.bf16.mxu0 0
        %1841 = vmatmul.mubr.bf16.gmra.mrb[0].mxu0 %v1803
        %v1842 = vpop.f32.mrb[0].mxu0
        %v1843 = vadd.f32 0.0, %v1842
        %v1844 = vpop.f32.mrb[0].mxu0
        %v1845 = vpop.f32.mrb[0].mxu0
        %v1846 = vpop.f32.mrb[0].mxu0
        %1847 = vdwg.mxu0
        %1848 = vrot.lane.b32.xlu0 %v1013, 64
        %v1849 = vpop.permute.xlu0 %1848
        %v1851 = vsel %vm1017, %v1510, 0
        %v1854 = vsel %vm1516, %v1849, 0
        %1856 = vmatprep.subr.bf16.mxu0 0
        %1857 = vmatpush1.bf16.msra.mxu0 %v1854
        %1858 = vmatprep.subr.bf16.mxu0 0
        %1859 = vmatpush1.bf16.msra.mxu0 0
        %1860 = vmatprep.subr.bf16.mxu0 0
        %1861 = vmatpush1.bf16.msra.mxu0 0
        %1862 = vmatprep.subr.bf16.mxu0 0
        %1863 = vmatpush1.bf16.msra.mxu0 0
        %1864 = vmatprep.subr.bf16.mxu0 0
        %1865 = vmatpush1.bf16.msra.mxu0 0
        %1866 = vmatprep.subr.bf16.mxu0 0
        %1867 = vmatpush1.bf16.msra.mxu0 0
        %1868 = vmatprep.subr.bf16.mxu0 0
        %1869 = vmatpush1.bf16.msra.mxu0 0
        %1870 = vmatprep.subr.bf16.mxu0 0
        %1871 = vmatpush1.bf16.msra.mxu0 0
        %1872 = vmatprep.subr.bf16.mxu0 0
        %1873 = vmatpush1.bf16.msra.mxu0 0
        %1874 = vmatprep.subr.bf16.mxu0 0
        %1875 = vmatpush1.bf16.msra.mxu0 0
        %1876 = vmatprep.subr.bf16.mxu0 0
        %1877 = vmatpush1.bf16.msra.mxu0 0
        %1878 = vmatprep.subr.bf16.mxu0 0
        %1879 = vmatpush1.bf16.msra.mxu0 0
        %1880 = vmatprep.subr.bf16.mxu0 0
        %1881 = vmatpush1.bf16.msra.mxu0 0
        %1882 = vmatprep.subr.bf16.mxu0 0
        %1883 = vmatpush1.bf16.msra.mxu0 0
        %1884 = vmatprep.subr.bf16.mxu0 0
        %1885 = vmatpush1.bf16.msra.mxu0 0
        %1886 = vmatprep.subr.bf16.mxu0 0
        %1887 = vmatpush1.bf16.msra.mxu0 0
        %1888 = vmatprep.mubr.bf16.mxu0 0
        %1889 = vmatmul.mubr.bf16.gmra.mrb[0].mxu0 %v1851
        %v1890 = vpop.f32.mrb[0].mxu0
        %v1891 = vadd.f32 0.0, %v1890
        %v1892 = vpop.f32.mrb[0].mxu0
        %v1893 = vpop.f32.mrb[0].mxu0
        %v1894 = vpop.f32.mrb[0].mxu0
        %1895 = vdwg.mxu0
        %v1896 = vpack.c.bf16 %v1603, %v1555
        %v1897 = vpack.c.bf16 %v1699, %v1651
        %v1898 = vpack.c.bf16 %v1795, %v1747
        %v1899 = vpack.c.bf16 %v1891, %v1843
        %1900 = vrot.lane.b32.xlu0 %v1006, 120
        %v1901 = vpop.permute.xlu0 %1900
        %1902 = vrot.lane.b32.xlu0 %v1006, 88
        %v1903 = vpop.permute.xlu0 %1902
        %v1905 = vsel %vm1017, %v1901, 0
        %v1908 = vsel %vm1017, %v1903, 0
        %1910 = vmatprep.subr.bf16.mxu0 0
        %1911 = vmatpush1.bf16.xpose.msra.mxu0 %v1908
        %1912 = vmatprep.subr.bf16.mxu0 0
        %1913 = vmatpush1.bf16.xpose.msra.mxu0 0
        %1914 = vmatprep.subr.bf16.mxu0 0
        %1915 = vmatpush1.bf16.xpose.msra.mxu0 0
        %1916 = vmatprep.subr.bf16.mxu0 0
        %1917 = vmatpush1.bf16.xpose.msra.mxu0 0
        %1918 = vmatprep.subr.bf16.mxu0 0
        %1919 = vmatpush1.bf16.xpose.msra.mxu0 0
        %1920 = vmatprep.subr.bf16.mxu0 0
        %1921 = vmatpush1.bf16.xpose.msra.mxu0 0
        %1922 = vmatprep.subr.bf16.mxu0 0
        %1923 = vmatpush1.bf16.xpose.msra.mxu0 0
        %1924 = vmatprep.subr.bf16.mxu0 0
        %1925 = vmatpush1.bf16.xpose.msra.mxu0 0
        %1926 = vmatprep.subr.bf16.mxu0 0
        %1927 = vmatpush1.bf16.xpose.msra.mxu0 0
        %1928 = vmatprep.subr.bf16.mxu0 0
        %1929 = vmatpush1.bf16.xpose.msra.mxu0 0
        %1930 = vmatprep.subr.bf16.mxu0 0
        %1931 = vmatpush1.bf16.xpose.msra.mxu0 0
        %1932 = vmatprep.subr.bf16.mxu0 0
        %1933 = vmatpush1.bf16.xpose.msra.mxu0 0
        %1934 = vmatprep.subr.bf16.mxu0 0
        %1935 = vmatpush1.bf16.xpose.msra.mxu0 0
        %1936 = vmatprep.subr.bf16.mxu0 0
        %1937 = vmatpush1.bf16.xpose.msra.mxu0 0
        %1938 = vmatprep.subr.bf16.mxu0 0
        %1939 = vmatpush1.bf16.xpose.msra.mxu0 0
        %1940 = vmatprep.subr.bf16.mxu0 0
        %1941 = vmatpush1.bf16.xpose.msra.mxu0 0
        %1942 = vmatprep.mubr.bf16.mxu0 0
        %1943 = vmatmul.mubr.bf16.gmra.mrb[0].mxu0 %v1905
        %v1944 = vpop.f32.mrb[0].mxu0
        %v1945 = vadd.f32 0.0, %v1944
        %v1946 = vpop.f32.mrb[0].mxu0
        %v1947 = vpop.f32.mrb[0].mxu0
        %v1948 = vpop.f32.mrb[0].mxu0
        %1949 = vdwg.mxu0
        %1950 = vrot.lane.b32.xlu0 %v1007, 120
        %v1951 = vpop.permute.xlu0 %1950
        %1952 = vrot.lane.b32.xlu0 %v1007, 88
        %v1953 = vpop.permute.xlu0 %1952
        %v1955 = vsel %vm1017, %v1951, 0
        %v1958 = vsel %vm1017, %v1953, 0
        %1960 = vmatprep.subr.bf16.mxu0 0
        %1961 = vmatpush1.bf16.xpose.msra.mxu0 %v1958
        %1962 = vmatprep.subr.bf16.mxu0 0
        %1963 = vmatpush1.bf16.xpose.msra.mxu0 0
        %1964 = vmatprep.subr.bf16.mxu0 0
        %1965 = vmatpush1.bf16.xpose.msra.mxu0 0
        %1966 = vmatprep.subr.bf16.mxu0 0
        %1967 = vmatpush1.bf16.xpose.msra.mxu0 0
        %1968 = vmatprep.subr.bf16.mxu0 0
        %1969 = vmatpush1.bf16.xpose.msra.mxu0 0
        %1970 = vmatprep.subr.bf16.mxu0 0
        %1971 = vmatpush1.bf16.xpose.msra.mxu0 0
        %1972 = vmatprep.subr.bf16.mxu0 0
        %1973 = vmatpush1.bf16.xpose.msra.mxu0 0
        %1974 = vmatprep.subr.bf16.mxu0 0
        %1975 = vmatpush1.bf16.xpose.msra.mxu0 0
        %1976 = vmatprep.subr.bf16.mxu0 0
        %1977 = vmatpush1.bf16.xpose.msra.mxu0 0
        %1978 = vmatprep.subr.bf16.mxu0 0
        %1979 = vmatpush1.bf16.xpose.msra.mxu0 0
        %1980 = vmatprep.subr.bf16.mxu0 0
        %1981 = vmatpush1.bf16.xpose.msra.mxu0 0
        %1982 = vmatprep.subr.bf16.mxu0 0
        %1983 = vmatpush1.bf16.xpose.msra.mxu0 0
        %1984 = vmatprep.subr.bf16.mxu0 0
        %1985 = vmatpush1.bf16.xpose.msra.mxu0 0
        %1986 = vmatprep.subr.bf16.mxu0 0
        %1987 = vmatpush1.bf16.xpose.msra.mxu0 0
        %1988 = vmatprep.subr.bf16.mxu0 0
        %1989 = vmatpush1.bf16.xpose.msra.mxu0 0
        %1990 = vmatprep.subr.bf16.mxu0 0
        %1991 = vmatpush1.bf16.xpose.msra.mxu0 0
        %1992 = vmatprep.mubr.bf16.mxu0 0
        %1993 = vmatmul.mubr.bf16.gmra.mrb[0].mxu0 %v1955
        %v1994 = vpop.f32.mrb[0].mxu0
        %v1995 = vadd.f32 0.0, %v1994
        %v1996 = vpop.f32.mrb[0].mxu0
        %v1997 = vpop.f32.mrb[0].mxu0
        %v1998 = vpop.f32.mrb[0].mxu0
        %1999 = vdwg.mxu0
        %2000 = vrot.lane.b32.xlu0 %v1008, 120
        %v2001 = vpop.permute.xlu0 %2000
        %2002 = vrot.lane.b32.xlu0 %v1008, 88
        %v2003 = vpop.permute.xlu0 %2002
        %v2005 = vsel %vm1017, %v2001, 0
        %v2008 = vsel %vm1017, %v2003, 0
        %2010 = vmatprep.subr.bf16.mxu0 0
        %2011 = vmatpush1.bf16.xpose.msra.mxu0 %v2008
        %2012 = vmatprep.subr.bf16.mxu0 0
        %2013 = vmatpush1.bf16.xpose.msra.mxu0 0
        %2014 = vmatprep.subr.bf16.mxu0 0
        %2015 = vmatpush1.bf16.xpose.msra.mxu0 0
        %2016 = vmatprep.subr.bf16.mxu0 0
        %2017 = vmatpush1.bf16.xpose.msra.mxu0 0
        %2018 = vmatprep.subr.bf16.mxu0 0
        %2019 = vmatpush1.bf16.xpose.msra.mxu0 0
        %2020 = vmatprep.subr.bf16.mxu0 0
        %2021 = vmatpush1.bf16.xpose.msra.mxu0 0
        %2022 = vmatprep.subr.bf16.mxu0 0
        %2023 = vmatpush1.bf16.xpose.msra.mxu0 0
        %2024 = vmatprep.subr.bf16.mxu0 0
        %2025 = vmatpush1.bf16.xpose.msra.mxu0 0
        %2026 = vmatprep.subr.bf16.mxu0 0
        %2027 = vmatpush1.bf16.xpose.msra.mxu0 0
        %2028 = vmatprep.subr.bf16.mxu0 0
        %2029 = vmatpush1.bf16.xpose.msra.mxu0 0
        %2030 = vmatprep.subr.bf16.mxu0 0
        %2031 = vmatpush1.bf16.xpose.msra.mxu0 0
        %2032 = vmatprep.subr.bf16.mxu0 0
        %2033 = vmatpush1.bf16.xpose.msra.mxu0 0
        %2034 = vmatprep.subr.bf16.mxu0 0
        %2035 = vmatpush1.bf16.xpose.msra.mxu0 0
        %2036 = vmatprep.subr.bf16.mxu0 0
        %2037 = vmatpush1.bf16.xpose.msra.mxu0 0
        %2038 = vmatprep.subr.bf16.mxu0 0
        %2039 = vmatpush1.bf16.xpose.msra.mxu0 0
        %2040 = vmatprep.subr.bf16.mxu0 0
        %2041 = vmatpush1.bf16.xpose.msra.mxu0 0
        %2042 = vmatprep.mubr.bf16.mxu0 0
        %2043 = vmatmul.mubr.bf16.gmra.mrb[0].mxu0 %v2005
        %v2044 = vpop.f32.mrb[0].mxu0
        %v2045 = vadd.f32 0.0, %v2044
        %v2046 = vpop.f32.mrb[0].mxu0
        %v2047 = vpop.f32.mrb[0].mxu0
        %v2048 = vpop.f32.mrb[0].mxu0
        %2049 = vdwg.mxu0
        %2050 = vrot.lane.b32.xlu0 %v1009, 120
        %v2051 = vpop.permute.xlu0 %2050
        %2052 = vrot.lane.b32.xlu0 %v1009, 88
        %v2053 = vpop.permute.xlu0 %2052
        %v2055 = vsel %vm1017, %v2051, 0
        %v2058 = vsel %vm1017, %v2053, 0
        %2060 = vmatprep.subr.bf16.mxu0 0
        %2061 = vmatpush1.bf16.xpose.msra.mxu0 %v2058
        %2062 = vmatprep.subr.bf16.mxu0 0
        %2063 = vmatpush1.bf16.xpose.msra.mxu0 0
        %2064 = vmatprep.subr.bf16.mxu0 0
        %2065 = vmatpush1.bf16.xpose.msra.mxu0 0
        %2066 = vmatprep.subr.bf16.mxu0 0
        %2067 = vmatpush1.bf16.xpose.msra.mxu0 0
        %2068 = vmatprep.subr.bf16.mxu0 0
        %2069 = vmatpush1.bf16.xpose.msra.mxu0 0
        %2070 = vmatprep.subr.bf16.mxu0 0
        %2071 = vmatpush1.bf16.xpose.msra.mxu0 0
        %2072 = vmatprep.subr.bf16.mxu0 0
        %2073 = vmatpush1.bf16.xpose.msra.mxu0 0
        %2074 = vmatprep.subr.bf16.mxu0 0
        %2075 = vmatpush1.bf16.xpose.msra.mxu0 0
        %2076 = vmatprep.subr.bf16.mxu0 0
        %2077 = vmatpush1.bf16.xpose.msra.mxu0 0
        %2078 = vmatprep.subr.bf16.mxu0 0
        %2079 = vmatpush1.bf16.xpose.msra.mxu0 0
        %2080 = vmatprep.subr.bf16.mxu0 0
        %2081 = vmatpush1.bf16.xpose.msra.mxu0 0
        %2082 = vmatprep.subr.bf16.mxu0 0
        %2083 = vmatpush1.bf16.xpose.msra.mxu0 0
        %2084 = vmatprep.subr.bf16.mxu0 0
        %2085 = vmatpush1.bf16.xpose.msra.mxu0 0
        %2086 = vmatprep.subr.bf16.mxu0 0
        %2087 = vmatpush1.bf16.xpose.msra.mxu0 0
        %2088 = vmatprep.subr.bf16.mxu0 0
        %2089 = vmatpush1.bf16.xpose.msra.mxu0 0
        %2090 = vmatprep.subr.bf16.mxu0 0
        %2091 = vmatpush1.bf16.xpose.msra.mxu0 0
        %2092 = vmatprep.mubr.bf16.mxu0 0
        %2093 = vmatmul.mubr.bf16.gmra.mrb[0].mxu0 %v2055
        %v2094 = vpop.f32.mrb[0].mxu0
        %v2095 = vadd.f32 0.0, %v2094
        %v2096 = vpop.f32.mrb[0].mxu0
        %v2097 = vpop.f32.mrb[0].mxu0
        %v2098 = vpop.f32.mrb[0].mxu0
        %2099 = vdwg.mxu0
        %2100 = vrot.lane.b32.xlu0 %v1010, 120
        %v2101 = vpop.permute.xlu0 %2100
        %2102 = vrot.lane.b32.xlu0 %v1010, 88
        %v2103 = vpop.permute.xlu0 %2102
        %v2105 = vsel %vm1017, %v2101, 0
        %v2108 = vsel %vm1017, %v2103, 0
        %2110 = vmatprep.subr.bf16.mxu0 0
        %2111 = vmatpush1.bf16.xpose.msra.mxu0 %v2108
        %2112 = vmatprep.subr.bf16.mxu0 0
        %2113 = vmatpush1.bf16.xpose.msra.mxu0 0
        %2114 = vmatprep.subr.bf16.mxu0 0
        %2115 = vmatpush1.bf16.xpose.msra.mxu0 0
        %2116 = vmatprep.subr.bf16.mxu0 0
        %2117 = vmatpush1.bf16.xpose.msra.mxu0 0
        %2118 = vmatprep.subr.bf16.mxu0 0
        %2119 = vmatpush1.bf16.xpose.msra.mxu0 0
        %2120 = vmatprep.subr.bf16.mxu0 0
        %2121 = vmatpush1.bf16.xpose.msra.mxu0 0
        %2122 = vmatprep.subr.bf16.mxu0 0
        %2123 = vmatpush1.bf16.xpose.msra.mxu0 0
        %2124 = vmatprep.subr.bf16.mxu0 0
        %2125 = vmatpush1.bf16.xpose.msra.mxu0 0
        %2126 = vmatprep.subr.bf16.mxu0 0
        %2127 = vmatpush1.bf16.xpose.msra.mxu0 0
        %2128 = vmatprep.subr.bf16.mxu0 0
        %2129 = vmatpush1.bf16.xpose.msra.mxu0 0
        %2130 = vmatprep.subr.bf16.mxu0 0
        %2131 = vmatpush1.bf16.xpose.msra.mxu0 0
        %2132 = vmatprep.subr.bf16.mxu0 0
        %2133 = vmatpush1.bf16.xpose.msra.mxu0 0
        %2134 = vmatprep.subr.bf16.mxu0 0
        %2135 = vmatpush1.bf16.xpose.msra.mxu0 0
        %2136 = vmatprep.subr.bf16.mxu0 0
        %2137 = vmatpush1.bf16.xpose.msra.mxu0 0
        %2138 = vmatprep.subr.bf16.mxu0 0
        %2139 = vmatpush1.bf16.xpose.msra.mxu0 0
        %2140 = vmatprep.subr.bf16.mxu0 0
        %2141 = vmatpush1.bf16.xpose.msra.mxu0 0
        %2142 = vmatprep.mubr.bf16.mxu0 0
        %2143 = vmatmul.mubr.bf16.gmra.mrb[0].mxu0 %v2105
        %v2144 = vpop.f32.mrb[0].mxu0
        %v2145 = vadd.f32 0.0, %v2144
        %v2146 = vpop.f32.mrb[0].mxu0
        %v2147 = vpop.f32.mrb[0].mxu0
        %v2148 = vpop.f32.mrb[0].mxu0
        %2149 = vdwg.mxu0
        %2150 = vrot.lane.b32.xlu0 %v1011, 120
        %v2151 = vpop.permute.xlu0 %2150
        %2152 = vrot.lane.b32.xlu0 %v1011, 88
        %v2153 = vpop.permute.xlu0 %2152
        %v2155 = vsel %vm1017, %v2151, 0
        %v2158 = vsel %vm1017, %v2153, 0
        %2160 = vmatprep.subr.bf16.mxu0 0
        %2161 = vmatpush1.bf16.xpose.msra.mxu0 %v2158
        %2162 = vmatprep.subr.bf16.mxu0 0
        %2163 = vmatpush1.bf16.xpose.msra.mxu0 0
        %2164 = vmatprep.subr.bf16.mxu0 0
        %2165 = vmatpush1.bf16.xpose.msra.mxu0 0
        %2166 = vmatprep.subr.bf16.mxu0 0
        %2167 = vmatpush1.bf16.xpose.msra.mxu0 0
        %2168 = vmatprep.subr.bf16.mxu0 0
        %2169 = vmatpush1.bf16.xpose.msra.mxu0 0
        %2170 = vmatprep.subr.bf16.mxu0 0
        %2171 = vmatpush1.bf16.xpose.msra.mxu0 0
        %2172 = vmatprep.subr.bf16.mxu0 0
        %2173 = vmatpush1.bf16.xpose.msra.mxu0 0
        %2174 = vmatprep.subr.bf16.mxu0 0
        %2175 = vmatpush1.bf16.xpose.msra.mxu0 0
        %2176 = vmatprep.subr.bf16.mxu0 0
        %2177 = vmatpush1.bf16.xpose.msra.mxu0 0
        %2178 = vmatprep.subr.bf16.mxu0 0
        %2179 = vmatpush1.bf16.xpose.msra.mxu0 0
        %2180 = vmatprep.subr.bf16.mxu0 0
        %2181 = vmatpush1.bf16.xpose.msra.mxu0 0
        %2182 = vmatprep.subr.bf16.mxu0 0
        %2183 = vmatpush1.bf16.xpose.msra.mxu0 0
        %2184 = vmatprep.subr.bf16.mxu0 0
        %2185 = vmatpush1.bf16.xpose.msra.mxu0 0
        %2186 = vmatprep.subr.bf16.mxu0 0
        %2187 = vmatpush1.bf16.xpose.msra.mxu0 0
        %2188 = vmatprep.subr.bf16.mxu0 0
        %2189 = vmatpush1.bf16.xpose.msra.mxu0 0
        %2190 = vmatprep.subr.bf16.mxu0 0
        %2191 = vmatpush1.bf16.xpose.msra.mxu0 0
        %2192 = vmatprep.mubr.bf16.mxu0 0
        %2193 = vmatmul.mubr.bf16.gmra.mrb[0].mxu0 %v2155
        %v2194 = vpop.f32.mrb[0].mxu0
        %v2195 = vadd.f32 0.0, %v2194
        %v2196 = vpop.f32.mrb[0].mxu0
        %v2197 = vpop.f32.mrb[0].mxu0
        %v2198 = vpop.f32.mrb[0].mxu0
        %2199 = vdwg.mxu0
        %2200 = vrot.lane.b32.xlu0 %v1012, 120
        %v2201 = vpop.permute.xlu0 %2200
        %2202 = vrot.lane.b32.xlu0 %v1012, 88
        %v2203 = vpop.permute.xlu0 %2202
        %v2205 = vsel %vm1017, %v2201, 0
        %v2208 = vsel %vm1017, %v2203, 0
        %2210 = vmatprep.subr.bf16.mxu0 0
        %2211 = vmatpush1.bf16.xpose.msra.mxu0 %v2208
        %2212 = vmatprep.subr.bf16.mxu0 0
        %2213 = vmatpush1.bf16.xpose.msra.mxu0 0
        %2214 = vmatprep.subr.bf16.mxu0 0
        %2215 = vmatpush1.bf16.xpose.msra.mxu0 0
        %2216 = vmatprep.subr.bf16.mxu0 0
        %2217 = vmatpush1.bf16.xpose.msra.mxu0 0
        %2218 = vmatprep.subr.bf16.mxu0 0
        %2219 = vmatpush1.bf16.xpose.msra.mxu0 0
        %2220 = vmatprep.subr.bf16.mxu0 0
        %2221 = vmatpush1.bf16.xpose.msra.mxu0 0
        %2222 = vmatprep.subr.bf16.mxu0 0
        %2223 = vmatpush1.bf16.xpose.msra.mxu0 0
        %2224 = vmatprep.subr.bf16.mxu0 0
        %2225 = vmatpush1.bf16.xpose.msra.mxu0 0
        %2226 = vmatprep.subr.bf16.mxu0 0
        %2227 = vmatpush1.bf16.xpose.msra.mxu0 0
        %2228 = vmatprep.subr.bf16.mxu0 0
        %2229 = vmatpush1.bf16.xpose.msra.mxu0 0
        %2230 = vmatprep.subr.bf16.mxu0 0
        %2231 = vmatpush1.bf16.xpose.msra.mxu0 0
        %2232 = vmatprep.subr.bf16.mxu0 0
        %2233 = vmatpush1.bf16.xpose.msra.mxu0 0
        %2234 = vmatprep.subr.bf16.mxu0 0
        %2235 = vmatpush1.bf16.xpose.msra.mxu0 0
        %2236 = vmatprep.subr.bf16.mxu0 0
        %2237 = vmatpush1.bf16.xpose.msra.mxu0 0
        %2238 = vmatprep.subr.bf16.mxu0 0
        %2239 = vmatpush1.bf16.xpose.msra.mxu0 0
        %2240 = vmatprep.subr.bf16.mxu0 0
        %2241 = vmatpush1.bf16.xpose.msra.mxu0 0
        %2242 = vmatprep.mubr.bf16.mxu0 0
        %2243 = vmatmul.mubr.bf16.gmra.mrb[0].mxu0 %v2205
        %v2244 = vpop.f32.mrb[0].mxu0
        %v2245 = vadd.f32 0.0, %v2244
        %v2246 = vpop.f32.mrb[0].mxu0
        %v2247 = vpop.f32.mrb[0].mxu0
        %v2248 = vpop.f32.mrb[0].mxu0
        %2249 = vdwg.mxu0
        %2250 = vrot.lane.b32.xlu0 %v1013, 120
        %v2251 = vpop.permute.xlu0 %2250
        %2252 = vrot.lane.b32.xlu0 %v1013, 88
        %v2253 = vpop.permute.xlu0 %2252
        %v2255 = vsel %vm1017, %v2251, 0
        %v2258 = vsel %vm1017, %v2253, 0
        %2260 = vmatprep.subr.bf16.mxu0 0
        %2261 = vmatpush1.bf16.xpose.msra.mxu0 %v2258
        %2262 = vmatprep.subr.bf16.mxu0 0
        %2263 = vmatpush1.bf16.xpose.msra.mxu0 0
        %2264 = vmatprep.subr.bf16.mxu0 0
        %2265 = vmatpush1.bf16.xpose.msra.mxu0 0
        %2266 = vmatprep.subr.bf16.mxu0 0
        %2267 = vmatpush1.bf16.xpose.msra.mxu0 0
        %2268 = vmatprep.subr.bf16.mxu0 0
        %2269 = vmatpush1.bf16.xpose.msra.mxu0 0
        %2270 = vmatprep.subr.bf16.mxu0 0
        %2271 = vmatpush1.bf16.xpose.msra.mxu0 0
        %2272 = vmatprep.subr.bf16.mxu0 0
        %2273 = vmatpush1.bf16.xpose.msra.mxu0 0
        %2274 = vmatprep.subr.bf16.mxu0 0
        %2275 = vmatpush1.bf16.xpose.msra.mxu0 0
        %2276 = vmatprep.subr.bf16.mxu0 0
        %2277 = vmatpush1.bf16.xpose.msra.mxu0 0
        %2278 = vmatprep.subr.bf16.mxu0 0
        %2279 = vmatpush1.bf16.xpose.msra.mxu0 0
        %2280 = vmatprep.subr.bf16.mxu0 0
        %2281 = vmatpush1.bf16.xpose.msra.mxu0 0
        %2282 = vmatprep.subr.bf16.mxu0 0
        %2283 = vmatpush1.bf16.xpose.msra.mxu0 0
        %2284 = vmatprep.subr.bf16.mxu0 0
        %2285 = vmatpush1.bf16.xpose.msra.mxu0 0
        %2286 = vmatprep.subr.bf16.mxu0 0
        %2287 = vmatpush1.bf16.xpose.msra.mxu0 0
        %2288 = vmatprep.subr.bf16.mxu0 0
        %2289 = vmatpush1.bf16.xpose.msra.mxu0 0
        %2290 = vmatprep.subr.bf16.mxu0 0
        %2291 = vmatpush1.bf16.xpose.msra.mxu0 0
        %2292 = vmatprep.mubr.bf16.mxu0 0
        %2293 = vmatmul.mubr.bf16.gmra.mrb[0].mxu0 %v2255
        %v2294 = vpop.f32.mrb[0].mxu0
        %v2295 = vadd.f32 0.0, %v2294
        %v2296 = vpop.f32.mrb[0].mxu0
        %v2297 = vpop.f32.mrb[0].mxu0
        %v2298 = vpop.f32.mrb[0].mxu0
        %2299 = vdwg.mxu0
        %v2300 = vmul.f32 %v1945, 0.35355338
        %v2301 = vmul.f32 %v1995, 0.35355338
        %v2302 = vmul.f32 %v2045, 0.35355338
        %v2303 = vmul.f32 %v2095, 0.35355338
        %v2304 = vmul.f32 %v2145, 0.35355338
        %v2305 = vmul.f32 %v2195, 0.35355338
        %v2306 = vmul.f32 %v2245, 0.35355338
        %v2307 = vmul.f32 %v2295, 0.35355338
        %v2308 = vsel %vm1017, %v2300, -inf
        %2309 = vmax.xlane.f32.xlu0 %v2308
        %v2310 = vpop.xlane.xlu0 %2309
        %v2311 = vsel %vm1017, %v2301, -inf
        %2312 = vmax.xlane.f32.xlu0 %v2311
        %v2313 = vpop.xlane.xlu0 %2312
        %v2314 = vsel %vm1017, %v2302, -inf
        %2315 = vmax.xlane.f32.xlu0 %v2314
        %v2316 = vpop.xlane.xlu0 %2315
        %v2317 = vsel %vm1017, %v2303, -inf
        %2318 = vmax.xlane.f32.xlu0 %v2317
        %v2319 = vpop.xlane.xlu0 %2318
        %v2320 = vsel %vm1017, %v2304, -inf
        %2321 = vmax.xlane.f32.xlu0 %v2320
        %v2322 = vpop.xlane.xlu0 %2321
        %v2323 = vsel %vm1017, %v2305, -inf
        %2324 = vmax.xlane.f32.xlu0 %v2323
        %v2325 = vpop.xlane.xlu0 %2324
        %v2326 = vsel %vm1017, %v2306, -inf
        %2327 = vmax.xlane.f32.xlu0 %v2326
        %v2328 = vpop.xlane.xlu0 %2327
        %v2329 = vsel %vm1017, %v2307, -inf
        %2330 = vmax.xlane.f32.xlu0 %v2329
        %v2331 = vpop.xlane.xlu0 %2330
        %v2332 = vsub.f32 %v2300, %v2310
        %v2333 = vsub.f32 %v2301, %v2313
        %v2334 = vsub.f32 %v2302, %v2316
        %v2335 = vsub.f32 %v2303, %v2319
        %v2336 = vsub.f32 %v2304, %v2322
        %v2337 = vsub.f32 %v2305, %v2325
        %v2338 = vsub.f32 %v2306, %v2328
        %v2339 = vsub.f32 %v2307, %v2331
        %v2340 = vmul.f32 %v2332, 1.442695
        %v2341 = vpow.pop %v2340
        %v2342 = vmul.f32 %v2333, 1.442695
        %v2343 = vpow.pop %v2342
        %v2344 = vmul.f32 %v2334, 1.442695
        %v2345 = vpow.pop %v2344
        %v2346 = vmul.f32 %v2335, 1.442695
        %v2347 = vpow.pop %v2346
        %v2348 = vmul.f32 %v2336, 1.442695
        %v2349 = vpow.pop %v2348
        %v2350 = vmul.f32 %v2337, 1.442695
        %v2351 = vpow.pop %v2350
        %v2352 = vmul.f32 %v2338, 1.442695
        %v2353 = vpow.pop %v2352
        %v2354 = vmul.f32 %v2339, 1.442695
        %v2355 = vpow.pop %v2354
        %v2356 = vsel %vm1017, %v2341, 0.0
        %2357 = vadd.xlane.f32.xlu0 %v2356
        %v2358 = vpop.xlane.xlu0 %2357
        %v2359 = vsel %vm1017, %v2343, 0.0
        %2360 = vadd.xlane.f32.xlu0 %v2359
        %v2361 = vpop.xlane.xlu0 %2360
        %v2362 = vsel %vm1017, %v2345, 0.0
        %2363 = vadd.xlane.f32.xlu0 %v2362
        %v2364 = vpop.xlane.xlu0 %2363
        %v2365 = vsel %vm1017, %v2347, 0.0
        %2366 = vadd.xlane.f32.xlu0 %v2365
        %v2367 = vpop.xlane.xlu0 %2366
        %v2368 = vsel %vm1017, %v2349, 0.0
        %2369 = vadd.xlane.f32.xlu0 %v2368
        %v2370 = vpop.xlane.xlu0 %2369
        %v2371 = vsel %vm1017, %v2351, 0.0
        %2372 = vadd.xlane.f32.xlu0 %v2371
        %v2373 = vpop.xlane.xlu0 %2372
        %v2374 = vsel %vm1017, %v2353, 0.0
        %2375 = vadd.xlane.f32.xlu0 %v2374
        %v2376 = vpop.xlane.xlu0 %2375
        %v2377 = vsel %vm1017, %v2355, 0.0
        %2378 = vadd.xlane.f32.xlu0 %v2377
        %v2379 = vpop.xlane.xlu0 %2378
        %v2380 = vrcp.pop %v2358
        %v2381 = vrcp.pop %v2361
        %v2382 = vrcp.pop %v2364
        %v2383 = vrcp.pop %v2367
        %v2384 = vrcp.pop %v2370
        %v2385 = vrcp.pop %v2373
        %v2386 = vrcp.pop %v2376
        %v2387 = vrcp.pop %v2379
        %v2388 = vmul.f32 %v2341, %v2380
        %v2389 = vmul.f32 %v2343, %v2381
        %v2390 = vmul.f32 %v2345, %v2382
        %v2391 = vmul.f32 %v2347, %v2383
        %v2392 = vmul.f32 %v2349, %v2384
        %v2393 = vmul.f32 %v2351, %v2385
        %v2394 = vmul.f32 %v2353, %v2386
        %v2395 = vmul.f32 %v2355, %v2387
        %v2396 = vpack.c.bf16 %v2388, %v2388
        %v2397 = vpack.c.bf16 %v2389, %v2389
        %v2398 = vpack.c.bf16 %v2390, %v2390
        %v2399 = vpack.c.bf16 %v2391, %v2391
        %v2400 = vpack.c.bf16 %v2392, %v2392
        %v2401 = vpack.c.bf16 %v2393, %v2393
        %v2402 = vpack.c.bf16 %v2394, %v2394
        %v2403 = vpack.c.bf16 %v2395, %v2395
        %2404 = vrot.lane.b32.xlu0 %v1006, 56
        %v2405 = vpop.permute.xlu0 %2404
        %v2407 = vsel %vm1017, %v2396, 0
        %v2410 = vsel %vm1516, %v2405, 0
        %2412 = vmatprep.subr.bf16.mxu0 0
        %2413 = vmatpush1.bf16.msra.mxu0 %v2410
        %2414 = vmatprep.subr.bf16.mxu0 0
        %2415 = vmatpush1.bf16.msra.mxu0 0
        %2416 = vmatprep.subr.bf16.mxu0 0
        %2417 = vmatpush1.bf16.msra.mxu0 0
        %2418 = vmatprep.subr.bf16.mxu0 0
        %2419 = vmatpush1.bf16.msra.mxu0 0
        %2420 = vmatprep.subr.bf16.mxu0 0
        %2421 = vmatpush1.bf16.msra.mxu0 0
        %2422 = vmatprep.subr.bf16.mxu0 0
        %2423 = vmatpush1.bf16.msra.mxu0 0
        %2424 = vmatprep.subr.bf16.mxu0 0
        %2425 = vmatpush1.bf16.msra.mxu0 0
        %2426 = vmatprep.subr.bf16.mxu0 0
        %2427 = vmatpush1.bf16.msra.mxu0 0
        %2428 = vmatprep.subr.bf16.mxu0 0
        %2429 = vmatpush1.bf16.msra.mxu0 0
        %2430 = vmatprep.subr.bf16.mxu0 0
        %2431 = vmatpush1.bf16.msra.mxu0 0
        %2432 = vmatprep.subr.bf16.mxu0 0
        %2433 = vmatpush1.bf16.msra.mxu0 0
        %2434 = vmatprep.subr.bf16.mxu0 0
        %2435 = vmatpush1.bf16.msra.mxu0 0
        %2436 = vmatprep.subr.bf16.mxu0 0
        %2437 = vmatpush1.bf16.msra.mxu0 0
        %2438 = vmatprep.subr.bf16.mxu0 0
        %2439 = vmatpush1.bf16.msra.mxu0 0
        %2440 = vmatprep.subr.bf16.mxu0 0
        %2441 = vmatpush1.bf16.msra.mxu0 0
        %2442 = vmatprep.subr.bf16.mxu0 0
        %2443 = vmatpush1.bf16.msra.mxu0 0
        %2444 = vmatprep.mubr.bf16.mxu0 0
        %2445 = vmatmul.mubr.bf16.gmra.mrb[0].mxu0 %v2407
        %v2446 = vpop.f32.mrb[0].mxu0
        %v2447 = vadd.f32 0.0, %v2446
        %v2448 = vpop.f32.mrb[0].mxu0
        %v2449 = vpop.f32.mrb[0].mxu0
        %v2450 = vpop.f32.mrb[0].mxu0
        %2451 = vdwg.mxu0
        %2452 = vrot.lane.b32.xlu0 %v1007, 56
        %v2453 = vpop.permute.xlu0 %2452
        %v2455 = vsel %vm1017, %v2397, 0
        %v2458 = vsel %vm1516, %v2453, 0
        %2460 = vmatprep.subr.bf16.mxu0 0
        %2461 = vmatpush1.bf16.msra.mxu0 %v2458
        %2462 = vmatprep.subr.bf16.mxu0 0
        %2463 = vmatpush1.bf16.msra.mxu0 0
        %2464 = vmatprep.subr.bf16.mxu0 0
        %2465 = vmatpush1.bf16.msra.mxu0 0
        %2466 = vmatprep.subr.bf16.mxu0 0
        %2467 = vmatpush1.bf16.msra.mxu0 0
        %2468 = vmatprep.subr.bf16.mxu0 0
        %2469 = vmatpush1.bf16.msra.mxu0 0
        %2470 = vmatprep.subr.bf16.mxu0 0
        %2471 = vmatpush1.bf16.msra.mxu0 0
        %2472 = vmatprep.subr.bf16.mxu0 0
        %2473 = vmatpush1.bf16.msra.mxu0 0
        %2474 = vmatprep.subr.bf16.mxu0 0
        %2475 = vmatpush1.bf16.msra.mxu0 0
        %2476 = vmatprep.subr.bf16.mxu0 0
        %2477 = vmatpush1.bf16.msra.mxu0 0
        %2478 = vmatprep.subr.bf16.mxu0 0
        %2479 = vmatpush1.bf16.msra.mxu0 0
        %2480 = vmatprep.subr.bf16.mxu0 0
        %2481 = vmatpush1.bf16.msra.mxu0 0
        %2482 = vmatprep.subr.bf16.mxu0 0
        %2483 = vmatpush1.bf16.msra.mxu0 0
        %2484 = vmatprep.subr.bf16.mxu0 0
        %2485 = vmatpush1.bf16.msra.mxu0 0
        %2486 = vmatprep.subr.bf16.mxu0 0
        %2487 = vmatpush1.bf16.msra.mxu0 0
        %2488 = vmatprep.subr.bf16.mxu0 0
        %2489 = vmatpush1.bf16.msra.mxu0 0
        %2490 = vmatprep.subr.bf16.mxu0 0
        %2491 = vmatpush1.bf16.msra.mxu0 0
        %2492 = vmatprep.mubr.bf16.mxu0 0
        %2493 = vmatmul.mubr.bf16.gmra.mrb[0].mxu0 %v2455
        %v2494 = vpop.f32.mrb[0].mxu0
        %v2495 = vadd.f32 0.0, %v2494
        %v2496 = vpop.f32.mrb[0].mxu0
        %v2497 = vpop.f32.mrb[0].mxu0
        %v2498 = vpop.f32.mrb[0].mxu0
        %2499 = vdwg.mxu0
        %2500 = vrot.lane.b32.xlu0 %v1008, 56
        %v2501 = vpop.permute.xlu0 %2500
        %v2503 = vsel %vm1017, %v2398, 0
        %v2506 = vsel %vm1516, %v2501, 0
        %2508 = vmatprep.subr.bf16.mxu0 0
        %2509 = vmatpush1.bf16.msra.mxu0 %v2506
        %2510 = vmatprep.subr.bf16.mxu0 0
        %2511 = vmatpush1.bf16.msra.mxu0 0
        %2512 = vmatprep.subr.bf16.mxu0 0
        %2513 = vmatpush1.bf16.msra.mxu0 0
        %2514 = vmatprep.subr.bf16.mxu0 0
        %2515 = vmatpush1.bf16.msra.mxu0 0
        %2516 = vmatprep.subr.bf16.mxu0 0
        %2517 = vmatpush1.bf16.msra.mxu0 0
        %2518 = vmatprep.subr.bf16.mxu0 0
        %2519 = vmatpush1.bf16.msra.mxu0 0
        %2520 = vmatprep.subr.bf16.mxu0 0
        %2521 = vmatpush1.bf16.msra.mxu0 0
        %2522 = vmatprep.subr.bf16.mxu0 0
        %2523 = vmatpush1.bf16.msra.mxu0 0
        %2524 = vmatprep.subr.bf16.mxu0 0
        %2525 = vmatpush1.bf16.msra.mxu0 0
        %2526 = vmatprep.subr.bf16.mxu0 0
        %2527 = vmatpush1.bf16.msra.mxu0 0
        %2528 = vmatprep.subr.bf16.mxu0 0
        %2529 = vmatpush1.bf16.msra.mxu0 0
        %2530 = vmatprep.subr.bf16.mxu0 0
        %2531 = vmatpush1.bf16.msra.mxu0 0
        %2532 = vmatprep.subr.bf16.mxu0 0
        %2533 = vmatpush1.bf16.msra.mxu0 0
        %2534 = vmatprep.subr.bf16.mxu0 0
        %2535 = vmatpush1.bf16.msra.mxu0 0
        %2536 = vmatprep.subr.bf16.mxu0 0
        %2537 = vmatpush1.bf16.msra.mxu0 0
        %2538 = vmatprep.subr.bf16.mxu0 0
        %2539 = vmatpush1.bf16.msra.mxu0 0
        %2540 = vmatprep.mubr.bf16.mxu0 0
        %2541 = vmatmul.mubr.bf16.gmra.mrb[0].mxu0 %v2503
        %v2542 = vpop.f32.mrb[0].mxu0
        %v2543 = vadd.f32 0.0, %v2542
        %v2544 = vpop.f32.mrb[0].mxu0
        %v2545 = vpop.f32.mrb[0].mxu0
        %v2546 = vpop.f32.mrb[0].mxu0
        %2547 = vdwg.mxu0
        %2548 = vrot.lane.b32.xlu0 %v1009, 56
        %v2549 = vpop.permute.xlu0 %2548
        %v2551 = vsel %vm1017, %v2399, 0
        %v2554 = vsel %vm1516, %v2549, 0
        %2556 = vmatprep.subr.bf16.mxu0 0
        %2557 = vmatpush1.bf16.msra.mxu0 %v2554
        %2558 = vmatprep.subr.bf16.mxu0 0
        %2559 = vmatpush1.bf16.msra.mxu0 0
        %2560 = vmatprep.subr.bf16.mxu0 0
        %2561 = vmatpush1.bf16.msra.mxu0 0
        %2562 = vmatprep.subr.bf16.mxu0 0
        %2563 = vmatpush1.bf16.msra.mxu0 0
        %2564 = vmatprep.subr.bf16.mxu0 0
        %2565 = vmatpush1.bf16.msra.mxu0 0
        %2566 = vmatprep.subr.bf16.mxu0 0
        %2567 = vmatpush1.bf16.msra.mxu0 0
        %2568 = vmatprep.subr.bf16.mxu0 0
        %2569 = vmatpush1.bf16.msra.mxu0 0
        %2570 = vmatprep.subr.bf16.mxu0 0
        %2571 = vmatpush1.bf16.msra.mxu0 0
        %2572 = vmatprep.subr.bf16.mxu0 0
        %2573 = vmatpush1.bf16.msra.mxu0 0
        %2574 = vmatprep.subr.bf16.mxu0 0
        %2575 = vmatpush1.bf16.msra.mxu0 0
        %2576 = vmatprep.subr.bf16.mxu0 0
        %2577 = vmatpush1.bf16.msra.mxu0 0
        %2578 = vmatprep.subr.bf16.mxu0 0
        %2579 = vmatpush1.bf16.msra.mxu0 0
        %2580 = vmatprep.subr.bf16.mxu0 0
        %2581 = vmatpush1.bf16.msra.mxu0 0
        %2582 = vmatprep.subr.bf16.mxu0 0
        %2583 = vmatpush1.bf16.msra.mxu0 0
        %2584 = vmatprep.subr.bf16.mxu0 0
        %2585 = vmatpush1.bf16.msra.mxu0 0
        %2586 = vmatprep.subr.bf16.mxu0 0
        %2587 = vmatpush1.bf16.msra.mxu0 0
        %2588 = vmatprep.mubr.bf16.mxu0 0
        %2589 = vmatmul.mubr.bf16.gmra.mrb[0].mxu0 %v2551
        %v2590 = vpop.f32.mrb[0].mxu0
        %v2591 = vadd.f32 0.0, %v2590
        %v2592 = vpop.f32.mrb[0].mxu0
        %v2593 = vpop.f32.mrb[0].mxu0
        %v2594 = vpop.f32.mrb[0].mxu0
        %2595 = vdwg.mxu0
        %2596 = vrot.lane.b32.xlu0 %v1010, 56
        %v2597 = vpop.permute.xlu0 %2596
        %v2599 = vsel %vm1017, %v2400, 0
        %v2602 = vsel %vm1516, %v2597, 0
        %2604 = vmatprep.subr.bf16.mxu0 0
        %2605 = vmatpush1.bf16.msra.mxu0 %v2602
        %2606 = vmatprep.subr.bf16.mxu0 0
        %2607 = vmatpush1.bf16.msra.mxu0 0
        %2608 = vmatprep.subr.bf16.mxu0 0
        %2609 = vmatpush1.bf16.msra.mxu0 0
        %2610 = vmatprep.subr.bf16.mxu0 0
        %2611 = vmatpush1.bf16.msra.mxu0 0
        %2612 = vmatprep.subr.bf16.mxu0 0
        %2613 = vmatpush1.bf16.msra.mxu0 0
        %2614 = vmatprep.subr.bf16.mxu0 0
        %2615 = vmatpush1.bf16.msra.mxu0 0
        %2616 = vmatprep.subr.bf16.mxu0 0
        %2617 = vmatpush1.bf16.msra.mxu0 0
        %2618 = vmatprep.subr.bf16.mxu0 0
        %2619 = vmatpush1.bf16.msra.mxu0 0
        %2620 = vmatprep.subr.bf16.mxu0 0
        %2621 = vmatpush1.bf16.msra.mxu0 0
        %2622 = vmatprep.subr.bf16.mxu0 0
        %2623 = vmatpush1.bf16.msra.mxu0 0
        %2624 = vmatprep.subr.bf16.mxu0 0
        %2625 = vmatpush1.bf16.msra.mxu0 0
        %2626 = vmatprep.subr.bf16.mxu0 0
        %2627 = vmatpush1.bf16.msra.mxu0 0
        %2628 = vmatprep.subr.bf16.mxu0 0
        %2629 = vmatpush1.bf16.msra.mxu0 0
        %2630 = vmatprep.subr.bf16.mxu0 0
        %2631 = vmatpush1.bf16.msra.mxu0 0
        %2632 = vmatprep.subr.bf16.mxu0 0
        %2633 = vmatpush1.bf16.msra.mxu0 0
        %2634 = vmatprep.subr.bf16.mxu0 0
        %2635 = vmatpush1.bf16.msra.mxu0 0
        %2636 = vmatprep.mubr.bf16.mxu0 0
        %2637 = vmatmul.mubr.bf16.gmra.mrb[0].mxu0 %v2599
        %v2638 = vpop.f32.mrb[0].mxu0
        %v2639 = vadd.f32 0.0, %v2638
        %v2640 = vpop.f32.mrb[0].mxu0
        %v2641 = vpop.f32.mrb[0].mxu0
        %v2642 = vpop.f32.mrb[0].mxu0
        %2643 = vdwg.mxu0
        %2644 = vrot.lane.b32.xlu0 %v1011, 56
        %v2645 = vpop.permute.xlu0 %2644
        %v2647 = vsel %vm1017, %v2401, 0
        %v2650 = vsel %vm1516, %v2645, 0
        %2652 = vmatprep.subr.bf16.mxu0 0
        %2653 = vmatpush1.bf16.msra.mxu0 %v2650
        %2654 = vmatprep.subr.bf16.mxu0 0
        %2655 = vmatpush1.bf16.msra.mxu0 0
        %2656 = vmatprep.subr.bf16.mxu0 0
        %2657 = vmatpush1.bf16.msra.mxu0 0
        %2658 = vmatprep.subr.bf16.mxu0 0
        %2659 = vmatpush1.bf16.msra.mxu0 0
        %2660 = vmatprep.subr.bf16.mxu0 0
        %2661 = vmatpush1.bf16.msra.mxu0 0
        %2662 = vmatprep.subr.bf16.mxu0 0
        %2663 = vmatpush1.bf16.msra.mxu0 0
        %2664 = vmatprep.subr.bf16.mxu0 0
        %2665 = vmatpush1.bf16.msra.mxu0 0
        %2666 = vmatprep.subr.bf16.mxu0 0
        %2667 = vmatpush1.bf16.msra.mxu0 0
        %2668 = vmatprep.subr.bf16.mxu0 0
        %2669 = vmatpush1.bf16.msra.mxu0 0
        %2670 = vmatprep.subr.bf16.mxu0 0
        %2671 = vmatpush1.bf16.msra.mxu0 0
        %2672 = vmatprep.subr.bf16.mxu0 0
        %2673 = vmatpush1.bf16.msra.mxu0 0
        %2674 = vmatprep.subr.bf16.mxu0 0
        %2675 = vmatpush1.bf16.msra.mxu0 0
        %2676 = vmatprep.subr.bf16.mxu0 0
        %2677 = vmatpush1.bf16.msra.mxu0 0
        %2678 = vmatprep.subr.bf16.mxu0 0
        %2679 = vmatpush1.bf16.msra.mxu0 0
        %2680 = vmatprep.subr.bf16.mxu0 0
        %2681 = vmatpush1.bf16.msra.mxu0 0
        %2682 = vmatprep.subr.bf16.mxu0 0
        %2683 = vmatpush1.bf16.msra.mxu0 0
        %2684 = vmatprep.mubr.bf16.mxu0 0
        %2685 = vmatmul.mubr.bf16.gmra.mrb[0].mxu0 %v2647
        %v2686 = vpop.f32.mrb[0].mxu0
        %v2687 = vadd.f32 0.0, %v2686
        %v2688 = vpop.f32.mrb[0].mxu0
        %v2689 = vpop.f32.mrb[0].mxu0
        %v2690 = vpop.f32.mrb[0].mxu0
        %2691 = vdwg.mxu0
        %2692 = vrot.lane.b32.xlu0 %v1012, 56
        %v2693 = vpop.permute.xlu0 %2692
        %v2695 = vsel %vm1017, %v2402, 0
        %v2698 = vsel %vm1516, %v2693, 0
        %2700 = vmatprep.subr.bf16.mxu0 0
        %2701 = vmatpush1.bf16.msra.mxu0 %v2698
        %2702 = vmatprep.subr.bf16.mxu0 0
        %2703 = vmatpush1.bf16.msra.mxu0 0
        %2704 = vmatprep.subr.bf16.mxu0 0
        %2705 = vmatpush1.bf16.msra.mxu0 0
        %2706 = vmatprep.subr.bf16.mxu0 0
        %2707 = vmatpush1.bf16.msra.mxu0 0
        %2708 = vmatprep.subr.bf16.mxu0 0
        %2709 = vmatpush1.bf16.msra.mxu0 0
        %2710 = vmatprep.subr.bf16.mxu0 0
        %2711 = vmatpush1.bf16.msra.mxu0 0
        %2712 = vmatprep.subr.bf16.mxu0 0
        %2713 = vmatpush1.bf16.msra.mxu0 0
        %2714 = vmatprep.subr.bf16.mxu0 0
        %2715 = vmatpush1.bf16.msra.mxu0 0
        %2716 = vmatprep.subr.bf16.mxu0 0
        %2717 = vmatpush1.bf16.msra.mxu0 0
        %2718 = vmatprep.subr.bf16.mxu0 0
        %2719 = vmatpush1.bf16.msra.mxu0 0
        %2720 = vmatprep.subr.bf16.mxu0 0
        %2721 = vmatpush1.bf16.msra.mxu0 0
        %2722 = vmatprep.subr.bf16.mxu0 0
        %2723 = vmatpush1.bf16.msra.mxu0 0
        %2724 = vmatprep.subr.bf16.mxu0 0
        %2725 = vmatpush1.bf16.msra.mxu0 0
        %2726 = vmatprep.subr.bf16.mxu0 0
        %2727 = vmatpush1.bf16.msra.mxu0 0
        %2728 = vmatprep.subr.bf16.mxu0 0
        %2729 = vmatpush1.bf16.msra.mxu0 0
        %2730 = vmatprep.subr.bf16.mxu0 0
        %2731 = vmatpush1.bf16.msra.mxu0 0
        %2732 = vmatprep.mubr.bf16.mxu0 0
        %2733 = vmatmul.mubr.bf16.gmra.mrb[0].mxu0 %v2695
        %v2734 = vpop.f32.mrb[0].mxu0
        %v2735 = vadd.f32 0.0, %v2734
        %v2736 = vpop.f32.mrb[0].mxu0
        %v2737 = vpop.f32.mrb[0].mxu0
        %v2738 = vpop.f32.mrb[0].mxu0
        %2739 = vdwg.mxu0
        %2740 = vrot.lane.b32.xlu0 %v1013, 56
        %v2741 = vpop.permute.xlu0 %2740
        %v2743 = vsel %vm1017, %v2403, 0
        %v2746 = vsel %vm1516, %v2741, 0
        %2748 = vmatprep.subr.bf16.mxu0 0
        %2749 = vmatpush1.bf16.msra.mxu0 %v2746
        %2750 = vmatprep.subr.bf16.mxu0 0
        %2751 = vmatpush1.bf16.msra.mxu0 0
        %2752 = vmatprep.subr.bf16.mxu0 0
        %2753 = vmatpush1.bf16.msra.mxu0 0
        %2754 = vmatprep.subr.bf16.mxu0 0
        %2755 = vmatpush1.bf16.msra.mxu0 0
        %2756 = vmatprep.subr.bf16.mxu0 0
        %2757 = vmatpush1.bf16.msra.mxu0 0
        %2758 = vmatprep.subr.bf16.mxu0 0
        %2759 = vmatpush1.bf16.msra.mxu0 0
        %2760 = vmatprep.subr.bf16.mxu0 0
        %2761 = vmatpush1.bf16.msra.mxu0 0
        %2762 = vmatprep.subr.bf16.mxu0 0
        %2763 = vmatpush1.bf16.msra.mxu0 0
        %2764 = vmatprep.subr.bf16.mxu0 0
        %2765 = vmatpush1.bf16.msra.mxu0 0
        %2766 = vmatprep.subr.bf16.mxu0 0
        %2767 = vmatpush1.bf16.msra.mxu0 0
        %2768 = vmatprep.subr.bf16.mxu0 0
        %2769 = vmatpush1.bf16.msra.mxu0 0
        %2770 = vmatprep.subr.bf16.mxu0 0
        %2771 = vmatpush1.bf16.msra.mxu0 0
        %2772 = vmatprep.subr.bf16.mxu0 0
        %2773 = vmatpush1.bf16.msra.mxu0 0
        %2774 = vmatprep.subr.bf16.mxu0 0
        %2775 = vmatpush1.bf16.msra.mxu0 0
        %2776 = vmatprep.subr.bf16.mxu0 0
        %2777 = vmatpush1.bf16.msra.mxu0 0
        %2778 = vmatprep.subr.bf16.mxu0 0
        %2779 = vmatpush1.bf16.msra.mxu0 0
        %2780 = vmatprep.mubr.bf16.mxu0 0
        %2781 = vmatmul.mubr.bf16.gmra.mrb[0].mxu0 %v2743
        %v2782 = vpop.f32.mrb[0].mxu0
        %v2783 = vadd.f32 0.0, %v2782
        %v2784 = vpop.f32.mrb[0].mxu0
        %v2785 = vpop.f32.mrb[0].mxu0
        %v2786 = vpop.f32.mrb[0].mxu0
        %2787 = vdwg.mxu0
        %v2788 = vpack.c.bf16 %v2495, %v2447
        %v2789 = vpack.c.bf16 %v2591, %v2543
        %v2790 = vpack.c.bf16 %v2687, %v2639
        %v2791 = vpack.c.bf16 %v2783, %v2735
        %v2793 = vsel %vm1017, %v2788, 0
        %v2796 = vsel %vm1017, %v2789, 0
        %v2799 = vsel %vm1017, %v2790, 0
        %v2802 = vsel %vm1017, %v2791, 0
        %v2805 = vsel %vm1516, %v1003, 0
        %2807 = vmatprep.subr.bf16.mxu0 0
        %2808 = vmatpush1.bf16.msra.mxu0 %v2805
        %2809 = vmatprep.subr.bf16.mxu0 0
        %2810 = vmatpush1.bf16.msra.mxu0 0
        %2811 = vmatprep.subr.bf16.mxu0 0
        %2812 = vmatpush1.bf16.msra.mxu0 0
        %2813 = vmatprep.subr.bf16.mxu0 0
        %2814 = vmatpush1.bf16.msra.mxu0 0
        %2815 = vmatprep.subr.bf16.mxu0 0
        %2816 = vmatpush1.bf16.msra.mxu0 0
        %2817 = vmatprep.subr.bf16.mxu0 0
        %2818 = vmatpush1.bf16.msra.mxu0 0
        %2819 = vmatprep.subr.bf16.mxu0 0
        %2820 = vmatpush1.bf16.msra.mxu0 0
        %2821 = vmatprep.subr.bf16.mxu0 0
        %2822 = vmatpush1.bf16.msra.mxu0 0
        %2823 = vmatprep.subr.bf16.mxu0 0
        %2824 = vmatpush1.bf16.msra.mxu0 0
        %2825 = vmatprep.subr.bf16.mxu0 0
        %2826 = vmatpush1.bf16.msra.mxu0 0
        %2827 = vmatprep.subr.bf16.mxu0 0
        %2828 = vmatpush1.bf16.msra.mxu0 0
        %2829 = vmatprep.subr.bf16.mxu0 0
        %2830 = vmatpush1.bf16.msra.mxu0 0
        %2831 = vmatprep.subr.bf16.mxu0 0
        %2832 = vmatpush1.bf16.msra.mxu0 0
        %2833 = vmatprep.subr.bf16.mxu0 0
        %2834 = vmatpush1.bf16.msra.mxu0 0
        %2835 = vmatprep.subr.bf16.mxu0 0
        %2836 = vmatpush1.bf16.msra.mxu0 0
        %2837 = vmatprep.subr.bf16.mxu0 0
        %2838 = vmatpush1.bf16.msra.mxu0 0
        %2839 = vmatprep.mubr.bf16.mxu0 0
        %2840 = vmatmul.mubr.bf16.gmra.mrb[0].mxu0 %v2793
        %v2841 = vpop.f32.mrb[0].mxu0
        %v2842 = vadd.f32 0.0, %v2841
        %v2843 = vpop.f32.mrb[0].mxu0
        %v2844 = vpop.f32.mrb[0].mxu0
        %v2845 = vadd.f32 0.0, %v2844
        %v2846 = vpop.f32.mrb[0].mxu0
        %2847 = vmatprep.mubr.bf16.mxu0 0
        %2848 = vmatmul.mubr.bf16.gmra.mrb[0].mxu0 %v2796
        %v2849 = vpop.f32.mrb[0].mxu0
        %v2850 = vadd.f32 0.0, %v2849
        %v2851 = vpop.f32.mrb[0].mxu0
        %v2852 = vpop.f32.mrb[0].mxu0
        %v2853 = vadd.f32 0.0, %v2852
        %v2854 = vpop.f32.mrb[0].mxu0
        %2855 = vmatprep.mubr.bf16.mxu0 0
        %2856 = vmatmul.mubr.bf16.gmra.mrb[0].mxu0 %v2799
        %v2857 = vpop.f32.mrb[0].mxu0
        %v2858 = vadd.f32 0.0, %v2857
        %v2859 = vpop.f32.mrb[0].mxu0
        %v2860 = vpop.f32.mrb[0].mxu0
        %v2861 = vadd.f32 0.0, %v2860
        %v2862 = vpop.f32.mrb[0].mxu0
        %2863 = vmatprep.mubr.bf16.mxu0 0
        %2864 = vmatmul.mubr.bf16.gmra.mrb[0].mxu0 %v2802
        %v2865 = vpop.f32.mrb[0].mxu0
        %v2866 = vadd.f32 0.0, %v2865
        %v2867 = vpop.f32.mrb[0].mxu0
        %v2868 = vpop.f32.mrb[0].mxu0
        %v2869 = vadd.f32 0.0, %v2868
        %v2870 = vpop.f32.mrb[0].mxu0
        %2871 = vdwg.mxu0
        %v2873 = vsel %vm1017, %v1896, 0
        %v2876 = vsel %vm1017, %v1897, 0
        %v2879 = vsel %vm1017, %v1898, 0
        %v2882 = vsel %vm1017, %v1899, 0
        %v2885 = vsel %vm1516, %v1002, 0
        %2887 = vmatprep.subr.bf16.mxu0 0
        %2888 = vmatpush1.bf16.msra.mxu0 %v2885
        %2889 = vmatprep.subr.bf16.mxu0 0
        %2890 = vmatpush1.bf16.msra.mxu0 0
        %2891 = vmatprep.subr.bf16.mxu0 0
        %2892 = vmatpush1.bf16.msra.mxu0 0
        %2893 = vmatprep.subr.bf16.mxu0 0
        %2894 = vmatpush1.bf16.msra.mxu0 0
        %2895 = vmatprep.subr.bf16.mxu0 0
        %2896 = vmatpush1.bf16.msra.mxu0 0
        %2897 = vmatprep.subr.bf16.mxu0 0
        %2898 = vmatpush1.bf16.msra.mxu0 0
        %2899 = vmatprep.subr.bf16.mxu0 0
        %2900 = vmatpush1.bf16.msra.mxu0 0
        %2901 = vmatprep.subr.bf16.mxu0 0
        %2902 = vmatpush1.bf16.msra.mxu0 0
        %2903 = vmatprep.subr.bf16.mxu0 0
        %2904 = vmatpush1.bf16.msra.mxu0 0
        %2905 = vmatprep.subr.bf16.mxu0 0
        %2906 = vmatpush1.bf16.msra.mxu0 0
        %2907 = vmatprep.subr.bf16.mxu0 0
        %2908 = vmatpush1.bf16.msra.mxu0 0
        %2909 = vmatprep.subr.bf16.mxu0 0
        %2910 = vmatpush1.bf16.msra.mxu0 0
        %2911 = vmatprep.subr.bf16.mxu0 0
        %2912 = vmatpush1.bf16.msra.mxu0 0
        %2913 = vmatprep.subr.bf16.mxu0 0
        %2914 = vmatpush1.bf16.msra.mxu0 0
        %2915 = vmatprep.subr.bf16.mxu0 0
        %2916 = vmatpush1.bf16.msra.mxu0 0
        %2917 = vmatprep.subr.bf16.mxu0 0
        %2918 = vmatpush1.bf16.msra.mxu0 0
        %2919 = vmatprep.mubr.bf16.mxu0 0
        %2920 = vmatmul.mubr.bf16.gmra.mrb[0].mxu0 %v2873
        %v2921 = vpop.f32.mrb[0].mxu0
        %v2922 = vadd.f32 %v2842, %v2921
        %v2923 = vpop.f32.mrb[0].mxu0
        %v2924 = vpop.f32.mrb[0].mxu0
        %v2925 = vadd.f32 %v2845, %v2924
        %v2926 = vpop.f32.mrb[0].mxu0
        %2927 = vmatprep.mubr.bf16.mxu0 0
        %2928 = vmatmul.mubr.bf16.gmra.mrb[0].mxu0 %v2876
        %v2929 = vpop.f32.mrb[0].mxu0
        %v2930 = vadd.f32 %v2850, %v2929
        %v2931 = vpop.f32.mrb[0].mxu0
        %v2932 = vpop.f32.mrb[0].mxu0
        %v2933 = vadd.f32 %v2853, %v2932
        %v2934 = vpop.f32.mrb[0].mxu0
        %2935 = vmatprep.mubr.bf16.mxu0 0
        %2936 = vmatmul.mubr.bf16.gmra.mrb[0].mxu0 %v2879
        %v2937 = vpop.f32.mrb[0].mxu0
        %v2938 = vadd.f32 %v2858, %v2937
        %v2939 = vpop.f32.mrb[0].mxu0
        %v2940 = vpop.f32.mrb[0].mxu0
        %v2941 = vadd.f32 %v2861, %v2940
        %v2942 = vpop.f32.mrb[0].mxu0
        %2943 = vmatprep.mubr.bf16.mxu0 0
        %2944 = vmatmul.mubr.bf16.gmra.mrb[0].mxu0 %v2882
        %v2945 = vpop.f32.mrb[0].mxu0
        %v2946 = vadd.f32 %v2866, %v2945
        %v2947 = vpop.f32.mrb[0].mxu0
        %v2948 = vpop.f32.mrb[0].mxu0
        %v2949 = vadd.f32 %v2869, %v2948
        %v2950 = vpop.f32.mrb[0].mxu0
        %2951 = vdwg.mxu0
        %2952 = vrot.lane.b32.xlu0 %v1006, 112
        %v2953 = vpop.permute.xlu0 %2952
        %2954 = vrot.lane.b32.xlu0 %v1006, 80
        %v2955 = vpop.permute.xlu0 %2954
        %v2957 = vsel %vm1017, %v2953, 0
        %v2960 = vsel %vm1017, %v2955, 0
        %2962 = vmatprep.subr.bf16.mxu0 0
        %2963 = vmatpush1.bf16.xpose.msra.mxu0 %v2960
        %2964 = vmatprep.subr.bf16.mxu0 0
        %2965 = vmatpush1.bf16.xpose.msra.mxu0 0
        %2966 = vmatprep.subr.bf16.mxu0 0
        %2967 = vmatpush1.bf16.xpose.msra.mxu0 0
        %2968 = vmatprep.subr.bf16.mxu0 0
        %2969 = vmatpush1.bf16.xpose.msra.mxu0 0
        %2970 = vmatprep.subr.bf16.mxu0 0
        %2971 = vmatpush1.bf16.xpose.msra.mxu0 0
        %2972 = vmatprep.subr.bf16.mxu0 0
        %2973 = vmatpush1.bf16.xpose.msra.mxu0 0
        %2974 = vmatprep.subr.bf16.mxu0 0
        %2975 = vmatpush1.bf16.xpose.msra.mxu0 0
        %2976 = vmatprep.subr.bf16.mxu0 0
        %2977 = vmatpush1.bf16.xpose.msra.mxu0 0
        %2978 = vmatprep.subr.bf16.mxu0 0
        %2979 = vmatpush1.bf16.xpose.msra.mxu0 0
        %2980 = vmatprep.subr.bf16.mxu0 0
        %2981 = vmatpush1.bf16.xpose.msra.mxu0 0
        %2982 = vmatprep.subr.bf16.mxu0 0
        %2983 = vmatpush1.bf16.xpose.msra.mxu0 0
        %2984 = vmatprep.subr.bf16.mxu0 0
        %2985 = vmatpush1.bf16.xpose.msra.mxu0 0
        %2986 = vmatprep.subr.bf16.mxu0 0
        %2987 = vmatpush1.bf16.xpose.msra.mxu0 0
        %2988 = vmatprep.subr.bf16.mxu0 0
        %2989 = vmatpush1.bf16.xpose.msra.mxu0 0
        %2990 = vmatprep.subr.bf16.mxu0 0
        %2991 = vmatpush1.bf16.xpose.msra.mxu0 0
        %2992 = vmatprep.subr.bf16.mxu0 0
        %2993 = vmatpush1.bf16.xpose.msra.mxu0 0
        %2994 = vmatprep.mubr.bf16.mxu0 0
        %2995 = vmatmul.mubr.bf16.gmra.mrb[0].mxu0 %v2957
        %v2996 = vpop.f32.mrb[0].mxu0
        %v2997 = vadd.f32 0.0, %v2996
        %v2998 = vpop.f32.mrb[0].mxu0
        %v2999 = vpop.f32.mrb[0].mxu0
        %v3000 = vpop.f32.mrb[0].mxu0
        %3001 = vdwg.mxu0
        %3002 = vrot.lane.b32.xlu0 %v1007, 112
        %v3003 = vpop.permute.xlu0 %3002
        %3004 = vrot.lane.b32.xlu0 %v1007, 80
        %v3005 = vpop.permute.xlu0 %3004
        %v3007 = vsel %vm1017, %v3003, 0
        %v3010 = vsel %vm1017, %v3005, 0
        %3012 = vmatprep.subr.bf16.mxu0 0
        %3013 = vmatpush1.bf16.xpose.msra.mxu0 %v3010
        %3014 = vmatprep.subr.bf16.mxu0 0
        %3015 = vmatpush1.bf16.xpose.msra.mxu0 0
        %3016 = vmatprep.subr.bf16.mxu0 0
        %3017 = vmatpush1.bf16.xpose.msra.mxu0 0
        %3018 = vmatprep.subr.bf16.mxu0 0
        %3019 = vmatpush1.bf16.xpose.msra.mxu0 0
        %3020 = vmatprep.subr.bf16.mxu0 0
        %3021 = vmatpush1.bf16.xpose.msra.mxu0 0
        %3022 = vmatprep.subr.bf16.mxu0 0
        %3023 = vmatpush1.bf16.xpose.msra.mxu0 0
        %3024 = vmatprep.subr.bf16.mxu0 0
        %3025 = vmatpush1.bf16.xpose.msra.mxu0 0
        %3026 = vmatprep.subr.bf16.mxu0 0
        %3027 = vmatpush1.bf16.xpose.msra.mxu0 0
        %3028 = vmatprep.subr.bf16.mxu0 0
        %3029 = vmatpush1.bf16.xpose.msra.mxu0 0
        %3030 = vmatprep.subr.bf16.mxu0 0
        %3031 = vmatpush1.bf16.xpose.msra.mxu0 0
        %3032 = vmatprep.subr.bf16.mxu0 0
        %3033 = vmatpush1.bf16.xpose.msra.mxu0 0
        %3034 = vmatprep.subr.bf16.mxu0 0
        %3035 = vmatpush1.bf16.xpose.msra.mxu0 0
        %3036 = vmatprep.subr.bf16.mxu0 0
        %3037 = vmatpush1.bf16.xpose.msra.mxu0 0
        %3038 = vmatprep.subr.bf16.mxu0 0
        %3039 = vmatpush1.bf16.xpose.msra.mxu0 0
        %3040 = vmatprep.subr.bf16.mxu0 0
        %3041 = vmatpush1.bf16.xpose.msra.mxu0 0
        %3042 = vmatprep.subr.bf16.mxu0 0
        %3043 = vmatpush1.bf16.xpose.msra.mxu0 0
        %3044 = vmatprep.mubr.bf16.mxu0 0
        %3045 = vmatmul.mubr.bf16.gmra.mrb[0].mxu0 %v3007
        %v3046 = vpop.f32.mrb[0].mxu0
        %v3047 = vadd.f32 0.0, %v3046
        %v3048 = vpop.f32.mrb[0].mxu0
        %v3049 = vpop.f32.mrb[0].mxu0
        %v3050 = vpop.f32.mrb[0].mxu0
        %3051 = vdwg.mxu0
        %3052 = vrot.lane.b32.xlu0 %v1008, 112
        %v3053 = vpop.permute.xlu0 %3052
        %3054 = vrot.lane.b32.xlu0 %v1008, 80
        %v3055 = vpop.permute.xlu0 %3054
        %v3057 = vsel %vm1017, %v3053, 0
        %v3060 = vsel %vm1017, %v3055, 0
        %3062 = vmatprep.subr.bf16.mxu0 0
        %3063 = vmatpush1.bf16.xpose.msra.mxu0 %v3060
        %3064 = vmatprep.subr.bf16.mxu0 0
        %3065 = vmatpush1.bf16.xpose.msra.mxu0 0
        %3066 = vmatprep.subr.bf16.mxu0 0
        %3067 = vmatpush1.bf16.xpose.msra.mxu0 0
        %3068 = vmatprep.subr.bf16.mxu0 0
        %3069 = vmatpush1.bf16.xpose.msra.mxu0 0
        %3070 = vmatprep.subr.bf16.mxu0 0
        %3071 = vmatpush1.bf16.xpose.msra.mxu0 0
        %3072 = vmatprep.subr.bf16.mxu0 0
        %3073 = vmatpush1.bf16.xpose.msra.mxu0 0
        %3074 = vmatprep.subr.bf16.mxu0 0
        %3075 = vmatpush1.bf16.xpose.msra.mxu0 0
        %3076 = vmatprep.subr.bf16.mxu0 0
        %3077 = vmatpush1.bf16.xpose.msra.mxu0 0
        %3078 = vmatprep.subr.bf16.mxu0 0
        %3079 = vmatpush1.bf16.xpose.msra.mxu0 0
        %3080 = vmatprep.subr.bf16.mxu0 0
        %3081 = vmatpush1.bf16.xpose.msra.mxu0 0
        %3082 = vmatprep.subr.bf16.mxu0 0
        %3083 = vmatpush1.bf16.xpose.msra.mxu0 0
        %3084 = vmatprep.subr.bf16.mxu0 0
        %3085 = vmatpush1.bf16.xpose.msra.mxu0 0
        %3086 = vmatprep.subr.bf16.mxu0 0
        %3087 = vmatpush1.bf16.xpose.msra.mxu0 0
        %3088 = vmatprep.subr.bf16.mxu0 0
        %3089 = vmatpush1.bf16.xpose.msra.mxu0 0
        %3090 = vmatprep.subr.bf16.mxu0 0
        %3091 = vmatpush1.bf16.xpose.msra.mxu0 0
        %3092 = vmatprep.subr.bf16.mxu0 0
        %3093 = vmatpush1.bf16.xpose.msra.mxu0 0
        %3094 = vmatprep.mubr.bf16.mxu0 0
        %3095 = vmatmul.mubr.bf16.gmra.mrb[0].mxu0 %v3057
        %v3096 = vpop.f32.mrb[0].mxu0
        %v3097 = vadd.f32 0.0, %v3096
        %v3098 = vpop.f32.mrb[0].mxu0
        %v3099 = vpop.f32.mrb[0].mxu0
        %v3100 = vpop.f32.mrb[0].mxu0
        %3101 = vdwg.mxu0
        %3102 = vrot.lane.b32.xlu0 %v1009, 112
        %v3103 = vpop.permute.xlu0 %3102
        %3104 = vrot.lane.b32.xlu0 %v1009, 80
        %v3105 = vpop.permute.xlu0 %3104
        %v3107 = vsel %vm1017, %v3103, 0
        %v3110 = vsel %vm1017, %v3105, 0
        %3112 = vmatprep.subr.bf16.mxu0 0
        %3113 = vmatpush1.bf16.xpose.msra.mxu0 %v3110
        %3114 = vmatprep.subr.bf16.mxu0 0
        %3115 = vmatpush1.bf16.xpose.msra.mxu0 0
        %3116 = vmatprep.subr.bf16.mxu0 0
        %3117 = vmatpush1.bf16.xpose.msra.mxu0 0
        %3118 = vmatprep.subr.bf16.mxu0 0
        %3119 = vmatpush1.bf16.xpose.msra.mxu0 0
        %3120 = vmatprep.subr.bf16.mxu0 0
        %3121 = vmatpush1.bf16.xpose.msra.mxu0 0
        %3122 = vmatprep.subr.bf16.mxu0 0
        %3123 = vmatpush1.bf16.xpose.msra.mxu0 0
        %3124 = vmatprep.subr.bf16.mxu0 0
        %3125 = vmatpush1.bf16.xpose.msra.mxu0 0
        %3126 = vmatprep.subr.bf16.mxu0 0
        %3127 = vmatpush1.bf16.xpose.msra.mxu0 0
        %3128 = vmatprep.subr.bf16.mxu0 0
        %3129 = vmatpush1.bf16.xpose.msra.mxu0 0
        %3130 = vmatprep.subr.bf16.mxu0 0
        %3131 = vmatpush1.bf16.xpose.msra.mxu0 0
        %3132 = vmatprep.subr.bf16.mxu0 0
        %3133 = vmatpush1.bf16.xpose.msra.mxu0 0
        %3134 = vmatprep.subr.bf16.mxu0 0
        %3135 = vmatpush1.bf16.xpose.msra.mxu0 0
        %3136 = vmatprep.subr.bf16.mxu0 0
        %3137 = vmatpush1.bf16.xpose.msra.mxu0 0
        %3138 = vmatprep.subr.bf16.mxu0 0
        %3139 = vmatpush1.bf16.xpose.msra.mxu0 0
        %3140 = vmatprep.subr.bf16.mxu0 0
        %3141 = vmatpush1.bf16.xpose.msra.mxu0 0
        %3142 = vmatprep.subr.bf16.mxu0 0
        %3143 = vmatpush1.bf16.xpose.msra.mxu0 0
        %3144 = vmatprep.mubr.bf16.mxu0 0
        %3145 = vmatmul.mubr.bf16.gmra.mrb[0].mxu0 %v3107
        %v3146 = vpop.f32.mrb[0].mxu0
        %v3147 = vadd.f32 0.0, %v3146
        %v3148 = vpop.f32.mrb[0].mxu0
        %v3149 = vpop.f32.mrb[0].mxu0
        %v3150 = vpop.f32.mrb[0].mxu0
        %3151 = vdwg.mxu0
        %3152 = vrot.lane.b32.xlu0 %v1010, 112
        %v3153 = vpop.permute.xlu0 %3152
        %3154 = vrot.lane.b32.xlu0 %v1010, 80
        %v3155 = vpop.permute.xlu0 %3154
        %v3157 = vsel %vm1017, %v3153, 0
        %v3160 = vsel %vm1017, %v3155, 0
        %3162 = vmatprep.subr.bf16.mxu0 0
        %3163 = vmatpush1.bf16.xpose.msra.mxu0 %v3160
        %3164 = vmatprep.subr.bf16.mxu0 0
        %3165 = vmatpush1.bf16.xpose.msra.mxu0 0
        %3166 = vmatprep.subr.bf16.mxu0 0
        %3167 = vmatpush1.bf16.xpose.msra.mxu0 0
        %3168 = vmatprep.subr.bf16.mxu0 0
        %3169 = vmatpush1.bf16.xpose.msra.mxu0 0
        %3170 = vmatprep.subr.bf16.mxu0 0
        %3171 = vmatpush1.bf16.xpose.msra.mxu0 0
        %3172 = vmatprep.subr.bf16.mxu0 0
        %3173 = vmatpush1.bf16.xpose.msra.mxu0 0
        %3174 = vmatprep.subr.bf16.mxu0 0
        %3175 = vmatpush1.bf16.xpose.msra.mxu0 0
        %3176 = vmatprep.subr.bf16.mxu0 0
        %3177 = vmatpush1.bf16.xpose.msra.mxu0 0
        %3178 = vmatprep.subr.bf16.mxu0 0
        %3179 = vmatpush1.bf16.xpose.msra.mxu0 0
        %3180 = vmatprep.subr.bf16.mxu0 0
        %3181 = vmatpush1.bf16.xpose.msra.mxu0 0
        %3182 = vmatprep.subr.bf16.mxu0 0
        %3183 = vmatpush1.bf16.xpose.msra.mxu0 0
        %3184 = vmatprep.subr.bf16.mxu0 0
        %3185 = vmatpush1.bf16.xpose.msra.mxu0 0
        %3186 = vmatprep.subr.bf16.mxu0 0
        %3187 = vmatpush1.bf16.xpose.msra.mxu0 0
        %3188 = vmatprep.subr.bf16.mxu0 0
        %3189 = vmatpush1.bf16.xpose.msra.mxu0 0
        %3190 = vmatprep.subr.bf16.mxu0 0
        %3191 = vmatpush1.bf16.xpose.msra.mxu0 0
        %3192 = vmatprep.subr.bf16.mxu0 0
        %3193 = vmatpush1.bf16.xpose.msra.mxu0 0
        %3194 = vmatprep.mubr.bf16.mxu0 0
        %3195 = vmatmul.mubr.bf16.gmra.mrb[0].mxu0 %v3157
        %v3196 = vpop.f32.mrb[0].mxu0
        %v3197 = vadd.f32 0.0, %v3196
        %v3198 = vpop.f32.mrb[0].mxu0
        %v3199 = vpop.f32.mrb[0].mxu0
        %v3200 = vpop.f32.mrb[0].mxu0
        %3201 = vdwg.mxu0
        %3202 = vrot.lane.b32.xlu0 %v1011, 112
        %v3203 = vpop.permute.xlu0 %3202
        %3204 = vrot.lane.b32.xlu0 %v1011, 80
        %v3205 = vpop.permute.xlu0 %3204
        %v3207 = vsel %vm1017, %v3203, 0
        %v3210 = vsel %vm1017, %v3205, 0
        %3212 = vmatprep.subr.bf16.mxu0 0
        %3213 = vmatpush1.bf16.xpose.msra.mxu0 %v3210
        %3214 = vmatprep.subr.bf16.mxu0 0
        %3215 = vmatpush1.bf16.xpose.msra.mxu0 0
        %3216 = vmatprep.subr.bf16.mxu0 0
        %3217 = vmatpush1.bf16.xpose.msra.mxu0 0
        %3218 = vmatprep.subr.bf16.mxu0 0
        %3219 = vmatpush1.bf16.xpose.msra.mxu0 0
        %3220 = vmatprep.subr.bf16.mxu0 0
        %3221 = vmatpush1.bf16.xpose.msra.mxu0 0
        %3222 = vmatprep.subr.bf16.mxu0 0
        %3223 = vmatpush1.bf16.xpose.msra.mxu0 0
        %3224 = vmatprep.subr.bf16.mxu0 0
        %3225 = vmatpush1.bf16.xpose.msra.mxu0 0
        %3226 = vmatprep.subr.bf16.mxu0 0
        %3227 = vmatpush1.bf16.xpose.msra.mxu0 0
        %3228 = vmatprep.subr.bf16.mxu0 0
        %3229 = vmatpush1.bf16.xpose.msra.mxu0 0
        %3230 = vmatprep.subr.bf16.mxu0 0
        %3231 = vmatpush1.bf16.xpose.msra.mxu0 0
        %3232 = vmatprep.subr.bf16.mxu0 0
        %3233 = vmatpush1.bf16.xpose.msra.mxu0 0
        %3234 = vmatprep.subr.bf16.mxu0 0
        %3235 = vmatpush1.bf16.xpose.msra.mxu0 0
        %3236 = vmatprep.subr.bf16.mxu0 0
        %3237 = vmatpush1.bf16.xpose.msra.mxu0 0
        %3238 = vmatprep.subr.bf16.mxu0 0
        %3239 = vmatpush1.bf16.xpose.msra.mxu0 0
        %3240 = vmatprep.subr.bf16.mxu0 0
        %3241 = vmatpush1.bf16.xpose.msra.mxu0 0
        %3242 = vmatprep.subr.bf16.mxu0 0
        %3243 = vmatpush1.bf16.xpose.msra.mxu0 0
        %3244 = vmatprep.mubr.bf16.mxu0 0
        %3245 = vmatmul.mubr.bf16.gmra.mrb[0].mxu0 %v3207
        %v3246 = vpop.f32.mrb[0].mxu0
        %v3247 = vadd.f32 0.0, %v3246
        %v3248 = vpop.f32.mrb[0].mxu0
        %v3249 = vpop.f32.mrb[0].mxu0
        %v3250 = vpop.f32.mrb[0].mxu0
        %3251 = vdwg.mxu0
        %3252 = vrot.lane.b32.xlu0 %v1012, 112
        %v3253 = vpop.permute.xlu0 %3252
        %3254 = vrot.lane.b32.xlu0 %v1012, 80
        %v3255 = vpop.permute.xlu0 %3254
        %v3257 = vsel %vm1017, %v3253, 0
        %v3260 = vsel %vm1017, %v3255, 0
        %3262 = vmatprep.subr.bf16.mxu0 0
        %3263 = vmatpush1.bf16.xpose.msra.mxu0 %v3260
        %3264 = vmatprep.subr.bf16.mxu0 0
        %3265 = vmatpush1.bf16.xpose.msra.mxu0 0
        %3266 = vmatprep.subr.bf16.mxu0 0
        %3267 = vmatpush1.bf16.xpose.msra.mxu0 0
        %3268 = vmatprep.subr.bf16.mxu0 0
        %3269 = vmatpush1.bf16.xpose.msra.mxu0 0
        %3270 = vmatprep.subr.bf16.mxu0 0
        %3271 = vmatpush1.bf16.xpose.msra.mxu0 0
        %3272 = vmatprep.subr.bf16.mxu0 0
        %3273 = vmatpush1.bf16.xpose.msra.mxu0 0
        %3274 = vmatprep.subr.bf16.mxu0 0
        %3275 = vmatpush1.bf16.xpose.msra.mxu0 0
        %3276 = vmatprep.subr.bf16.mxu0 0
        %3277 = vmatpush1.bf16.xpose.msra.mxu0 0
        %3278 = vmatprep.subr.bf16.mxu0 0
        %3279 = vmatpush1.bf16.xpose.msra.mxu0 0
        %3280 = vmatprep.subr.bf16.mxu0 0
        %3281 = vmatpush1.bf16.xpose.msra.mxu0 0
        %3282 = vmatprep.subr.bf16.mxu0 0
        %3283 = vmatpush1.bf16.xpose.msra.mxu0 0
        %3284 = vmatprep.subr.bf16.mxu0 0
        %3285 = vmatpush1.bf16.xpose.msra.mxu0 0
        %3286 = vmatprep.subr.bf16.mxu0 0
        %3287 = vmatpush1.bf16.xpose.msra.mxu0 0
        %3288 = vmatprep.subr.bf16.mxu0 0
        %3289 = vmatpush1.bf16.xpose.msra.mxu0 0
        %3290 = vmatprep.subr.bf16.mxu0 0
        %3291 = vmatpush1.bf16.xpose.msra.mxu0 0
        %3292 = vmatprep.subr.bf16.mxu0 0
        %3293 = vmatpush1.bf16.xpose.msra.mxu0 0
        %3294 = vmatprep.mubr.bf16.mxu0 0
        %3295 = vmatmul.mubr.bf16.gmra.mrb[0].mxu0 %v3257
        %v3296 = vpop.f32.mrb[0].mxu0
        %v3297 = vadd.f32 0.0, %v3296
        %v3298 = vpop.f32.mrb[0].mxu0
        %v3299 = vpop.f32.mrb[0].mxu0
        %v3300 = vpop.f32.mrb[0].mxu0
        %3301 = vdwg.mxu0
        %3302 = vrot.lane.b32.xlu0 %v1013, 112
        %v3303 = vpop.permute.xlu0 %3302
        %3304 = vrot.lane.b32.xlu0 %v1013, 80
        %v3305 = vpop.permute.xlu0 %3304
        %v3307 = vsel %vm1017, %v3303, 0
        %v3310 = vsel %vm1017, %v3305, 0
        %3312 = vmatprep.subr.bf16.mxu0 0
        %3313 = vmatpush1.bf16.xpose.msra.mxu0 %v3310
        %3314 = vmatprep.subr.bf16.mxu0 0
        %3315 = vmatpush1.bf16.xpose.msra.mxu0 0
        %3316 = vmatprep.subr.bf16.mxu0 0
        %3317 = vmatpush1.bf16.xpose.msra.mxu0 0
        %3318 = vmatprep.subr.bf16.mxu0 0
        %3319 = vmatpush1.bf16.xpose.msra.mxu0 0
        %3320 = vmatprep.subr.bf16.mxu0 0
        %3321 = vmatpush1.bf16.xpose.msra.mxu0 0
        %3322 = vmatprep.subr.bf16.mxu0 0
        %3323 = vmatpush1.bf16.xpose.msra.mxu0 0
        %3324 = vmatprep.subr.bf16.mxu0 0
        %3325 = vmatpush1.bf16.xpose.msra.mxu0 0
        %3326 = vmatprep.subr.bf16.mxu0 0
        %3327 = vmatpush1.bf16.xpose.msra.mxu0 0
        %3328 = vmatprep.subr.bf16.mxu0 0
        %3329 = vmatpush1.bf16.xpose.msra.mxu0 0
        %3330 = vmatprep.subr.bf16.mxu0 0
        %3331 = vmatpush1.bf16.xpose.msra.mxu0 0
        %3332 = vmatprep.subr.bf16.mxu0 0
        %3333 = vmatpush1.bf16.xpose.msra.mxu0 0
        %3334 = vmatprep.subr.bf16.mxu0 0
        %3335 = vmatpush1.bf16.xpose.msra.mxu0 0
        %3336 = vmatprep.subr.bf16.mxu0 0
        %3337 = vmatpush1.bf16.xpose.msra.mxu0 0
        %3338 = vmatprep.subr.bf16.mxu0 0
        %3339 = vmatpush1.bf16.xpose.msra.mxu0 0
        %3340 = vmatprep.subr.bf16.mxu0 0
        %3341 = vmatpush1.bf16.xpose.msra.mxu0 0
        %3342 = vmatprep.subr.bf16.mxu0 0
        %3343 = vmatpush1.bf16.xpose.msra.mxu0 0
        %3344 = vmatprep.mubr.bf16.mxu0 0
        %3345 = vmatmul.mubr.bf16.gmra.mrb[0].mxu0 %v3307
        %v3346 = vpop.f32.mrb[0].mxu0
        %v3347 = vadd.f32 0.0, %v3346
        %v3348 = vpop.f32.mrb[0].mxu0
        %v3349 = vpop.f32.mrb[0].mxu0
        %v3350 = vpop.f32.mrb[0].mxu0
        %3351 = vdwg.mxu0
        %v3352 = vmul.f32 %v2997, 0.35355338
        %v3353 = vmul.f32 %v3047, 0.35355338
        %v3354 = vmul.f32 %v3097, 0.35355338
        %v3355 = vmul.f32 %v3147, 0.35355338
        %v3356 = vmul.f32 %v3197, 0.35355338
        %v3357 = vmul.f32 %v3247, 0.35355338
        %v3358 = vmul.f32 %v3297, 0.35355338
        %v3359 = vmul.f32 %v3347, 0.35355338
        %v3360 = vsel %vm1017, %v3352, -inf
        %3361 = vmax.xlane.f32.xlu0 %v3360
        %v3362 = vpop.xlane.xlu0 %3361
        %v3363 = vsel %vm1017, %v3353, -inf
        %3364 = vmax.xlane.f32.xlu0 %v3363
        %v3365 = vpop.xlane.xlu0 %3364
        %v3366 = vsel %vm1017, %v3354, -inf
        %3367 = vmax.xlane.f32.xlu0 %v3366
        %v3368 = vpop.xlane.xlu0 %3367
        %v3369 = vsel %vm1017, %v3355, -inf
        %3370 = vmax.xlane.f32.xlu0 %v3369
        %v3371 = vpop.xlane.xlu0 %3370
        %v3372 = vsel %vm1017, %v3356, -inf
        %3373 = vmax.xlane.f32.xlu0 %v3372
        %v3374 = vpop.xlane.xlu0 %3373
        %v3375 = vsel %vm1017, %v3357, -inf
        %3376 = vmax.xlane.f32.xlu0 %v3375
        %v3377 = vpop.xlane.xlu0 %3376
        %v3378 = vsel %vm1017, %v3358, -inf
        %3379 = vmax.xlane.f32.xlu0 %v3378
        %v3380 = vpop.xlane.xlu0 %3379
        %v3381 = vsel %vm1017, %v3359, -inf
        %3382 = vmax.xlane.f32.xlu0 %v3381
        %v3383 = vpop.xlane.xlu0 %3382
        %v3384 = vsub.f32 %v3352, %v3362
        %v3385 = vsub.f32 %v3353, %v3365
        %v3386 = vsub.f32 %v3354, %v3368
        %v3387 = vsub.f32 %v3355, %v3371
        %v3388 = vsub.f32 %v3356, %v3374
        %v3389 = vsub.f32 %v3357, %v3377
        %v3390 = vsub.f32 %v3358, %v3380
        %v3391 = vsub.f32 %v3359, %v3383
        %v3392 = vmul.f32 %v3384, 1.442695
        %v3393 = vpow.pop %v3392
        %v3394 = vmul.f32 %v3385, 1.442695
        %v3395 = vpow.pop %v3394
        %v3396 = vmul.f32 %v3386, 1.442695
        %v3397 = vpow.pop %v3396
        %v3398 = vmul.f32 %v3387, 1.442695
        %v3399 = vpow.pop %v3398
        %v3400 = vmul.f32 %v3388, 1.442695
        %v3401 = vpow.pop %v3400
        %v3402 = vmul.f32 %v3389, 1.442695
        %v3403 = vpow.pop %v3402
        %v3404 = vmul.f32 %v3390, 1.442695
        %v3405 = vpow.pop %v3404
        %v3406 = vmul.f32 %v3391, 1.442695
        %v3407 = vpow.pop %v3406
        %v3408 = vsel %vm1017, %v3393, 0.0
        %3409 = vadd.xlane.f32.xlu0 %v3408
        %v3410 = vpop.xlane.xlu0 %3409
        %v3411 = vsel %vm1017, %v3395, 0.0
        %3412 = vadd.xlane.f32.xlu0 %v3411
        %v3413 = vpop.xlane.xlu0 %3412
        %v3414 = vsel %vm1017, %v3397, 0.0
        %3415 = vadd.xlane.f32.xlu0 %v3414
        %v3416 = vpop.xlane.xlu0 %3415
        %v3417 = vsel %vm1017, %v3399, 0.0
        %3418 = vadd.xlane.f32.xlu0 %v3417
        %v3419 = vpop.xlane.xlu0 %3418
        %v3420 = vsel %vm1017, %v3401, 0.0
        %3421 = vadd.xlane.f32.xlu0 %v3420
        %v3422 = vpop.xlane.xlu0 %3421
        %v3423 = vsel %vm1017, %v3403, 0.0
        %3424 = vadd.xlane.f32.xlu0 %v3423
        %v3425 = vpop.xlane.xlu0 %3424
        %v3426 = vsel %vm1017, %v3405, 0.0
        %3427 = vadd.xlane.f32.xlu0 %v3426
        %v3428 = vpop.xlane.xlu0 %3427
        %v3429 = vsel %vm1017, %v3407, 0.0
        %3430 = vadd.xlane.f32.xlu0 %v3429
        %v3431 = vpop.xlane.xlu0 %3430
        %v3432 = vrcp.pop %v3410
        %v3433 = vrcp.pop %v3413
        %v3434 = vrcp.pop %v3416
        %v3435 = vrcp.pop %v3419
        %v3436 = vrcp.pop %v3422
        %v3437 = vrcp.pop %v3425
        %v3438 = vrcp.pop %v3428
        %v3439 = vrcp.pop %v3431
        %v3440 = vmul.f32 %v3393, %v3432
        %v3441 = vmul.f32 %v3395, %v3433
        %v3442 = vmul.f32 %v3397, %v3434
        %v3443 = vmul.f32 %v3399, %v3435
        %v3444 = vmul.f32 %v3401, %v3436
        %v3445 = vmul.f32 %v3403, %v3437
        %v3446 = vmul.f32 %v3405, %v3438
        %v3447 = vmul.f32 %v3407, %v3439
        %v3448 = vpack.c.bf16 %v3440, %v3440
        %v3449 = vpack.c.bf16 %v3441, %v3441
        %v3450 = vpack.c.bf16 %v3442, %v3442
        %v3451 = vpack.c.bf16 %v3443, %v3443
        %v3452 = vpack.c.bf16 %v3444, %v3444
        %v3453 = vpack.c.bf16 %v3445, %v3445
        %v3454 = vpack.c.bf16 %v3446, %v3446
        %v3455 = vpack.c.bf16 %v3447, %v3447
        %3456 = vrot.lane.b32.xlu0 %v1006, 48
        %v3457 = vpop.permute.xlu0 %3456
        %v3459 = vsel %vm1017, %v3448, 0
        %v3462 = vsel %vm1516, %v3457, 0
        %3464 = vmatprep.subr.bf16.mxu0 0
        %3465 = vmatpush1.bf16.msra.mxu0 %v3462
        %3466 = vmatprep.subr.bf16.mxu0 0
        %3467 = vmatpush1.bf16.msra.mxu0 0
        %3468 = vmatprep.subr.bf16.mxu0 0
        %3469 = vmatpush1.bf16.msra.mxu0 0
        %3470 = vmatprep.subr.bf16.mxu0 0
        %3471 = vmatpush1.bf16.msra.mxu0 0
        %3472 = vmatprep.subr.bf16.mxu0 0
        %3473 = vmatpush1.bf16.msra.mxu0 0
        %3474 = vmatprep.subr.bf16.mxu0 0
        %3475 = vmatpush1.bf16.msra.mxu0 0
        %3476 = vmatprep.subr.bf16.mxu0 0
        %3477 = vmatpush1.bf16.msra.mxu0 0
        %3478 = vmatprep.subr.bf16.mxu0 0
        %3479 = vmatpush1.bf16.msra.mxu0 0
        %3480 = vmatprep.subr.bf16.mxu0 0
        %3481 = vmatpush1.bf16.msra.mxu0 0
        %3482 = vmatprep.subr.bf16.mxu0 0
        %3483 = vmatpush1.bf16.msra.mxu0 0
        %3484 = vmatprep.subr.bf16.mxu0 0
        %3485 = vmatpush1.bf16.msra.mxu0 0
        %3486 = vmatprep.subr.bf16.mxu0 0
        %3487 = vmatpush1.bf16.msra.mxu0 0
        %3488 = vmatprep.subr.bf16.mxu0 0
        %3489 = vmatpush1.bf16.msra.mxu0 0
        %3490 = vmatprep.subr.bf16.mxu0 0
        %3491 = vmatpush1.bf16.msra.mxu0 0
        %3492 = vmatprep.subr.bf16.mxu0 0
        %3493 = vmatpush1.bf16.msra.mxu0 0
        %3494 = vmatprep.subr.bf16.mxu0 0
        %3495 = vmatpush1.bf16.msra.mxu0 0
        %3496 = vmatprep.mubr.bf16.mxu0 0
        %3497 = vmatmul.mubr.bf16.gmra.mrb[0].mxu0 %v3459
        %v3498 = vpop.f32.mrb[0].mxu0
        %v3499 = vadd.f32 0.0, %v3498
        %v3500 = vpop.f32.mrb[0].mxu0
        %v3501 = vpop.f32.mrb[0].mxu0
        %v3502 = vpop.f32.mrb[0].mxu0
        %3503 = vdwg.mxu0
        %3504 = vrot.lane.b32.xlu0 %v1007, 48
        %v3505 = vpop.permute.xlu0 %3504
        %v3507 = vsel %vm1017, %v3449, 0
        %v3510 = vsel %vm1516, %v3505, 0
        %3512 = vmatprep.subr.bf16.mxu0 0
        %3513 = vmatpush1.bf16.msra.mxu0 %v3510
        %3514 = vmatprep.subr.bf16.mxu0 0
        %3515 = vmatpush1.bf16.msra.mxu0 0
        %3516 = vmatprep.subr.bf16.mxu0 0
        %3517 = vmatpush1.bf16.msra.mxu0 0
        %3518 = vmatprep.subr.bf16.mxu0 0
        %3519 = vmatpush1.bf16.msra.mxu0 0
        %3520 = vmatprep.subr.bf16.mxu0 0
        %3521 = vmatpush1.bf16.msra.mxu0 0
        %3522 = vmatprep.subr.bf16.mxu0 0
        %3523 = vmatpush1.bf16.msra.mxu0 0
        %3524 = vmatprep.subr.bf16.mxu0 0
        %3525 = vmatpush1.bf16.msra.mxu0 0
        %3526 = vmatprep.subr.bf16.mxu0 0
        %3527 = vmatpush1.bf16.msra.mxu0 0
        %3528 = vmatprep.subr.bf16.mxu0 0
        %3529 = vmatpush1.bf16.msra.mxu0 0
        %3530 = vmatprep.subr.bf16.mxu0 0
        %3531 = vmatpush1.bf16.msra.mxu0 0
        %3532 = vmatprep.subr.bf16.mxu0 0
        %3533 = vmatpush1.bf16.msra.mxu0 0
        %3534 = vmatprep.subr.bf16.mxu0 0
        %3535 = vmatpush1.bf16.msra.mxu0 0
        %3536 = vmatprep.subr.bf16.mxu0 0
        %3537 = vmatpush1.bf16.msra.mxu0 0
        %3538 = vmatprep.subr.bf16.mxu0 0
        %3539 = vmatpush1.bf16.msra.mxu0 0
        %3540 = vmatprep.subr.bf16.mxu0 0
        %3541 = vmatpush1.bf16.msra.mxu0 0
        %3542 = vmatprep.subr.bf16.mxu0 0
        %3543 = vmatpush1.bf16.msra.mxu0 0
        %3544 = vmatprep.mubr.bf16.mxu0 0
        %3545 = vmatmul.mubr.bf16.gmra.mrb[0].mxu0 %v3507
        %v3546 = vpop.f32.mrb[0].mxu0
        %v3547 = vadd.f32 0.0, %v3546
        %v3548 = vpop.f32.mrb[0].mxu0
        %v3549 = vpop.f32.mrb[0].mxu0
        %v3550 = vpop.f32.mrb[0].mxu0
        %3551 = vdwg.mxu0
        %3552 = vrot.lane.b32.xlu0 %v1008, 48
        %v3553 = vpop.permute.xlu0 %3552
        %v3555 = vsel %vm1017, %v3450, 0
        %v3558 = vsel %vm1516, %v3553, 0
        %3560 = vmatprep.subr.bf16.mxu0 0
        %3561 = vmatpush1.bf16.msra.mxu0 %v3558
        %3562 = vmatprep.subr.bf16.mxu0 0
        %3563 = vmatpush1.bf16.msra.mxu0 0
        %3564 = vmatprep.subr.bf16.mxu0 0
        %3565 = vmatpush1.bf16.msra.mxu0 0
        %3566 = vmatprep.subr.bf16.mxu0 0
        %3567 = vmatpush1.bf16.msra.mxu0 0
        %3568 = vmatprep.subr.bf16.mxu0 0
        %3569 = vmatpush1.bf16.msra.mxu0 0
        %3570 = vmatprep.subr.bf16.mxu0 0
        %3571 = vmatpush1.bf16.msra.mxu0 0
        %3572 = vmatprep.subr.bf16.mxu0 0
        %3573 = vmatpush1.bf16.msra.mxu0 0
        %3574 = vmatprep.subr.bf16.mxu0 0
        %3575 = vmatpush1.bf16.msra.mxu0 0
        %3576 = vmatprep.subr.bf16.mxu0 0
        %3577 = vmatpush1.bf16.msra.mxu0 0
        %3578 = vmatprep.subr.bf16.mxu0 0
        %3579 = vmatpush1.bf16.msra.mxu0 0
        %3580 = vmatprep.subr.bf16.mxu0 0
        %3581 = vmatpush1.bf16.msra.mxu0 0
        %3582 = vmatprep.subr.bf16.mxu0 0
        %3583 = vmatpush1.bf16.msra.mxu0 0
        %3584 = vmatprep.subr.bf16.mxu0 0
        %3585 = vmatpush1.bf16.msra.mxu0 0
        %3586 = vmatprep.subr.bf16.mxu0 0
        %3587 = vmatpush1.bf16.msra.mxu0 0
        %3588 = vmatprep.subr.bf16.mxu0 0
        %3589 = vmatpush1.bf16.msra.mxu0 0
        %3590 = vmatprep.subr.bf16.mxu0 0
        %3591 = vmatpush1.bf16.msra.mxu0 0
        %3592 = vmatprep.mubr.bf16.mxu0 0
        %3593 = vmatmul.mubr.bf16.gmra.mrb[0].mxu0 %v3555
        %v3594 = vpop.f32.mrb[0].mxu0
        %v3595 = vadd.f32 0.0, %v3594
        %v3596 = vpop.f32.mrb[0].mxu0
        %v3597 = vpop.f32.mrb[0].mxu0
        %v3598 = vpop.f32.mrb[0].mxu0
        %3599 = vdwg.mxu0
        %3600 = vrot.lane.b32.xlu0 %v1009, 48
        %v3601 = vpop.permute.xlu0 %3600
        %v3603 = vsel %vm1017, %v3451, 0
        %v3606 = vsel %vm1516, %v3601, 0
        %3608 = vmatprep.subr.bf16.mxu0 0
        %3609 = vmatpush1.bf16.msra.mxu0 %v3606
        %3610 = vmatprep.subr.bf16.mxu0 0
        %3611 = vmatpush1.bf16.msra.mxu0 0
        %3612 = vmatprep.subr.bf16.mxu0 0
        %3613 = vmatpush1.bf16.msra.mxu0 0
        %3614 = vmatprep.subr.bf16.mxu0 0
        %3615 = vmatpush1.bf16.msra.mxu0 0
        %3616 = vmatprep.subr.bf16.mxu0 0
        %3617 = vmatpush1.bf16.msra.mxu0 0
        %3618 = vmatprep.subr.bf16.mxu0 0
        %3619 = vmatpush1.bf16.msra.mxu0 0
        %3620 = vmatprep.subr.bf16.mxu0 0
        %3621 = vmatpush1.bf16.msra.mxu0 0
        %3622 = vmatprep.subr.bf16.mxu0 0
        %3623 = vmatpush1.bf16.msra.mxu0 0
        %3624 = vmatprep.subr.bf16.mxu0 0
        %3625 = vmatpush1.bf16.msra.mxu0 0
        %3626 = vmatprep.subr.bf16.mxu0 0
        %3627 = vmatpush1.bf16.msra.mxu0 0
        %3628 = vmatprep.subr.bf16.mxu0 0
        %3629 = vmatpush1.bf16.msra.mxu0 0
        %3630 = vmatprep.subr.bf16.mxu0 0
        %3631 = vmatpush1.bf16.msra.mxu0 0
        %3632 = vmatprep.subr.bf16.mxu0 0
        %3633 = vmatpush1.bf16.msra.mxu0 0
        %3634 = vmatprep.subr.bf16.mxu0 0
        %3635 = vmatpush1.bf16.msra.mxu0 0
        %3636 = vmatprep.subr.bf16.mxu0 0
        %3637 = vmatpush1.bf16.msra.mxu0 0
        %3638 = vmatprep.subr.bf16.mxu0 0
        %3639 = vmatpush1.bf16.msra.mxu0 0
        %3640 = vmatprep.mubr.bf16.mxu0 0
        %3641 = vmatmul.mubr.bf16.gmra.mrb[0].mxu0 %v3603
        %v3642 = vpop.f32.mrb[0].mxu0
        %v3643 = vadd.f32 0.0, %v3642
        %v3644 = vpop.f32.mrb[0].mxu0
        %v3645 = vpop.f32.mrb[0].mxu0
        %v3646 = vpop.f32.mrb[0].mxu0
        %3647 = vdwg.mxu0
        %3648 = vrot.lane.b32.xlu0 %v1010, 48
        %v3649 = vpop.permute.xlu0 %3648
        %v3651 = vsel %vm1017, %v3452, 0
        %v3654 = vsel %vm1516, %v3649, 0
        %3656 = vmatprep.subr.bf16.mxu0 0
        %3657 = vmatpush1.bf16.msra.mxu0 %v3654
        %3658 = vmatprep.subr.bf16.mxu0 0
        %3659 = vmatpush1.bf16.msra.mxu0 0
        %3660 = vmatprep.subr.bf16.mxu0 0
        %3661 = vmatpush1.bf16.msra.mxu0 0
        %3662 = vmatprep.subr.bf16.mxu0 0
        %3663 = vmatpush1.bf16.msra.mxu0 0
        %3664 = vmatprep.subr.bf16.mxu0 0
        %3665 = vmatpush1.bf16.msra.mxu0 0
        %3666 = vmatprep.subr.bf16.mxu0 0
        %3667 = vmatpush1.bf16.msra.mxu0 0
        %3668 = vmatprep.subr.bf16.mxu0 0
        %3669 = vmatpush1.bf16.msra.mxu0 0
        %3670 = vmatprep.subr.bf16.mxu0 0
        %3671 = vmatpush1.bf16.msra.mxu0 0
        %3672 = vmatprep.subr.bf16.mxu0 0
        %3673 = vmatpush1.bf16.msra.mxu0 0
        %3674 = vmatprep.subr.bf16.mxu0 0
        %3675 = vmatpush1.bf16.msra.mxu0 0
        %3676 = vmatprep.subr.bf16.mxu0 0
        %3677 = vmatpush1.bf16.msra.mxu0 0
        %3678 = vmatprep.subr.bf16.mxu0 0
        %3679 = vmatpush1.bf16.msra.mxu0 0
        %3680 = vmatprep.subr.bf16.mxu0 0
        %3681 = vmatpush1.bf16.msra.mxu0 0
        %3682 = vmatprep.subr.bf16.mxu0 0
        %3683 = vmatpush1.bf16.msra.mxu0 0
        %3684 = vmatprep.subr.bf16.mxu0 0
        %3685 = vmatpush1.bf16.msra.mxu0 0
        %3686 = vmatprep.subr.bf16.mxu0 0
        %3687 = vmatpush1.bf16.msra.mxu0 0
        %3688 = vmatprep.mubr.bf16.mxu0 0
        %3689 = vmatmul.mubr.bf16.gmra.mrb[0].mxu0 %v3651
        %v3690 = vpop.f32.mrb[0].mxu0
        %v3691 = vadd.f32 0.0, %v3690
        %v3692 = vpop.f32.mrb[0].mxu0
        %v3693 = vpop.f32.mrb[0].mxu0
        %v3694 = vpop.f32.mrb[0].mxu0
        %3695 = vdwg.mxu0
        %3696 = vrot.lane.b32.xlu0 %v1011, 48
        %v3697 = vpop.permute.xlu0 %3696
        %v3699 = vsel %vm1017, %v3453, 0
        %v3702 = vsel %vm1516, %v3697, 0
        %3704 = vmatprep.subr.bf16.mxu0 0
        %3705 = vmatpush1.bf16.msra.mxu0 %v3702
        %3706 = vmatprep.subr.bf16.mxu0 0
        %3707 = vmatpush1.bf16.msra.mxu0 0
        %3708 = vmatprep.subr.bf16.mxu0 0
        %3709 = vmatpush1.bf16.msra.mxu0 0
        %3710 = vmatprep.subr.bf16.mxu0 0
        %3711 = vmatpush1.bf16.msra.mxu0 0
        %3712 = vmatprep.subr.bf16.mxu0 0
        %3713 = vmatpush1.bf16.msra.mxu0 0
        %3714 = vmatprep.subr.bf16.mxu0 0
        %3715 = vmatpush1.bf16.msra.mxu0 0
        %3716 = vmatprep.subr.bf16.mxu0 0
        %3717 = vmatpush1.bf16.msra.mxu0 0
        %3718 = vmatprep.subr.bf16.mxu0 0
        %3719 = vmatpush1.bf16.msra.mxu0 0
        %3720 = vmatprep.subr.bf16.mxu0 0
        %3721 = vmatpush1.bf16.msra.mxu0 0
        %3722 = vmatprep.subr.bf16.mxu0 0
        %3723 = vmatpush1.bf16.msra.mxu0 0
        %3724 = vmatprep.subr.bf16.mxu0 0
        %3725 = vmatpush1.bf16.msra.mxu0 0
        %3726 = vmatprep.subr.bf16.mxu0 0
        %3727 = vmatpush1.bf16.msra.mxu0 0
        %3728 = vmatprep.subr.bf16.mxu0 0
        %3729 = vmatpush1.bf16.msra.mxu0 0
        %3730 = vmatprep.subr.bf16.mxu0 0
        %3731 = vmatpush1.bf16.msra.mxu0 0
        %3732 = vmatprep.subr.bf16.mxu0 0
        %3733 = vmatpush1.bf16.msra.mxu0 0
        %3734 = vmatprep.subr.bf16.mxu0 0
        %3735 = vmatpush1.bf16.msra.mxu0 0
        %3736 = vmatprep.mubr.bf16.mxu0 0
        %3737 = vmatmul.mubr.bf16.gmra.mrb[0].mxu0 %v3699
        %v3738 = vpop.f32.mrb[0].mxu0
        %v3739 = vadd.f32 0.0, %v3738
        %v3740 = vpop.f32.mrb[0].mxu0
        %v3741 = vpop.f32.mrb[0].mxu0
        %v3742 = vpop.f32.mrb[0].mxu0
        %3743 = vdwg.mxu0
        %3744 = vrot.lane.b32.xlu0 %v1012, 48
        %v3745 = vpop.permute.xlu0 %3744
        %v3747 = vsel %vm1017, %v3454, 0
        %v3750 = vsel %vm1516, %v3745, 0
        %3752 = vmatprep.subr.bf16.mxu0 0
        %3753 = vmatpush1.bf16.msra.mxu0 %v3750
        %3754 = vmatprep.subr.bf16.mxu0 0
        %3755 = vmatpush1.bf16.msra.mxu0 0
        %3756 = vmatprep.subr.bf16.mxu0 0
        %3757 = vmatpush1.bf16.msra.mxu0 0
        %3758 = vmatprep.subr.bf16.mxu0 0
        %3759 = vmatpush1.bf16.msra.mxu0 0
        %3760 = vmatprep.subr.bf16.mxu0 0
        %3761 = vmatpush1.bf16.msra.mxu0 0
        %3762 = vmatprep.subr.bf16.mxu0 0
        %3763 = vmatpush1.bf16.msra.mxu0 0
        %3764 = vmatprep.subr.bf16.mxu0 0
        %3765 = vmatpush1.bf16.msra.mxu0 0
        %3766 = vmatprep.subr.bf16.mxu0 0
        %3767 = vmatpush1.bf16.msra.mxu0 0
        %3768 = vmatprep.subr.bf16.mxu0 0
        %3769 = vmatpush1.bf16.msra.mxu0 0
        %3770 = vmatprep.subr.bf16.mxu0 0
        %3771 = vmatpush1.bf16.msra.mxu0 0
        %3772 = vmatprep.subr.bf16.mxu0 0
        %3773 = vmatpush1.bf16.msra.mxu0 0
        %3774 = vmatprep.subr.bf16.mxu0 0
        %3775 = vmatpush1.bf16.msra.mxu0 0
        %3776 = vmatprep.subr.bf16.mxu0 0
        %3777 = vmatpush1.bf16.msra.mxu0 0
        %3778 = vmatprep.subr.bf16.mxu0 0
        %3779 = vmatpush1.bf16.msra.mxu0 0
        %3780 = vmatprep.subr.bf16.mxu0 0
        %3781 = vmatpush1.bf16.msra.mxu0 0
        %3782 = vmatprep.subr.bf16.mxu0 0
        %3783 = vmatpush1.bf16.msra.mxu0 0
        %3784 = vmatprep.mubr.bf16.mxu0 0
        %3785 = vmatmul.mubr.bf16.gmra.mrb[0].mxu0 %v3747
        %v3786 = vpop.f32.mrb[0].mxu0
        %v3787 = vadd.f32 0.0, %v3786
        %v3788 = vpop.f32.mrb[0].mxu0
        %v3789 = vpop.f32.mrb[0].mxu0
        %v3790 = vpop.f32.mrb[0].mxu0
        %3791 = vdwg.mxu0
        %3792 = vrot.lane.b32.xlu0 %v1013, 48
        %v3793 = vpop.permute.xlu0 %3792
        %v3795 = vsel %vm1017, %v3455, 0
        %v3798 = vsel %vm1516, %v3793, 0
        %3800 = vmatprep.subr.bf16.mxu0 0
        %3801 = vmatpush1.bf16.msra.mxu0 %v3798
        %3802 = vmatprep.subr.bf16.mxu0 0
        %3803 = vmatpush1.bf16.msra.mxu0 0
        %3804 = vmatprep.subr.bf16.mxu0 0
        %3805 = vmatpush1.bf16.msra.mxu0 0
        %3806 = vmatprep.subr.bf16.mxu0 0
        %3807 = vmatpush1.bf16.msra.mxu0 0
        %3808 = vmatprep.subr.bf16.mxu0 0
        %3809 = vmatpush1.bf16.msra.mxu0 0
        %3810 = vmatprep.subr.bf16.mxu0 0
        %3811 = vmatpush1.bf16.msra.mxu0 0
        %3812 = vmatprep.subr.bf16.mxu0 0
        %3813 = vmatpush1.bf16.msra.mxu0 0
        %3814 = vmatprep.subr.bf16.mxu0 0
        %3815 = vmatpush1.bf16.msra.mxu0 0
        %3816 = vmatprep.subr.bf16.mxu0 0
        %3817 = vmatpush1.bf16.msra.mxu0 0
        %3818 = vmatprep.subr.bf16.mxu0 0
        %3819 = vmatpush1.bf16.msra.mxu0 0
        %3820 = vmatprep.subr.bf16.mxu0 0
        %3821 = vmatpush1.bf16.msra.mxu0 0
        %3822 = vmatprep.subr.bf16.mxu0 0
        %3823 = vmatpush1.bf16.msra.mxu0 0
        %3824 = vmatprep.subr.bf16.mxu0 0
        %3825 = vmatpush1.bf16.msra.mxu0 0
        %3826 = vmatprep.subr.bf16.mxu0 0
        %3827 = vmatpush1.bf16.msra.mxu0 0
        %3828 = vmatprep.subr.bf16.mxu0 0
        %3829 = vmatpush1.bf16.msra.mxu0 0
        %3830 = vmatprep.subr.bf16.mxu0 0
        %3831 = vmatpush1.bf16.msra.mxu0 0
        %3832 = vmatprep.mubr.bf16.mxu0 0
        %3833 = vmatmul.mubr.bf16.gmra.mrb[0].mxu0 %v3795
        %v3834 = vpop.f32.mrb[0].mxu0
        %v3835 = vadd.f32 0.0, %v3834
        %v3836 = vpop.f32.mrb[0].mxu0
        %v3837 = vpop.f32.mrb[0].mxu0
        %v3838 = vpop.f32.mrb[0].mxu0
        %3839 = vdwg.mxu0
        %v3840 = vpack.c.bf16 %v3547, %v3499
        %v3841 = vpack.c.bf16 %v3643, %v3595
        %v3842 = vpack.c.bf16 %v3739, %v3691
        %v3843 = vpack.c.bf16 %v3835, %v3787
        %v3845 = vsel %vm1017, %v3840, 0
        %v3848 = vsel %vm1017, %v3841, 0
        %v3851 = vsel %vm1017, %v3842, 0
        %v3854 = vsel %vm1017, %v3843, 0
        %v3857 = vsel %vm1516, %v1004, 0
        %3859 = vmatprep.subr.bf16.mxu0 0
        %3860 = vmatpush1.bf16.msra.mxu0 %v3857
        %3861 = vmatprep.subr.bf16.mxu0 0
        %3862 = vmatpush1.bf16.msra.mxu0 0
        %3863 = vmatprep.subr.bf16.mxu0 0
        %3864 = vmatpush1.bf16.msra.mxu0 0
        %3865 = vmatprep.subr.bf16.mxu0 0
        %3866 = vmatpush1.bf16.msra.mxu0 0
        %3867 = vmatprep.subr.bf16.mxu0 0
        %3868 = vmatpush1.bf16.msra.mxu0 0
        %3869 = vmatprep.subr.bf16.mxu0 0
        %3870 = vmatpush1.bf16.msra.mxu0 0
        %3871 = vmatprep.subr.bf16.mxu0 0
        %3872 = vmatpush1.bf16.msra.mxu0 0
        %3873 = vmatprep.subr.bf16.mxu0 0
        %3874 = vmatpush1.bf16.msra.mxu0 0
        %3875 = vmatprep.subr.bf16.mxu0 0
        %3876 = vmatpush1.bf16.msra.mxu0 0
        %3877 = vmatprep.subr.bf16.mxu0 0
        %3878 = vmatpush1.bf16.msra.mxu0 0
        %3879 = vmatprep.subr.bf16.mxu0 0
        %3880 = vmatpush1.bf16.msra.mxu0 0
        %3881 = vmatprep.subr.bf16.mxu0 0
        %3882 = vmatpush1.bf16.msra.mxu0 0
        %3883 = vmatprep.subr.bf16.mxu0 0
        %3884 = vmatpush1.bf16.msra.mxu0 0
        %3885 = vmatprep.subr.bf16.mxu0 0
        %3886 = vmatpush1.bf16.msra.mxu0 0
        %3887 = vmatprep.subr.bf16.mxu0 0
        %3888 = vmatpush1.bf16.msra.mxu0 0
        %3889 = vmatprep.subr.bf16.mxu0 0
        %3890 = vmatpush1.bf16.msra.mxu0 0
        %3891 = vmatprep.mubr.bf16.mxu0 0
        %3892 = vmatmul.mubr.bf16.gmra.mrb[0].mxu0 %v3845
        %v3893 = vpop.f32.mrb[0].mxu0
        %v3894 = vadd.f32 0.0, %v3893
        %v3895 = vpop.f32.mrb[0].mxu0
        %v3896 = vpop.f32.mrb[0].mxu0
        %v3897 = vadd.f32 0.0, %v3896
        %v3898 = vpop.f32.mrb[0].mxu0
        %3899 = vmatprep.mubr.bf16.mxu0 0
        %3900 = vmatmul.mubr.bf16.gmra.mrb[0].mxu0 %v3848
        %v3901 = vpop.f32.mrb[0].mxu0
        %v3902 = vadd.f32 0.0, %v3901
        %v3903 = vpop.f32.mrb[0].mxu0
        %v3904 = vpop.f32.mrb[0].mxu0
        %v3905 = vadd.f32 0.0, %v3904
        %v3906 = vpop.f32.mrb[0].mxu0
        %3907 = vmatprep.mubr.bf16.mxu0 0
        %3908 = vmatmul.mubr.bf16.gmra.mrb[0].mxu0 %v3851
        %v3909 = vpop.f32.mrb[0].mxu0
        %v3910 = vadd.f32 0.0, %v3909
        %v3911 = vpop.f32.mrb[0].mxu0
        %v3912 = vpop.f32.mrb[0].mxu0
        %v3913 = vadd.f32 0.0, %v3912
        %v3914 = vpop.f32.mrb[0].mxu0
        %3915 = vmatprep.mubr.bf16.mxu0 0
        %3916 = vmatmul.mubr.bf16.gmra.mrb[0].mxu0 %v3854
        %v3917 = vpop.f32.mrb[0].mxu0
        %v3918 = vadd.f32 0.0, %v3917
        %v3919 = vpop.f32.mrb[0].mxu0
        %v3920 = vpop.f32.mrb[0].mxu0
        %v3921 = vadd.f32 0.0, %v3920
        %v3922 = vpop.f32.mrb[0].mxu0
        %3923 = vdwg.mxu0
        %v3924 = vadd.f32 %v2922, %v3894
        %v3925 = vadd.f32 %v2925, %v3897
        %v3926 = vadd.f32 %v2930, %v3902
        %v3927 = vadd.f32 %v2933, %v3905
        %v3928 = vadd.f32 %v2938, %v3910
        %v3929 = vadd.f32 %v2941, %v3913
        %v3930 = vadd.f32 %v2946, %v3918
        %v3931 = vadd.f32 %v2949, %v3921
        %3932 = vrot.lane.b32.xlu0 %v1006, 104
        %v3933 = vpop.permute.xlu0 %3932
        %3934 = vrot.lane.b32.xlu0 %v1006, 72
        %v3935 = vpop.permute.xlu0 %3934
        %v3937 = vsel %vm1017, %v3933, 0
        %v3940 = vsel %vm1017, %v3935, 0
        %3942 = vmatprep.subr.bf16.mxu0 0
        %3943 = vmatpush1.bf16.xpose.msra.mxu0 %v3940
        %3944 = vmatprep.subr.bf16.mxu0 0
        %3945 = vmatpush1.bf16.xpose.msra.mxu0 0
        %3946 = vmatprep.subr.bf16.mxu0 0
        %3947 = vmatpush1.bf16.xpose.msra.mxu0 0
        %3948 = vmatprep.subr.bf16.mxu0 0
        %3949 = vmatpush1.bf16.xpose.msra.mxu0 0
        %3950 = vmatprep.subr.bf16.mxu0 0
        %3951 = vmatpush1.bf16.xpose.msra.mxu0 0
        %3952 = vmatprep.subr.bf16.mxu0 0
        %3953 = vmatpush1.bf16.xpose.msra.mxu0 0
        %3954 = vmatprep.subr.bf16.mxu0 0
        %3955 = vmatpush1.bf16.xpose.msra.mxu0 0
        %3956 = vmatprep.subr.bf16.mxu0 0
        %3957 = vmatpush1.bf16.xpose.msra.mxu0 0
        %3958 = vmatprep.subr.bf16.mxu0 0
        %3959 = vmatpush1.bf16.xpose.msra.mxu0 0
        %3960 = vmatprep.subr.bf16.mxu0 0
        %3961 = vmatpush1.bf16.xpose.msra.mxu0 0
        %3962 = vmatprep.subr.bf16.mxu0 0
        %3963 = vmatpush1.bf16.xpose.msra.mxu0 0
        %3964 = vmatprep.subr.bf16.mxu0 0
        %3965 = vmatpush1.bf16.xpose.msra.mxu0 0
        %3966 = vmatprep.subr.bf16.mxu0 0
        %3967 = vmatpush1.bf16.xpose.msra.mxu0 0
        %3968 = vmatprep.subr.bf16.mxu0 0
        %3969 = vmatpush1.bf16.xpose.msra.mxu0 0
        %3970 = vmatprep.subr.bf16.mxu0 0
        %3971 = vmatpush1.bf16.xpose.msra.mxu0 0
        %3972 = vmatprep.subr.bf16.mxu0 0
        %3973 = vmatpush1.bf16.xpose.msra.mxu0 0
        %3974 = vmatprep.mubr.bf16.mxu0 0
        %3975 = vmatmul.mubr.bf16.gmra.mrb[0].mxu0 %v3937
        %v3976 = vpop.f32.mrb[0].mxu0
        %v3977 = vadd.f32 0.0, %v3976
        %v3978 = vpop.f32.mrb[0].mxu0
        %v3979 = vpop.f32.mrb[0].mxu0
        %v3980 = vpop.f32.mrb[0].mxu0
        %3981 = vdwg.mxu0
        %3982 = vrot.lane.b32.xlu0 %v1007, 104
        %v3983 = vpop.permute.xlu0 %3982
        %3984 = vrot.lane.b32.xlu0 %v1007, 72
        %v3985 = vpop.permute.xlu0 %3984
        %v3987 = vsel %vm1017, %v3983, 0
        %v3990 = vsel %vm1017, %v3985, 0
        %3992 = vmatprep.subr.bf16.mxu0 0
        %3993 = vmatpush1.bf16.xpose.msra.mxu0 %v3990
        %3994 = vmatprep.subr.bf16.mxu0 0
        %3995 = vmatpush1.bf16.xpose.msra.mxu0 0
        %3996 = vmatprep.subr.bf16.mxu0 0
        %3997 = vmatpush1.bf16.xpose.msra.mxu0 0
        %3998 = vmatprep.subr.bf16.mxu0 0
        %3999 = vmatpush1.bf16.xpose.msra.mxu0 0
        %4000 = vmatprep.subr.bf16.mxu0 0
        %4001 = vmatpush1.bf16.xpose.msra.mxu0 0
        %4002 = vmatprep.subr.bf16.mxu0 0
        %4003 = vmatpush1.bf16.xpose.msra.mxu0 0
        %4004 = vmatprep.subr.bf16.mxu0 0
        %4005 = vmatpush1.bf16.xpose.msra.mxu0 0
        %4006 = vmatprep.subr.bf16.mxu0 0
        %4007 = vmatpush1.bf16.xpose.msra.mxu0 0
        %4008 = vmatprep.subr.bf16.mxu0 0
        %4009 = vmatpush1.bf16.xpose.msra.mxu0 0
        %4010 = vmatprep.subr.bf16.mxu0 0
        %4011 = vmatpush1.bf16.xpose.msra.mxu0 0
        %4012 = vmatprep.subr.bf16.mxu0 0
        %4013 = vmatpush1.bf16.xpose.msra.mxu0 0
        %4014 = vmatprep.subr.bf16.mxu0 0
        %4015 = vmatpush1.bf16.xpose.msra.mxu0 0
        %4016 = vmatprep.subr.bf16.mxu0 0
        %4017 = vmatpush1.bf16.xpose.msra.mxu0 0
        %4018 = vmatprep.subr.bf16.mxu0 0
        %4019 = vmatpush1.bf16.xpose.msra.mxu0 0
        %4020 = vmatprep.subr.bf16.mxu0 0
        %4021 = vmatpush1.bf16.xpose.msra.mxu0 0
        %4022 = vmatprep.subr.bf16.mxu0 0
        %4023 = vmatpush1.bf16.xpose.msra.mxu0 0
        %4024 = vmatprep.mubr.bf16.mxu0 0
        %4025 = vmatmul.mubr.bf16.gmra.mrb[0].mxu0 %v3987
        %v4026 = vpop.f32.mrb[0].mxu0
        %v4027 = vadd.f32 0.0, %v4026
        %v4028 = vpop.f32.mrb[0].mxu0
        %v4029 = vpop.f32.mrb[0].mxu0
        %v4030 = vpop.f32.mrb[0].mxu0
        %4031 = vdwg.mxu0
        %4032 = vrot.lane.b32.xlu0 %v1008, 104
        %v4033 = vpop.permute.xlu0 %4032
        %4034 = vrot.lane.b32.xlu0 %v1008, 72
        %v4035 = vpop.permute.xlu0 %4034
        %v4037 = vsel %vm1017, %v4033, 0
        %v4040 = vsel %vm1017, %v4035, 0
        %4042 = vmatprep.subr.bf16.mxu0 0
        %4043 = vmatpush1.bf16.xpose.msra.mxu0 %v4040
        %4044 = vmatprep.subr.bf16.mxu0 0
        %4045 = vmatpush1.bf16.xpose.msra.mxu0 0
        %4046 = vmatprep.subr.bf16.mxu0 0
        %4047 = vmatpush1.bf16.xpose.msra.mxu0 0
        %4048 = vmatprep.subr.bf16.mxu0 0
        %4049 = vmatpush1.bf16.xpose.msra.mxu0 0
        %4050 = vmatprep.subr.bf16.mxu0 0
        %4051 = vmatpush1.bf16.xpose.msra.mxu0 0
        %4052 = vmatprep.subr.bf16.mxu0 0
        %4053 = vmatpush1.bf16.xpose.msra.mxu0 0
        %4054 = vmatprep.subr.bf16.mxu0 0
        %4055 = vmatpush1.bf16.xpose.msra.mxu0 0
        %4056 = vmatprep.subr.bf16.mxu0 0
        %4057 = vmatpush1.bf16.xpose.msra.mxu0 0
        %4058 = vmatprep.subr.bf16.mxu0 0
        %4059 = vmatpush1.bf16.xpose.msra.mxu0 0
        %4060 = vmatprep.subr.bf16.mxu0 0
        %4061 = vmatpush1.bf16.xpose.msra.mxu0 0
        %4062 = vmatprep.subr.bf16.mxu0 0
        %4063 = vmatpush1.bf16.xpose.msra.mxu0 0
        %4064 = vmatprep.subr.bf16.mxu0 0
        %4065 = vmatpush1.bf16.xpose.msra.mxu0 0
        %4066 = vmatprep.subr.bf16.mxu0 0
        %4067 = vmatpush1.bf16.xpose.msra.mxu0 0
        %4068 = vmatprep.subr.bf16.mxu0 0
        %4069 = vmatpush1.bf16.xpose.msra.mxu0 0
        %4070 = vmatprep.subr.bf16.mxu0 0
        %4071 = vmatpush1.bf16.xpose.msra.mxu0 0
        %4072 = vmatprep.subr.bf16.mxu0 0
        %4073 = vmatpush1.bf16.xpose.msra.mxu0 0
        %4074 = vmatprep.mubr.bf16.mxu0 0
        %4075 = vmatmul.mubr.bf16.gmra.mrb[0].mxu0 %v4037
        %v4076 = vpop.f32.mrb[0].mxu0
        %v4077 = vadd.f32 0.0, %v4076
        %v4078 = vpop.f32.mrb[0].mxu0
        %v4079 = vpop.f32.mrb[0].mxu0
        %v4080 = vpop.f32.mrb[0].mxu0
        %4081 = vdwg.mxu0
        %4082 = vrot.lane.b32.xlu0 %v1009, 104
        %v4083 = vpop.permute.xlu0 %4082
        %4084 = vrot.lane.b32.xlu0 %v1009, 72
        %v4085 = vpop.permute.xlu0 %4084
        %v4087 = vsel %vm1017, %v4083, 0
        %v4090 = vsel %vm1017, %v4085, 0
        %4092 = vmatprep.subr.bf16.mxu0 0
        %4093 = vmatpush1.bf16.xpose.msra.mxu0 %v4090
        %4094 = vmatprep.subr.bf16.mxu0 0
        %4095 = vmatpush1.bf16.xpose.msra.mxu0 0
        %4096 = vmatprep.subr.bf16.mxu0 0
        %4097 = vmatpush1.bf16.xpose.msra.mxu0 0
        %4098 = vmatprep.subr.bf16.mxu0 0
        %4099 = vmatpush1.bf16.xpose.msra.mxu0 0
        %4100 = vmatprep.subr.bf16.mxu0 0
        %4101 = vmatpush1.bf16.xpose.msra.mxu0 0
        %4102 = vmatprep.subr.bf16.mxu0 0
        %4103 = vmatpush1.bf16.xpose.msra.mxu0 0
        %4104 = vmatprep.subr.bf16.mxu0 0
        %4105 = vmatpush1.bf16.xpose.msra.mxu0 0
        %4106 = vmatprep.subr.bf16.mxu0 0
        %4107 = vmatpush1.bf16.xpose.msra.mxu0 0
        %4108 = vmatprep.subr.bf16.mxu0 0
        %4109 = vmatpush1.bf16.xpose.msra.mxu0 0
        %4110 = vmatprep.subr.bf16.mxu0 0
        %4111 = vmatpush1.bf16.xpose.msra.mxu0 0
        %4112 = vmatprep.subr.bf16.mxu0 0
        %4113 = vmatpush1.bf16.xpose.msra.mxu0 0
        %4114 = vmatprep.subr.bf16.mxu0 0
        %4115 = vmatpush1.bf16.xpose.msra.mxu0 0
        %4116 = vmatprep.subr.bf16.mxu0 0
        %4117 = vmatpush1.bf16.xpose.msra.mxu0 0
        %4118 = vmatprep.subr.bf16.mxu0 0
        %4119 = vmatpush1.bf16.xpose.msra.mxu0 0
        %4120 = vmatprep.subr.bf16.mxu0 0
        %4121 = vmatpush1.bf16.xpose.msra.mxu0 0
        %4122 = vmatprep.subr.bf16.mxu0 0
        %4123 = vmatpush1.bf16.xpose.msra.mxu0 0
        %4124 = vmatprep.mubr.bf16.mxu0 0
        %4125 = vmatmul.mubr.bf16.gmra.mrb[0].mxu0 %v4087
        %v4126 = vpop.f32.mrb[0].mxu0
        %v4127 = vadd.f32 0.0, %v4126
        %v4128 = vpop.f32.mrb[0].mxu0
        %v4129 = vpop.f32.mrb[0].mxu0
        %v4130 = vpop.f32.mrb[0].mxu0
        %4131 = vdwg.mxu0
        %4132 = vrot.lane.b32.xlu0 %v1010, 104
        %v4133 = vpop.permute.xlu0 %4132
        %4134 = vrot.lane.b32.xlu0 %v1010, 72
        %v4135 = vpop.permute.xlu0 %4134
        %v4137 = vsel %vm1017, %v4133, 0
        %v4140 = vsel %vm1017, %v4135, 0
        %4142 = vmatprep.subr.bf16.mxu0 0
        %4143 = vmatpush1.bf16.xpose.msra.mxu0 %v4140
        %4144 = vmatprep.subr.bf16.mxu0 0
        %4145 = vmatpush1.bf16.xpose.msra.mxu0 0
        %4146 = vmatprep.subr.bf16.mxu0 0
        %4147 = vmatpush1.bf16.xpose.msra.mxu0 0
        %4148 = vmatprep.subr.bf16.mxu0 0
        %4149 = vmatpush1.bf16.xpose.msra.mxu0 0
        %4150 = vmatprep.subr.bf16.mxu0 0
        %4151 = vmatpush1.bf16.xpose.msra.mxu0 0
        %4152 = vmatprep.subr.bf16.mxu0 0
        %4153 = vmatpush1.bf16.xpose.msra.mxu0 0
        %4154 = vmatprep.subr.bf16.mxu0 0
        %4155 = vmatpush1.bf16.xpose.msra.mxu0 0
        %4156 = vmatprep.subr.bf16.mxu0 0
        %4157 = vmatpush1.bf16.xpose.msra.mxu0 0
        %4158 = vmatprep.subr.bf16.mxu0 0
        %4159 = vmatpush1.bf16.xpose.msra.mxu0 0
        %4160 = vmatprep.subr.bf16.mxu0 0
        %4161 = vmatpush1.bf16.xpose.msra.mxu0 0
        %4162 = vmatprep.subr.bf16.mxu0 0
        %4163 = vmatpush1.bf16.xpose.msra.mxu0 0
        %4164 = vmatprep.subr.bf16.mxu0 0
        %4165 = vmatpush1.bf16.xpose.msra.mxu0 0
        %4166 = vmatprep.subr.bf16.mxu0 0
        %4167 = vmatpush1.bf16.xpose.msra.mxu0 0
        %4168 = vmatprep.subr.bf16.mxu0 0
        %4169 = vmatpush1.bf16.xpose.msra.mxu0 0
        %4170 = vmatprep.subr.bf16.mxu0 0
        %4171 = vmatpush1.bf16.xpose.msra.mxu0 0
        %4172 = vmatprep.subr.bf16.mxu0 0
        %4173 = vmatpush1.bf16.xpose.msra.mxu0 0
        %4174 = vmatprep.mubr.bf16.mxu0 0
        %4175 = vmatmul.mubr.bf16.gmra.mrb[0].mxu0 %v4137
        %v4176 = vpop.f32.mrb[0].mxu0
        %v4177 = vadd.f32 0.0, %v4176
        %v4178 = vpop.f32.mrb[0].mxu0
        %v4179 = vpop.f32.mrb[0].mxu0
        %v4180 = vpop.f32.mrb[0].mxu0
        %4181 = vdwg.mxu0
        %4182 = vrot.lane.b32.xlu0 %v1011, 104
        %v4183 = vpop.permute.xlu0 %4182
        %4184 = vrot.lane.b32.xlu0 %v1011, 72
        %v4185 = vpop.permute.xlu0 %4184
        %v4187 = vsel %vm1017, %v4183, 0
        %v4190 = vsel %vm1017, %v4185, 0
        %4192 = vmatprep.subr.bf16.mxu0 0
        %4193 = vmatpush1.bf16.xpose.msra.mxu0 %v4190
        %4194 = vmatprep.subr.bf16.mxu0 0
        %4195 = vmatpush1.bf16.xpose.msra.mxu0 0
        %4196 = vmatprep.subr.bf16.mxu0 0
        %4197 = vmatpush1.bf16.xpose.msra.mxu0 0
        %4198 = vmatprep.subr.bf16.mxu0 0
        %4199 = vmatpush1.bf16.xpose.msra.mxu0 0
        %4200 = vmatprep.subr.bf16.mxu0 0
        %4201 = vmatpush1.bf16.xpose.msra.mxu0 0
        %4202 = vmatprep.subr.bf16.mxu0 0
        %4203 = vmatpush1.bf16.xpose.msra.mxu0 0
        %4204 = vmatprep.subr.bf16.mxu0 0
        %4205 = vmatpush1.bf16.xpose.msra.mxu0 0
        %4206 = vmatprep.subr.bf16.mxu0 0
        %4207 = vmatpush1.bf16.xpose.msra.mxu0 0
        %4208 = vmatprep.subr.bf16.mxu0 0
        %4209 = vmatpush1.bf16.xpose.msra.mxu0 0
        %4210 = vmatprep.subr.bf16.mxu0 0
        %4211 = vmatpush1.bf16.xpose.msra.mxu0 0
        %4212 = vmatprep.subr.bf16.mxu0 0
        %4213 = vmatpush1.bf16.xpose.msra.mxu0 0
        %4214 = vmatprep.subr.bf16.mxu0 0
        %4215 = vmatpush1.bf16.xpose.msra.mxu0 0
        %4216 = vmatprep.subr.bf16.mxu0 0
        %4217 = vmatpush1.bf16.xpose.msra.mxu0 0
        %4218 = vmatprep.subr.bf16.mxu0 0
        %4219 = vmatpush1.bf16.xpose.msra.mxu0 0
        %4220 = vmatprep.subr.bf16.mxu0 0
        %4221 = vmatpush1.bf16.xpose.msra.mxu0 0
        %4222 = vmatprep.subr.bf16.mxu0 0
        %4223 = vmatpush1.bf16.xpose.msra.mxu0 0
        %4224 = vmatprep.mubr.bf16.mxu0 0
        %4225 = vmatmul.mubr.bf16.gmra.mrb[0].mxu0 %v4187
        %v4226 = vpop.f32.mrb[0].mxu0
        %v4227 = vadd.f32 0.0, %v4226
        %v4228 = vpop.f32.mrb[0].mxu0
        %v4229 = vpop.f32.mrb[0].mxu0
        %v4230 = vpop.f32.mrb[0].mxu0
        %4231 = vdwg.mxu0
        %4232 = vrot.lane.b32.xlu0 %v1012, 104
        %v4233 = vpop.permute.xlu0 %4232
        %4234 = vrot.lane.b32.xlu0 %v1012, 72
        %v4235 = vpop.permute.xlu0 %4234
        %v4237 = vsel %vm1017, %v4233, 0
        %v4240 = vsel %vm1017, %v4235, 0
        %4242 = vmatprep.subr.bf16.mxu0 0
        %4243 = vmatpush1.bf16.xpose.msra.mxu0 %v4240
        %4244 = vmatprep.subr.bf16.mxu0 0
        %4245 = vmatpush1.bf16.xpose.msra.mxu0 0
        %4246 = vmatprep.subr.bf16.mxu0 0
        %4247 = vmatpush1.bf16.xpose.msra.mxu0 0
        %4248 = vmatprep.subr.bf16.mxu0 0
        %4249 = vmatpush1.bf16.xpose.msra.mxu0 0
        %4250 = vmatprep.subr.bf16.mxu0 0
        %4251 = vmatpush1.bf16.xpose.msra.mxu0 0
        %4252 = vmatprep.subr.bf16.mxu0 0
        %4253 = vmatpush1.bf16.xpose.msra.mxu0 0
        %4254 = vmatprep.subr.bf16.mxu0 0
        %4255 = vmatpush1.bf16.xpose.msra.mxu0 0
        %4256 = vmatprep.subr.bf16.mxu0 0
        %4257 = vmatpush1.bf16.xpose.msra.mxu0 0
        %4258 = vmatprep.subr.bf16.mxu0 0
        %4259 = vmatpush1.bf16.xpose.msra.mxu0 0
        %4260 = vmatprep.subr.bf16.mxu0 0
        %4261 = vmatpush1.bf16.xpose.msra.mxu0 0
        %4262 = vmatprep.subr.bf16.mxu0 0
        %4263 = vmatpush1.bf16.xpose.msra.mxu0 0
        %4264 = vmatprep.subr.bf16.mxu0 0
        %4265 = vmatpush1.bf16.xpose.msra.mxu0 0
        %4266 = vmatprep.subr.bf16.mxu0 0
        %4267 = vmatpush1.bf16.xpose.msra.mxu0 0
        %4268 = vmatprep.subr.bf16.mxu0 0
        %4269 = vmatpush1.bf16.xpose.msra.mxu0 0
        %4270 = vmatprep.subr.bf16.mxu0 0
        %4271 = vmatpush1.bf16.xpose.msra.mxu0 0
        %4272 = vmatprep.subr.bf16.mxu0 0
        %4273 = vmatpush1.bf16.xpose.msra.mxu0 0
        %4274 = vmatprep.mubr.bf16.mxu0 0
        %4275 = vmatmul.mubr.bf16.gmra.mrb[0].mxu0 %v4237
        %v4276 = vpop.f32.mrb[0].mxu0
        %v4277 = vadd.f32 0.0, %v4276
        %v4278 = vpop.f32.mrb[0].mxu0
        %v4279 = vpop.f32.mrb[0].mxu0
        %v4280 = vpop.f32.mrb[0].mxu0
        %4281 = vdwg.mxu0
        %4282 = vrot.lane.b32.xlu0 %v1013, 104
        %v4283 = vpop.permute.xlu0 %4282
        %4284 = vrot.lane.b32.xlu0 %v1013, 72
        %v4285 = vpop.permute.xlu0 %4284
        %v4287 = vsel %vm1017, %v4283, 0
        %v4290 = vsel %vm1017, %v4285, 0
        %4292 = vmatprep.subr.bf16.mxu0 0
        %4293 = vmatpush1.bf16.xpose.msra.mxu0 %v4290
        %4294 = vmatprep.subr.bf16.mxu0 0
        %4295 = vmatpush1.bf16.xpose.msra.mxu0 0
        %4296 = vmatprep.subr.bf16.mxu0 0
        %4297 = vmatpush1.bf16.xpose.msra.mxu0 0
        %4298 = vmatprep.subr.bf16.mxu0 0
        %4299 = vmatpush1.bf16.xpose.msra.mxu0 0
        %4300 = vmatprep.subr.bf16.mxu0 0
        %4301 = vmatpush1.bf16.xpose.msra.mxu0 0
        %4302 = vmatprep.subr.bf16.mxu0 0
        %4303 = vmatpush1.bf16.xpose.msra.mxu0 0
        %4304 = vmatprep.subr.bf16.mxu0 0
        %4305 = vmatpush1.bf16.xpose.msra.mxu0 0
        %4306 = vmatprep.subr.bf16.mxu0 0
        %4307 = vmatpush1.bf16.xpose.msra.mxu0 0
        %4308 = vmatprep.subr.bf16.mxu0 0
        %4309 = vmatpush1.bf16.xpose.msra.mxu0 0
        %4310 = vmatprep.subr.bf16.mxu0 0
        %4311 = vmatpush1.bf16.xpose.msra.mxu0 0
        %4312 = vmatprep.subr.bf16.mxu0 0
        %4313 = vmatpush1.bf16.xpose.msra.mxu0 0
        %4314 = vmatprep.subr.bf16.mxu0 0
        %4315 = vmatpush1.bf16.xpose.msra.mxu0 0
        %4316 = vmatprep.subr.bf16.mxu0 0
        %4317 = vmatpush1.bf16.xpose.msra.mxu0 0
        %4318 = vmatprep.subr.bf16.mxu0 0
        %4319 = vmatpush1.bf16.xpose.msra.mxu0 0
        %4320 = vmatprep.subr.bf16.mxu0 0
        %4321 = vmatpush1.bf16.xpose.msra.mxu0 0
        %4322 = vmatprep.subr.bf16.mxu0 0
        %4323 = vmatpush1.bf16.xpose.msra.mxu0 0
        %4324 = vmatprep.mubr.bf16.mxu0 0
        %4325 = vmatmul.mubr.bf16.gmra.mrb[0].mxu0 %v4287
        %v4326 = vpop.f32.mrb[0].mxu0
        %v4327 = vadd.f32 0.0, %v4326
        %v4328 = vpop.f32.mrb[0].mxu0
        %v4329 = vpop.f32.mrb[0].mxu0
        %v4330 = vpop.f32.mrb[0].mxu0
        %4331 = vdwg.mxu0
        %v4332 = vmul.f32 %v3977, 0.35355338
        %v4333 = vmul.f32 %v4027, 0.35355338
        %v4334 = vmul.f32 %v4077, 0.35355338
        %v4335 = vmul.f32 %v4127, 0.35355338
        %v4336 = vmul.f32 %v4177, 0.35355338
        %v4337 = vmul.f32 %v4227, 0.35355338
        %v4338 = vmul.f32 %v4277, 0.35355338
        %v4339 = vmul.f32 %v4327, 0.35355338
        %v4340 = vsel %vm1017, %v4332, -inf
        %4341 = vmax.xlane.f32.xlu0 %v4340
        %v4342 = vpop.xlane.xlu0 %4341
        %v4343 = vsel %vm1017, %v4333, -inf
        %4344 = vmax.xlane.f32.xlu0 %v4343
        %v4345 = vpop.xlane.xlu0 %4344
        %v4346 = vsel %vm1017, %v4334, -inf
        %4347 = vmax.xlane.f32.xlu0 %v4346
        %v4348 = vpop.xlane.xlu0 %4347
        %v4349 = vsel %vm1017, %v4335, -inf
        %4350 = vmax.xlane.f32.xlu0 %v4349
        %v4351 = vpop.xlane.xlu0 %4350
        %v4352 = vsel %vm1017, %v4336, -inf
        %4353 = vmax.xlane.f32.xlu0 %v4352
        %v4354 = vpop.xlane.xlu0 %4353
        %v4355 = vsel %vm1017, %v4337, -inf
        %4356 = vmax.xlane.f32.xlu0 %v4355
        %v4357 = vpop.xlane.xlu0 %4356
        %v4358 = vsel %vm1017, %v4338, -inf
        %4359 = vmax.xlane.f32.xlu0 %v4358
        %v4360 = vpop.xlane.xlu0 %4359
        %v4361 = vsel %vm1017, %v4339, -inf
        %4362 = vmax.xlane.f32.xlu0 %v4361
        %v4363 = vpop.xlane.xlu0 %4362
        %v4364 = vsub.f32 %v4332, %v4342
        %v4365 = vsub.f32 %v4333, %v4345
        %v4366 = vsub.f32 %v4334, %v4348
        %v4367 = vsub.f32 %v4335, %v4351
        %v4368 = vsub.f32 %v4336, %v4354
        %v4369 = vsub.f32 %v4337, %v4357
        %v4370 = vsub.f32 %v4338, %v4360
        %v4371 = vsub.f32 %v4339, %v4363
        %v4372 = vmul.f32 %v4364, 1.442695
        %v4373 = vpow.pop %v4372
        %v4374 = vmul.f32 %v4365, 1.442695
        %v4375 = vpow.pop %v4374
        %v4376 = vmul.f32 %v4366, 1.442695
        %v4377 = vpow.pop %v4376
        %v4378 = vmul.f32 %v4367, 1.442695
        %v4379 = vpow.pop %v4378
        %v4380 = vmul.f32 %v4368, 1.442695
        %v4381 = vpow.pop %v4380
        %v4382 = vmul.f32 %v4369, 1.442695
        %v4383 = vpow.pop %v4382
        %v4384 = vmul.f32 %v4370, 1.442695
        %v4385 = vpow.pop %v4384
        %v4386 = vmul.f32 %v4371, 1.442695
        %v4387 = vpow.pop %v4386
        %v4388 = vsel %vm1017, %v4373, 0.0
        %4389 = vadd.xlane.f32.xlu0 %v4388
        %v4390 = vpop.xlane.xlu0 %4389
        %v4391 = vsel %vm1017, %v4375, 0.0
        %4392 = vadd.xlane.f32.xlu0 %v4391
        %v4393 = vpop.xlane.xlu0 %4392
        %v4394 = vsel %vm1017, %v4377, 0.0
        %4395 = vadd.xlane.f32.xlu0 %v4394
        %v4396 = vpop.xlane.xlu0 %4395
        %v4397 = vsel %vm1017, %v4379, 0.0
        %4398 = vadd.xlane.f32.xlu0 %v4397
        %v4399 = vpop.xlane.xlu0 %4398
        %v4400 = vsel %vm1017, %v4381, 0.0
        %4401 = vadd.xlane.f32.xlu0 %v4400
        %v4402 = vpop.xlane.xlu0 %4401
        %v4403 = vsel %vm1017, %v4383, 0.0
        %4404 = vadd.xlane.f32.xlu0 %v4403
        %v4405 = vpop.xlane.xlu0 %4404
        %v4406 = vsel %vm1017, %v4385, 0.0
        %4407 = vadd.xlane.f32.xlu0 %v4406
        %v4408 = vpop.xlane.xlu0 %4407
        %v4409 = vsel %vm1017, %v4387, 0.0
        %4410 = vadd.xlane.f32.xlu0 %v4409
        %v4411 = vpop.xlane.xlu0 %4410
        %v4412 = vrcp.pop %v4390
        %v4413 = vrcp.pop %v4393
        %v4414 = vrcp.pop %v4396
        %v4415 = vrcp.pop %v4399
        %v4416 = vrcp.pop %v4402
        %v4417 = vrcp.pop %v4405
        %v4418 = vrcp.pop %v4408
        %v4419 = vrcp.pop %v4411
        %v4420 = vmul.f32 %v4373, %v4412
        %v4421 = vmul.f32 %v4375, %v4413
        %v4422 = vmul.f32 %v4377, %v4414
        %v4423 = vmul.f32 %v4379, %v4415
        %v4424 = vmul.f32 %v4381, %v4416
        %v4425 = vmul.f32 %v4383, %v4417
        %v4426 = vmul.f32 %v4385, %v4418
        %v4427 = vmul.f32 %v4387, %v4419
        %v4428 = vpack.c.bf16 %v4420, %v4420
        %v4429 = vpack.c.bf16 %v4421, %v4421
        %v4430 = vpack.c.bf16 %v4422, %v4422
        %v4431 = vpack.c.bf16 %v4423, %v4423
        %v4432 = vpack.c.bf16 %v4424, %v4424
        %v4433 = vpack.c.bf16 %v4425, %v4425
        %v4434 = vpack.c.bf16 %v4426, %v4426
        %v4435 = vpack.c.bf16 %v4427, %v4427
        %4436 = vrot.lane.b32.xlu0 %v1006, 40
        %v4437 = vpop.permute.xlu0 %4436
        %v4439 = vsel %vm1017, %v4428, 0
        %v4442 = vsel %vm1516, %v4437, 0
        %4444 = vmatprep.subr.bf16.mxu0 0
        %4445 = vmatpush1.bf16.msra.mxu0 %v4442
        %4446 = vmatprep.subr.bf16.mxu0 0
        %4447 = vmatpush1.bf16.msra.mxu0 0
        %4448 = vmatprep.subr.bf16.mxu0 0
        %4449 = vmatpush1.bf16.msra.mxu0 0
        %4450 = vmatprep.subr.bf16.mxu0 0
        %4451 = vmatpush1.bf16.msra.mxu0 0
        %4452 = vmatprep.subr.bf16.mxu0 0
        %4453 = vmatpush1.bf16.msra.mxu0 0
        %4454 = vmatprep.subr.bf16.mxu0 0
        %4455 = vmatpush1.bf16.msra.mxu0 0
        %4456 = vmatprep.subr.bf16.mxu0 0
        %4457 = vmatpush1.bf16.msra.mxu0 0
        %4458 = vmatprep.subr.bf16.mxu0 0
        %4459 = vmatpush1.bf16.msra.mxu0 0
        %4460 = vmatprep.subr.bf16.mxu0 0
        %4461 = vmatpush1.bf16.msra.mxu0 0
        %4462 = vmatprep.subr.bf16.mxu0 0
        %4463 = vmatpush1.bf16.msra.mxu0 0
        %4464 = vmatprep.subr.bf16.mxu0 0
        %4465 = vmatpush1.bf16.msra.mxu0 0
        %4466 = vmatprep.subr.bf16.mxu0 0
        %4467 = vmatpush1.bf16.msra.mxu0 0
        %4468 = vmatprep.subr.bf16.mxu0 0
        %4469 = vmatpush1.bf16.msra.mxu0 0
        %4470 = vmatprep.subr.bf16.mxu0 0
        %4471 = vmatpush1.bf16.msra.mxu0 0
        %4472 = vmatprep.subr.bf16.mxu0 0
        %4473 = vmatpush1.bf16.msra.mxu0 0
        %4474 = vmatprep.subr.bf16.mxu0 0
        %4475 = vmatpush1.bf16.msra.mxu0 0
        %4476 = vmatprep.mubr.bf16.mxu0 0
        %4477 = vmatmul.mubr.bf16.gmra.mrb[0].mxu0 %v4439
        %v4478 = vpop.f32.mrb[0].mxu0
        %v4479 = vadd.f32 0.0, %v4478
        %v4480 = vpop.f32.mrb[0].mxu0
        %v4481 = vpop.f32.mrb[0].mxu0
        %v4482 = vpop.f32.mrb[0].mxu0
        %4483 = vdwg.mxu0
        %4484 = vrot.lane.b32.xlu0 %v1007, 40
        %v4485 = vpop.permute.xlu0 %4484
        %v4487 = vsel %vm1017, %v4429, 0
        %v4490 = vsel %vm1516, %v4485, 0
        %4492 = vmatprep.subr.bf16.mxu0 0
        %4493 = vmatpush1.bf16.msra.mxu0 %v4490
        %4494 = vmatprep.subr.bf16.mxu0 0
        %4495 = vmatpush1.bf16.msra.mxu0 0
        %4496 = vmatprep.subr.bf16.mxu0 0
        %4497 = vmatpush1.bf16.msra.mxu0 0
        %4498 = vmatprep.subr.bf16.mxu0 0
        %4499 = vmatpush1.bf16.msra.mxu0 0
        %4500 = vmatprep.subr.bf16.mxu0 0
        %4501 = vmatpush1.bf16.msra.mxu0 0
        %4502 = vmatprep.subr.bf16.mxu0 0
        %4503 = vmatpush1.bf16.msra.mxu0 0
        %4504 = vmatprep.subr.bf16.mxu0 0
        %4505 = vmatpush1.bf16.msra.mxu0 0
        %4506 = vmatprep.subr.bf16.mxu0 0
        %4507 = vmatpush1.bf16.msra.mxu0 0
        %4508 = vmatprep.subr.bf16.mxu0 0
        %4509 = vmatpush1.bf16.msra.mxu0 0
        %4510 = vmatprep.subr.bf16.mxu0 0
        %4511 = vmatpush1.bf16.msra.mxu0 0
        %4512 = vmatprep.subr.bf16.mxu0 0
        %4513 = vmatpush1.bf16.msra.mxu0 0
        %4514 = vmatprep.subr.bf16.mxu0 0
        %4515 = vmatpush1.bf16.msra.mxu0 0
        %4516 = vmatprep.subr.bf16.mxu0 0
        %4517 = vmatpush1.bf16.msra.mxu0 0
        %4518 = vmatprep.subr.bf16.mxu0 0
        %4519 = vmatpush1.bf16.msra.mxu0 0
        %4520 = vmatprep.subr.bf16.mxu0 0
        %4521 = vmatpush1.bf16.msra.mxu0 0
        %4522 = vmatprep.subr.bf16.mxu0 0
        %4523 = vmatpush1.bf16.msra.mxu0 0
        %4524 = vmatprep.mubr.bf16.mxu0 0
        %4525 = vmatmul.mubr.bf16.gmra.mrb[0].mxu0 %v4487
        %v4526 = vpop.f32.mrb[0].mxu0
        %v4527 = vadd.f32 0.0, %v4526
        %v4528 = vpop.f32.mrb[0].mxu0
        %v4529 = vpop.f32.mrb[0].mxu0
        %v4530 = vpop.f32.mrb[0].mxu0
        %4531 = vdwg.mxu0
        %4532 = vrot.lane.b32.xlu0 %v1008, 40
        %v4533 = vpop.permute.xlu0 %4532
        %v4535 = vsel %vm1017, %v4430, 0
        %v4538 = vsel %vm1516, %v4533, 0
        %4540 = vmatprep.subr.bf16.mxu0 0
        %4541 = vmatpush1.bf16.msra.mxu0 %v4538
        %4542 = vmatprep.subr.bf16.mxu0 0
        %4543 = vmatpush1.bf16.msra.mxu0 0
        %4544 = vmatprep.subr.bf16.mxu0 0
        %4545 = vmatpush1.bf16.msra.mxu0 0
        %4546 = vmatprep.subr.bf16.mxu0 0
        %4547 = vmatpush1.bf16.msra.mxu0 0
        %4548 = vmatprep.subr.bf16.mxu0 0
        %4549 = vmatpush1.bf16.msra.mxu0 0
        %4550 = vmatprep.subr.bf16.mxu0 0
        %4551 = vmatpush1.bf16.msra.mxu0 0
        %4552 = vmatprep.subr.bf16.mxu0 0
        %4553 = vmatpush1.bf16.msra.mxu0 0
        %4554 = vmatprep.subr.bf16.mxu0 0
        %4555 = vmatpush1.bf16.msra.mxu0 0
        %4556 = vmatprep.subr.bf16.mxu0 0
        %4557 = vmatpush1.bf16.msra.mxu0 0
        %4558 = vmatprep.subr.bf16.mxu0 0
        %4559 = vmatpush1.bf16.msra.mxu0 0
        %4560 = vmatprep.subr.bf16.mxu0 0
        %4561 = vmatpush1.bf16.msra.mxu0 0
        %4562 = vmatprep.subr.bf16.mxu0 0
        %4563 = vmatpush1.bf16.msra.mxu0 0
        %4564 = vmatprep.subr.bf16.mxu0 0
        %4565 = vmatpush1.bf16.msra.mxu0 0
        %4566 = vmatprep.subr.bf16.mxu0 0
        %4567 = vmatpush1.bf16.msra.mxu0 0
        %4568 = vmatprep.subr.bf16.mxu0 0
        %4569 = vmatpush1.bf16.msra.mxu0 0
        %4570 = vmatprep.subr.bf16.mxu0 0
        %4571 = vmatpush1.bf16.msra.mxu0 0
        %4572 = vmatprep.mubr.bf16.mxu0 0
        %4573 = vmatmul.mubr.bf16.gmra.mrb[0].mxu0 %v4535
        %v4574 = vpop.f32.mrb[0].mxu0
        %v4575 = vadd.f32 0.0, %v4574
        %v4576 = vpop.f32.mrb[0].mxu0
        %v4577 = vpop.f32.mrb[0].mxu0
        %v4578 = vpop.f32.mrb[0].mxu0
        %4579 = vdwg.mxu0
        %4580 = vrot.lane.b32.xlu0 %v1009, 40
        %v4581 = vpop.permute.xlu0 %4580
        %v4583 = vsel %vm1017, %v4431, 0
        %v4586 = vsel %vm1516, %v4581, 0
        %4588 = vmatprep.subr.bf16.mxu0 0
        %4589 = vmatpush1.bf16.msra.mxu0 %v4586
        %4590 = vmatprep.subr.bf16.mxu0 0
        %4591 = vmatpush1.bf16.msra.mxu0 0
        %4592 = vmatprep.subr.bf16.mxu0 0
        %4593 = vmatpush1.bf16.msra.mxu0 0
        %4594 = vmatprep.subr.bf16.mxu0 0
        %4595 = vmatpush1.bf16.msra.mxu0 0
        %4596 = vmatprep.subr.bf16.mxu0 0
        %4597 = vmatpush1.bf16.msra.mxu0 0
        %4598 = vmatprep.subr.bf16.mxu0 0
        %4599 = vmatpush1.bf16.msra.mxu0 0
        %4600 = vmatprep.subr.bf16.mxu0 0
        %4601 = vmatpush1.bf16.msra.mxu0 0
        %4602 = vmatprep.subr.bf16.mxu0 0
        %4603 = vmatpush1.bf16.msra.mxu0 0
        %4604 = vmatprep.subr.bf16.mxu0 0
        %4605 = vmatpush1.bf16.msra.mxu0 0
        %4606 = vmatprep.subr.bf16.mxu0 0
        %4607 = vmatpush1.bf16.msra.mxu0 0
        %4608 = vmatprep.subr.bf16.mxu0 0
        %4609 = vmatpush1.bf16.msra.mxu0 0
        %4610 = vmatprep.subr.bf16.mxu0 0
        %4611 = vmatpush1.bf16.msra.mxu0 0
        %4612 = vmatprep.subr.bf16.mxu0 0
        %4613 = vmatpush1.bf16.msra.mxu0 0
        %4614 = vmatprep.subr.bf16.mxu0 0
        %4615 = vmatpush1.bf16.msra.mxu0 0
        %4616 = vmatprep.subr.bf16.mxu0 0
        %4617 = vmatpush1.bf16.msra.mxu0 0
        %4618 = vmatprep.subr.bf16.mxu0 0
        %4619 = vmatpush1.bf16.msra.mxu0 0
        %4620 = vmatprep.mubr.bf16.mxu0 0
        %4621 = vmatmul.mubr.bf16.gmra.mrb[0].mxu0 %v4583
        %v4622 = vpop.f32.mrb[0].mxu0
        %v4623 = vadd.f32 0.0, %v4622
        %v4624 = vpop.f32.mrb[0].mxu0
        %v4625 = vpop.f32.mrb[0].mxu0
        %v4626 = vpop.f32.mrb[0].mxu0
        %4627 = vdwg.mxu0
        %4628 = vrot.lane.b32.xlu0 %v1010, 40
        %v4629 = vpop.permute.xlu0 %4628
        %v4631 = vsel %vm1017, %v4432, 0
        %v4634 = vsel %vm1516, %v4629, 0
        %4636 = vmatprep.subr.bf16.mxu0 0
        %4637 = vmatpush1.bf16.msra.mxu0 %v4634
        %4638 = vmatprep.subr.bf16.mxu0 0
        %4639 = vmatpush1.bf16.msra.mxu0 0
        %4640 = vmatprep.subr.bf16.mxu0 0
        %4641 = vmatpush1.bf16.msra.mxu0 0
        %4642 = vmatprep.subr.bf16.mxu0 0
        %4643 = vmatpush1.bf16.msra.mxu0 0
        %4644 = vmatprep.subr.bf16.mxu0 0
        %4645 = vmatpush1.bf16.msra.mxu0 0
        %4646 = vmatprep.subr.bf16.mxu0 0
        %4647 = vmatpush1.bf16.msra.mxu0 0
        %4648 = vmatprep.subr.bf16.mxu0 0
        %4649 = vmatpush1.bf16.msra.mxu0 0
        %4650 = vmatprep.subr.bf16.mxu0 0
        %4651 = vmatpush1.bf16.msra.mxu0 0
        %4652 = vmatprep.subr.bf16.mxu0 0
        %4653 = vmatpush1.bf16.msra.mxu0 0
        %4654 = vmatprep.subr.bf16.mxu0 0
        %4655 = vmatpush1.bf16.msra.mxu0 0
        %4656 = vmatprep.subr.bf16.mxu0 0
        %4657 = vmatpush1.bf16.msra.mxu0 0
        %4658 = vmatprep.subr.bf16.mxu0 0
        %4659 = vmatpush1.bf16.msra.mxu0 0
        %4660 = vmatprep.subr.bf16.mxu0 0
        %4661 = vmatpush1.bf16.msra.mxu0 0
        %4662 = vmatprep.subr.bf16.mxu0 0
        %4663 = vmatpush1.bf16.msra.mxu0 0
        %4664 = vmatprep.subr.bf16.mxu0 0
        %4665 = vmatpush1.bf16.msra.mxu0 0
        %4666 = vmatprep.subr.bf16.mxu0 0
        %4667 = vmatpush1.bf16.msra.mxu0 0
        %4668 = vmatprep.mubr.bf16.mxu0 0
        %4669 = vmatmul.mubr.bf16.gmra.mrb[0].mxu0 %v4631
        %v4670 = vpop.f32.mrb[0].mxu0
        %v4671 = vadd.f32 0.0, %v4670
        %v4672 = vpop.f32.mrb[0].mxu0
        %v4673 = vpop.f32.mrb[0].mxu0
        %v4674 = vpop.f32.mrb[0].mxu0
        %4675 = vdwg.mxu0
        %4676 = vrot.lane.b32.xlu0 %v1011, 40
        %v4677 = vpop.permute.xlu0 %4676
        %v4679 = vsel %vm1017, %v4433, 0
        %v4682 = vsel %vm1516, %v4677, 0
        %4684 = vmatprep.subr.bf16.mxu0 0
        %4685 = vmatpush1.bf16.msra.mxu0 %v4682
        %4686 = vmatprep.subr.bf16.mxu0 0
        %4687 = vmatpush1.bf16.msra.mxu0 0
        %4688 = vmatprep.subr.bf16.mxu0 0
        %4689 = vmatpush1.bf16.msra.mxu0 0
        %4690 = vmatprep.subr.bf16.mxu0 0
        %4691 = vmatpush1.bf16.msra.mxu0 0
        %4692 = vmatprep.subr.bf16.mxu0 0
        %4693 = vmatpush1.bf16.msra.mxu0 0
        %4694 = vmatprep.subr.bf16.mxu0 0
        %4695 = vmatpush1.bf16.msra.mxu0 0
        %4696 = vmatprep.subr.bf16.mxu0 0
        %4697 = vmatpush1.bf16.msra.mxu0 0
        %4698 = vmatprep.subr.bf16.mxu0 0
        %4699 = vmatpush1.bf16.msra.mxu0 0
        %4700 = vmatprep.subr.bf16.mxu0 0
        %4701 = vmatpush1.bf16.msra.mxu0 0
        %4702 = vmatprep.subr.bf16.mxu0 0
        %4703 = vmatpush1.bf16.msra.mxu0 0
        %4704 = vmatprep.subr.bf16.mxu0 0
        %4705 = vmatpush1.bf16.msra.mxu0 0
        %4706 = vmatprep.subr.bf16.mxu0 0
        %4707 = vmatpush1.bf16.msra.mxu0 0
        %4708 = vmatprep.subr.bf16.mxu0 0
        %4709 = vmatpush1.bf16.msra.mxu0 0
        %4710 = vmatprep.subr.bf16.mxu0 0
        %4711 = vmatpush1.bf16.msra.mxu0 0
        %4712 = vmatprep.subr.bf16.mxu0 0
        %4713 = vmatpush1.bf16.msra.mxu0 0
        %4714 = vmatprep.subr.bf16.mxu0 0
        %4715 = vmatpush1.bf16.msra.mxu0 0
        %4716 = vmatprep.mubr.bf16.mxu0 0
        %4717 = vmatmul.mubr.bf16.gmra.mrb[0].mxu0 %v4679
        %v4718 = vpop.f32.mrb[0].mxu0
        %v4719 = vadd.f32 0.0, %v4718
        %v4720 = vpop.f32.mrb[0].mxu0
        %v4721 = vpop.f32.mrb[0].mxu0
        %v4722 = vpop.f32.mrb[0].mxu0
        %4723 = vdwg.mxu0
        %4724 = vrot.lane.b32.xlu0 %v1012, 40
        %v4725 = vpop.permute.xlu0 %4724
        %v4727 = vsel %vm1017, %v4434, 0
        %v4730 = vsel %vm1516, %v4725, 0
        %4732 = vmatprep.subr.bf16.mxu0 0
        %4733 = vmatpush1.bf16.msra.mxu0 %v4730
        %4734 = vmatprep.subr.bf16.mxu0 0
        %4735 = vmatpush1.bf16.msra.mxu0 0
        %4736 = vmatprep.subr.bf16.mxu0 0
        %4737 = vmatpush1.bf16.msra.mxu0 0
        %4738 = vmatprep.subr.bf16.mxu0 0
        %4739 = vmatpush1.bf16.msra.mxu0 0
        %4740 = vmatprep.subr.bf16.mxu0 0
        %4741 = vmatpush1.bf16.msra.mxu0 0
        %4742 = vmatprep.subr.bf16.mxu0 0
        %4743 = vmatpush1.bf16.msra.mxu0 0
        %4744 = vmatprep.subr.bf16.mxu0 0
        %4745 = vmatpush1.bf16.msra.mxu0 0
        %4746 = vmatprep.subr.bf16.mxu0 0
        %4747 = vmatpush1.bf16.msra.mxu0 0
        %4748 = vmatprep.subr.bf16.mxu0 0
        %4749 = vmatpush1.bf16.msra.mxu0 0
        %4750 = vmatprep.subr.bf16.mxu0 0
        %4751 = vmatpush1.bf16.msra.mxu0 0
        %4752 = vmatprep.subr.bf16.mxu0 0
        %4753 = vmatpush1.bf16.msra.mxu0 0
        %4754 = vmatprep.subr.bf16.mxu0 0
        %4755 = vmatpush1.bf16.msra.mxu0 0
        %4756 = vmatprep.subr.bf16.mxu0 0
        %4757 = vmatpush1.bf16.msra.mxu0 0
        %4758 = vmatprep.subr.bf16.mxu0 0
        %4759 = vmatpush1.bf16.msra.mxu0 0
        %4760 = vmatprep.subr.bf16.mxu0 0
        %4761 = vmatpush1.bf16.msra.mxu0 0
        %4762 = vmatprep.subr.bf16.mxu0 0
        %4763 = vmatpush1.bf16.msra.mxu0 0
        %4764 = vmatprep.mubr.bf16.mxu0 0
        %4765 = vmatmul.mubr.bf16.gmra.mrb[0].mxu0 %v4727
        %v4766 = vpop.f32.mrb[0].mxu0
        %v4767 = vadd.f32 0.0, %v4766
        %v4768 = vpop.f32.mrb[0].mxu0
        %v4769 = vpop.f32.mrb[0].mxu0
        %v4770 = vpop.f32.mrb[0].mxu0
        %4771 = vdwg.mxu0
        %4772 = vrot.lane.b32.xlu0 %v1013, 40
        %v4773 = vpop.permute.xlu0 %4772
        %v4775 = vsel %vm1017, %v4435, 0
        %v4778 = vsel %vm1516, %v4773, 0
        %4780 = vmatprep.subr.bf16.mxu0 0
        %4781 = vmatpush1.bf16.msra.mxu0 %v4778
        %4782 = vmatprep.subr.bf16.mxu0 0
        %4783 = vmatpush1.bf16.msra.mxu0 0
        %4784 = vmatprep.subr.bf16.mxu0 0
        %4785 = vmatpush1.bf16.msra.mxu0 0
        %4786 = vmatprep.subr.bf16.mxu0 0
        %4787 = vmatpush1.bf16.msra.mxu0 0
        %4788 = vmatprep.subr.bf16.mxu0 0
        %4789 = vmatpush1.bf16.msra.mxu0 0
        %4790 = vmatprep.subr.bf16.mxu0 0
        %4791 = vmatpush1.bf16.msra.mxu0 0
        %4792 = vmatprep.subr.bf16.mxu0 0
        %4793 = vmatpush1.bf16.msra.mxu0 0
        %4794 = vmatprep.subr.bf16.mxu0 0
        %4795 = vmatpush1.bf16.msra.mxu0 0
        %4796 = vmatprep.subr.bf16.mxu0 0
        %4797 = vmatpush1.bf16.msra.mxu0 0
        %4798 = vmatprep.subr.bf16.mxu0 0
        %4799 = vmatpush1.bf16.msra.mxu0 0
        %4800 = vmatprep.subr.bf16.mxu0 0
        %4801 = vmatpush1.bf16.msra.mxu0 0
        %4802 = vmatprep.subr.bf16.mxu0 0
        %4803 = vmatpush1.bf16.msra.mxu0 0
        %4804 = vmatprep.subr.bf16.mxu0 0
        %4805 = vmatpush1.bf16.msra.mxu0 0
        %4806 = vmatprep.subr.bf16.mxu0 0
        %4807 = vmatpush1.bf16.msra.mxu0 0
        %4808 = vmatprep.subr.bf16.mxu0 0
        %4809 = vmatpush1.bf16.msra.mxu0 0
        %4810 = vmatprep.subr.bf16.mxu0 0
        %4811 = vmatpush1.bf16.msra.mxu0 0
        %4812 = vmatprep.mubr.bf16.mxu0 0
        %4813 = vmatmul.mubr.bf16.gmra.mrb[0].mxu0 %v4775
        %v4814 = vpop.f32.mrb[0].mxu0
        %v4815 = vadd.f32 0.0, %v4814
        %v4816 = vpop.f32.mrb[0].mxu0
        %v4817 = vpop.f32.mrb[0].mxu0
        %v4818 = vpop.f32.mrb[0].mxu0
        %4819 = vdwg.mxu0
        %v4820 = vpack.c.bf16 %v4527, %v4479
        %v4821 = vpack.c.bf16 %v4623, %v4575
        %v4822 = vpack.c.bf16 %v4719, %v4671
        %v4823 = vpack.c.bf16 %v4815, %v4767
        %v4825 = vsel %vm1017, %v4820, 0
        %v4828 = vsel %vm1017, %v4821, 0
        %v4831 = vsel %vm1017, %v4822, 0
        %v4834 = vsel %vm1017, %v4823, 0
        %v4837 = vsel %vm1516, %v1005, 0
        %4839 = vmatprep.subr.bf16.mxu0 0
        %4840 = vmatpush1.bf16.msra.mxu0 %v4837
        %4841 = vmatprep.subr.bf16.mxu0 0
        %4842 = vmatpush1.bf16.msra.mxu0 0
        %4843 = vmatprep.subr.bf16.mxu0 0
        %4844 = vmatpush1.bf16.msra.mxu0 0
        %4845 = vmatprep.subr.bf16.mxu0 0
        %4846 = vmatpush1.bf16.msra.mxu0 0
        %4847 = vmatprep.subr.bf16.mxu0 0
        %4848 = vmatpush1.bf16.msra.mxu0 0
        %4849 = vmatprep.subr.bf16.mxu0 0
        %4850 = vmatpush1.bf16.msra.mxu0 0
        %4851 = vmatprep.subr.bf16.mxu0 0
        %4852 = vmatpush1.bf16.msra.mxu0 0
        %4853 = vmatprep.subr.bf16.mxu0 0
        %4854 = vmatpush1.bf16.msra.mxu0 0
        %4855 = vmatprep.subr.bf16.mxu0 0
        %4856 = vmatpush1.bf16.msra.mxu0 0
        %4857 = vmatprep.subr.bf16.mxu0 0
        %4858 = vmatpush1.bf16.msra.mxu0 0
        %4859 = vmatprep.subr.bf16.mxu0 0
        %4860 = vmatpush1.bf16.msra.mxu0 0
        %4861 = vmatprep.subr.bf16.mxu0 0
        %4862 = vmatpush1.bf16.msra.mxu0 0
        %4863 = vmatprep.subr.bf16.mxu0 0
        %4864 = vmatpush1.bf16.msra.mxu0 0
        %4865 = vmatprep.subr.bf16.mxu0 0
        %4866 = vmatpush1.bf16.msra.mxu0 0
        %4867 = vmatprep.subr.bf16.mxu0 0
        %4868 = vmatpush1.bf16.msra.mxu0 0
        %4869 = vmatprep.subr.bf16.mxu0 0
        %4870 = vmatpush1.bf16.msra.mxu0 0
        %4871 = vmatprep.mubr.bf16.mxu0 0
        %4872 = vmatmul.mubr.bf16.gmra.mrb[0].mxu0 %v4825
        %v4873 = vpop.f32.mrb[0].mxu0
        %v4874 = vadd.f32 0.0, %v4873
        %v4875 = vpop.f32.mrb[0].mxu0
        %v4876 = vpop.f32.mrb[0].mxu0
        %v4877 = vadd.f32 0.0, %v4876
        %v4878 = vpop.f32.mrb[0].mxu0
        %4879 = vmatprep.mubr.bf16.mxu0 0
        %4880 = vmatmul.mubr.bf16.gmra.mrb[0].mxu0 %v4828
        %v4881 = vpop.f32.mrb[0].mxu0
        %v4882 = vadd.f32 0.0, %v4881
        %v4883 = vpop.f32.mrb[0].mxu0
        %v4884 = vpop.f32.mrb[0].mxu0
        %v4885 = vadd.f32 0.0, %v4884
        %v4886 = vpop.f32.mrb[0].mxu0
        %4887 = vmatprep.mubr.bf16.mxu0 0
        %4888 = vmatmul.mubr.bf16.gmra.mrb[0].mxu0 %v4831
        %v4889 = vpop.f32.mrb[0].mxu0
        %v4890 = vadd.f32 0.0, %v4889
        %v4891 = vpop.f32.mrb[0].mxu0
        %v4892 = vpop.f32.mrb[0].mxu0
        %v4893 = vadd.f32 0.0, %v4892
        %v4894 = vpop.f32.mrb[0].mxu0
        %4895 = vmatprep.mubr.bf16.mxu0 0
        %4896 = vmatmul.mubr.bf16.gmra.mrb[0].mxu0 %v4834
        %v4897 = vpop.f32.mrb[0].mxu0
        %v4898 = vadd.f32 0.0, %v4897
        %v4899 = vpop.f32.mrb[0].mxu0
        %v4900 = vpop.f32.mrb[0].mxu0
        %v4901 = vadd.f32 0.0, %v4900
        %v4902 = vpop.f32.mrb[0].mxu0
        %4903 = vdwg.mxu0
        %v4904 = vadd.f32 %v3924, %v4874
        %v4905 = vadd.f32 %v3925, %v4877
        %v4906 = vadd.f32 %v3926, %v4882
        %v4907 = vadd.f32 %v3927, %v4885
        %v4908 = vadd.f32 %v3928, %v4890
        %v4909 = vadd.f32 %v3929, %v4893
        %v4910 = vadd.f32 %v3930, %v4898
        %v4911 = vadd.f32 %v3931, %v4901
        %v4912 = vadd.f32 %v754, %v4904
        %v4913 = vadd.f32 %v755, %v4905
        %v4914 = vadd.f32 %v756, %v4906
        %v4915 = vadd.f32 %v757, %v4907
        %v4916 = vadd.f32 %v758, %v4908
        %v4917 = vadd.f32 %v759, %v4909
        %v4918 = vadd.f32 %v760, %v4910
        %v4919 = vadd.f32 %v761, %v4911
        %v4920 = vld [vmem:[%s723] sm:$0x1]
        %v4922 = vlaneseq
        %v4923 = vshrl.u32 %v4922, 7
        %v4924 = vsub.s32 0, %v4923
        %v4925 = vrot.slane %v4920, %v4924
        %v4927 = vadd.f32 %v4912, %v4925
        %v4928 = vadd.f32 %v4913, %v4925
        %v4929 = vadd.f32 %v4914, %v4925
        %v4930 = vadd.f32 %v4915, %v4925
        %v4931 = vadd.f32 %v4916, %v4925
        %v4932 = vadd.f32 %v4917, %v4925
        %v4933 = vadd.f32 %v4918, %v4925
        %v4934 = vadd.f32 %v4919, %v4925
        %v4935 = vld [vmem:[%s591] sm:$0x1]
        %v4936 = vld [vmem:[%s599] sm:$0x1]
        %v4937 = vsel %vm764, %v4927, 0.0
        %4938 = vadd.xlane.f32.xlu0 %v4937
        %v4939 = vpop.xlane.xlu0 %4938
        %v4940 = vsel %vm764, %v4928, 0.0
        %4941 = vadd.xlane.f32.xlu0 %v4940
        %v4942 = vpop.xlane.xlu0 %4941
        %v4943 = vsel %vm764, %v4929, 0.0
        %4944 = vadd.xlane.f32.xlu0 %v4943
        %v4945 = vpop.xlane.xlu0 %4944
        %v4946 = vsel %vm764, %v4930, 0.0
        %4947 = vadd.xlane.f32.xlu0 %v4946
        %v4948 = vpop.xlane.xlu0 %4947
        %v4949 = vsel %vm764, %v4931, 0.0
        %4950 = vadd.xlane.f32.xlu0 %v4949
        %v4951 = vpop.xlane.xlu0 %4950
        %v4952 = vsel %vm764, %v4932, 0.0
        %4953 = vadd.xlane.f32.xlu0 %v4952
        %v4954 = vpop.xlane.xlu0 %4953
        %v4955 = vsel %vm764, %v4933, 0.0
        %4956 = vadd.xlane.f32.xlu0 %v4955
        %v4957 = vpop.xlane.xlu0 %4956
        %v4958 = vsel %vm764, %v4934, 0.0
        %4959 = vadd.xlane.f32.xlu0 %v4958
        %v4960 = vpop.xlane.xlu0 %4959
        %v4961 = vmul.f32 %v4939, %v789
        %v4962 = vmul.f32 %v4942, %v789
        %v4963 = vmul.f32 %v4945, %v789
        %v4964 = vmul.f32 %v4948, %v789
        %v4965 = vmul.f32 %v4951, %v789
        %v4966 = vmul.f32 %v4954, %v789
        %v4967 = vmul.f32 %v4957, %v789
        %v4968 = vmul.f32 %v4960, %v789
        %v4969 = vsub.f32 %v4927, %v4961
        %v4970 = vsub.f32 %v4928, %v4962
        %v4971 = vsub.f32 %v4929, %v4963
        %v4972 = vsub.f32 %v4930, %v4964
        %v4973 = vsub.f32 %v4931, %v4965
        %v4974 = vsub.f32 %v4932, %v4966
        %v4975 = vsub.f32 %v4933, %v4967
        %v4976 = vsub.f32 %v4934, %v4968
        %v4977 = vmul.f32 %v4969, %v4969
        %v4978 = vmul.f32 %v4970, %v4970
        %v4979 = vmul.f32 %v4971, %v4971
        %v4980 = vmul.f32 %v4972, %v4972
        %v4981 = vmul.f32 %v4973, %v4973
        %v4982 = vmul.f32 %v4974, %v4974
        %v4983 = vmul.f32 %v4975, %v4975
        %v4984 = vmul.f32 %v4976, %v4976
        %v4985 = vsel %vm764, %v4977, 0.0
        %4986 = vadd.xlane.f32.xlu0 %v4985
        %v4987 = vpop.xlane.xlu0 %4986
        %v4988 = vsel %vm764, %v4978, 0.0
        %4989 = vadd.xlane.f32.xlu0 %v4988
        %v4990 = vpop.xlane.xlu0 %4989
        %v4991 = vsel %vm764, %v4979, 0.0
        %4992 = vadd.xlane.f32.xlu0 %v4991
        %v4993 = vpop.xlane.xlu0 %4992
        %v4994 = vsel %vm764, %v4980, 0.0
        %4995 = vadd.xlane.f32.xlu0 %v4994
        %v4996 = vpop.xlane.xlu0 %4995
        %v4997 = vsel %vm764, %v4981, 0.0
        %4998 = vadd.xlane.f32.xlu0 %v4997
        %v4999 = vpop.xlane.xlu0 %4998
        %v5000 = vsel %vm764, %v4982, 0.0
        %5001 = vadd.xlane.f32.xlu0 %v5000
        %v5002 = vpop.xlane.xlu0 %5001
        %v5003 = vsel %vm764, %v4983, 0.0
        %5004 = vadd.xlane.f32.xlu0 %v5003
        %v5005 = vpop.xlane.xlu0 %5004
        %v5006 = vsel %vm764, %v4984, 0.0
        %5007 = vadd.xlane.f32.xlu0 %v5006
        %v5008 = vpop.xlane.xlu0 %5007
        %v5009 = vmul.f32 %v4987, %v789
        %v5010 = vmul.f32 %v4990, %v789
        %v5011 = vmul.f32 %v4993, %v789
        %v5012 = vmul.f32 %v4996, %v789
        %v5013 = vmul.f32 %v4999, %v789
        %v5014 = vmul.f32 %v5002, %v789
        %v5015 = vmul.f32 %v5005, %v789
        %v5016 = vmul.f32 %v5008, %v789
        %v5017 = vadd.f32 %v5009, 1e-12
        %v5018 = vadd.f32 %v5010, 1e-12
        %v5019 = vadd.f32 %v5011, 1e-12
        %v5020 = vadd.f32 %v5012, 1e-12
        %v5021 = vadd.f32 %v5013, 1e-12
        %v5022 = vadd.f32 %v5014, 1e-12
        %v5023 = vadd.f32 %v5015, 1e-12
        %v5024 = vadd.f32 %v5016, 1e-12
        %v5025 = vrsqrt.pop %v5017
        %v5026 = vrsqrt.pop %v5018
        %v5027 = vrsqrt.pop %v5019
        %v5028 = vrsqrt.pop %v5020
        %v5029 = vrsqrt.pop %v5021
        %v5030 = vrsqrt.pop %v5022
        %v5031 = vrsqrt.pop %v5023
        %v5032 = vrsqrt.pop %v5024
        %v5033 = vmul.f32 %v4969, %v5025
        %v5034 = vmul.f32 %v4970, %v5026
        %v5035 = vmul.f32 %v4971, %v5027
        %v5036 = vmul.f32 %v4972, %v5028
        %v5037 = vmul.f32 %v4973, %v5029
        %v5038 = vmul.f32 %v4974, %v5030
        %v5039 = vmul.f32 %v4975, %v5031
        %v5040 = vmul.f32 %v4976, %v5032
        %v5042 = vlaneseq
        %v5043 = vshrl.u32 %v5042, 7
        %v5044 = vsub.s32 0, %v5043
        %v5045 = vrot.slane %v4935, %v5044
        %v5047 = vmul.f32 %v5033, %v5045
        %v5048 = vmul.f32 %v5034, %v5045
        %v5049 = vmul.f32 %v5035, %v5045
        %v5050 = vmul.f32 %v5036, %v5045
        %v5051 = vmul.f32 %v5037, %v5045
        %v5052 = vmul.f32 %v5038, %v5045
        %v5053 = vmul.f32 %v5039, %v5045
        %v5054 = vmul.f32 %v5040, %v5045
        %v5056 = vlaneseq
        %v5057 = vshrl.u32 %v5056, 7
        %v5058 = vsub.s32 0, %v5057
        %v5059 = vrot.slane %v4936, %v5058
        %v5061 = vadd.f32 %v5047, %v5059
        %v5062 = vadd.f32 %v5048, %v5059
        %v5063 = vadd.f32 %v5049, %v5059
        %v5064 = vadd.f32 %v5050, %v5059
        %v5065 = vadd.f32 %v5051, %v5059
        %v5066 = vadd.f32 %v5052, %v5059
        %v5067 = vadd.f32 %v5053, %v5059
        %v5068 = vadd.f32 %v5054, %v5059
        %v5069 = vpack.c.bf16 %v5062, %v5061
        %v5070 = vpack.c.bf16 %v5064, %v5063
        %v5071 = vpack.c.bf16 %v5066, %v5065
        %v5072 = vpack.c.bf16 %v5068, %v5067
        %v5073 = vld [vmem:[%s608] sm:$0xf]
        %v5074 = vld [vmem:[%s608 + $0x4] sm:$0xf]
        %v5075 = vld [vmem:[%s608 + $0x8] sm:$0xf]
        %v5076 = vld [vmem:[%s608 + $0xc] sm:$0xf]
        %v5077 = vld [vmem:[%s728] sm:$0xf]
        %v5078 = vld [vmem:[%s728 + $0x4] sm:$0xf]
        %v5079 = vld [vmem:[%s728 + $0x8] sm:$0xf]
        %v5080 = vld [vmem:[%s728 + $0xc] sm:$0xf]
        %v5081 = vld [vmem:[%s728 + $0x10] sm:$0xf]
        %v5082 = vld [vmem:[%s728 + $0x14] sm:$0xf]
        %v5083 = vld [vmem:[%s728 + $0x18] sm:$0xf]
        %v5084 = vld [vmem:[%s728 + $0x1c] sm:$0xf]
        %v5085 = vld [vmem:[%s616] sm:$0x1]
        %v5087 = vlaneseq
        %v5088 = vshrl.u32 %v5087, 7
        %v5089 = vsub.s32 0, %v5088
        %v5090 = vrot.slane %v5085, %v5089
        %v5096 = vunpack.c.l.b16 %v5073
        %v5097 = vunpack.c.l.b16 %v5074
        %v5098 = vunpack.c.l.b16 %v5075
        %v5099 = vunpack.c.l.b16 %v5076
        %v5100 = vpack.c.b16 %v5097, %v5096
        %v5101 = vpack.c.b16 %v5099, %v5098
        %v5105 = vsel %vm764, %v5069, 0
        %v5108 = vsel %vm764, %v5070, 0
        %v5111 = vsel %vm764, %v5071, 0
        %v5114 = vsel %vm764, %v5072, 0
        %5116 = vmatprep.subr.bf16.mxu0 0
        %5117 = vmatpush1.bf16.msra.mxu0 %v5100
        %5118 = vmatprep.subr.bf16.mxu0 0
        %5119 = vmatpush1.bf16.msra.mxu0 %v5101
        %5120 = vmatprep.subr.bf16.mxu0 0
        %5121 = vmatpush1.bf16.msra.mxu0 0
        %5122 = vmatprep.subr.bf16.mxu0 0
        %5123 = vmatpush1.bf16.msra.mxu0 0
        %5124 = vmatprep.subr.bf16.mxu0 0
        %5125 = vmatpush1.bf16.msra.mxu0 0
        %5126 = vmatprep.subr.bf16.mxu0 0
        %5127 = vmatpush1.bf16.msra.mxu0 0
        %5128 = vmatprep.subr.bf16.mxu0 0
        %5129 = vmatpush1.bf16.msra.mxu0 0
        %5130 = vmatprep.subr.bf16.mxu0 0
        %5131 = vmatpush1.bf16.msra.mxu0 0
        %5132 = vmatprep.subr.bf16.mxu0 0
        %5133 = vmatpush1.bf16.msra.mxu0 0
        %5134 = vmatprep.subr.bf16.mxu0 0
        %5135 = vmatpush1.bf16.msra.mxu0 0
        %5136 = vmatprep.subr.bf16.mxu0 0
        %5137 = vmatpush1.bf16.msra.mxu0 0
        %5138 = vmatprep.subr.bf16.mxu0 0
        %5139 = vmatpush1.bf16.msra.mxu0 0
        %5140 = vmatprep.subr.bf16.mxu0 0
        %5141 = vmatpush1.bf16.msra.mxu0 0
        %5142 = vmatprep.subr.bf16.mxu0 0
        %5143 = vmatpush1.bf16.msra.mxu0 0
        %5144 = vmatprep.subr.bf16.mxu0 0
        %5145 = vmatpush1.bf16.msra.mxu0 0
        %5146 = vmatprep.subr.bf16.mxu0 0
        %5147 = vmatpush1.bf16.msra.mxu0 0
        %5148 = vmatprep.mubr.bf16.mxu0 0
        %5149 = vmatmul.mubr.bf16.gmra.mrb[0].mxu0 %v5105
        %v5150 = vpop.f32.mrb[0].mxu0
        %v5151 = vadd.f32 %v5090, %v5150
        %v5152 = vpop.f32.mrb[0].mxu0
        %v5153 = vpop.f32.mrb[0].mxu0
        %v5154 = vadd.f32 %v5090, %v5153
        %v5155 = vpop.f32.mrb[0].mxu0
        %5156 = vmatprep.mubr.bf16.mxu0 0
        %5157 = vmatmul.mubr.bf16.gmra.mrb[0].mxu0 %v5108
        %v5158 = vpop.f32.mrb[0].mxu0
        %v5159 = vadd.f32 %v5090, %v5158
        %v5160 = vpop.f32.mrb[0].mxu0
        %v5161 = vpop.f32.mrb[0].mxu0
        %v5162 = vadd.f32 %v5090, %v5161
        %v5163 = vpop.f32.mrb[0].mxu0
        %5164 = vmatprep.mubr.bf16.mxu0 0
        %5165 = vmatmul.mubr.bf16.gmra.mrb[0].mxu0 %v5111
        %v5166 = vpop.f32.mrb[0].mxu0
        %v5167 = vadd.f32 %v5090, %v5166
        %v5168 = vpop.f32.mrb[0].mxu0
        %v5169 = vpop.f32.mrb[0].mxu0
        %v5170 = vadd.f32 %v5090, %v5169
        %v5171 = vpop.f32.mrb[0].mxu0
        %5172 = vmatprep.mubr.bf16.mxu0 0
        %5173 = vmatmul.mubr.bf16.gmra.mrb[0].mxu0 %v5114
        %v5174 = vpop.f32.mrb[0].mxu0
        %v5175 = vadd.f32 %v5090, %v5174
        %v5176 = vpop.f32.mrb[0].mxu0
        %v5177 = vpop.f32.mrb[0].mxu0
        %v5178 = vadd.f32 %v5090, %v5177
        %v5179 = vpop.f32.mrb[0].mxu0
        %5180 = vdwg.mxu0
        %v5181 = vmul.f32 %v5151, 0.5
        %v5182 = vmul.f32 %v5154, 0.5
        %v5183 = vmul.f32 %v5159, 0.5
        %v5184 = vmul.f32 %v5162, 0.5
        %v5185 = vmul.f32 %v5167, 0.5
        %v5186 = vmul.f32 %v5170, 0.5
        %v5187 = vmul.f32 %v5175, 0.5
        %v5188 = vmul.f32 %v5178, 0.5
        %v5189 = vmul.f32 %v5151, 0.044715
        %v5190 = vmul.f32 %v5154, 0.044715
        %v5191 = vmul.f32 %v5159, 0.044715
        %v5192 = vmul.f32 %v5162, 0.044715
        %v5193 = vmul.f32 %v5167, 0.044715
        %v5194 = vmul.f32 %v5170, 0.044715
        %v5195 = vmul.f32 %v5175, 0.044715
        %v5196 = vmul.f32 %v5178, 0.044715
        %v5197 = vmul.f32 %v5189, %v5151
        %v5198 = vmul.f32 %v5190, %v5154
        %v5199 = vmul.f32 %v5191, %v5159
        %v5200 = vmul.f32 %v5192, %v5162
        %v5201 = vmul.f32 %v5193, %v5167
        %v5202 = vmul.f32 %v5194, %v5170
        %v5203 = vmul.f32 %v5195, %v5175
        %v5204 = vmul.f32 %v5196, %v5178
        %v5205 = vmul.f32 %v5197, %v5151
        %v5206 = vmul.f32 %v5198, %v5154
        %v5207 = vmul.f32 %v5199, %v5159
        %v5208 = vmul.f32 %v5200, %v5162
        %v5209 = vmul.f32 %v5201, %v5167
        %v5210 = vmul.f32 %v5202, %v5170
        %v5211 = vmul.f32 %v5203, %v5175
        %v5212 = vmul.f32 %v5204, %v5178
        %v5213 = vadd.f32 %v5151, %v5205
        %v5214 = vadd.f32 %v5154, %v5206
        %v5215 = vadd.f32 %v5159, %v5207
        %v5216 = vadd.f32 %v5162, %v5208
        %v5217 = vadd.f32 %v5167, %v5209
        %v5218 = vadd.f32 %v5170, %v5210
        %v5219 = vadd.f32 %v5175, %v5211
        %v5220 = vadd.f32 %v5178, %v5212
        %v5221 = vmul.f32 %v5213, 0.7978846
        %v5222 = vmul.f32 %v5214, 0.7978846
        %v5223 = vmul.f32 %v5215, 0.7978846
        %v5224 = vmul.f32 %v5216, 0.7978846
        %v5225 = vmul.f32 %v5217, 0.7978846
        %v5226 = vmul.f32 %v5218, 0.7978846
        %v5227 = vmul.f32 %v5219, 0.7978846
        %v5228 = vmul.f32 %v5220, 0.7978846
        %v5229 = vtanh.pop %v5221
        %v5230 = vtanh.pop %v5222
        %v5231 = vtanh.pop %v5223
        %v5232 = vtanh.pop %v5224
        %v5233 = vtanh.pop %v5225
        %v5234 = vtanh.pop %v5226
        %v5235 = vtanh.pop %v5227
        %v5236 = vtanh.pop %v5228
        %v5237 = vadd.f32 %v5229, 1.0
        %v5238 = vadd.f32 %v5230, 1.0
        %v5239 = vadd.f32 %v5231, 1.0
        %v5240 = vadd.f32 %v5232, 1.0
        %v5241 = vadd.f32 %v5233, 1.0
        %v5242 = vadd.f32 %v5234, 1.0
        %v5243 = vadd.f32 %v5235, 1.0
        %v5244 = vadd.f32 %v5236, 1.0
        %v5245 = vmul.f32 %v5181, %v5237
        %v5246 = vmul.f32 %v5182, %v5238
        %v5247 = vmul.f32 %v5183, %v5239
        %v5248 = vmul.f32 %v5184, %v5240
        %v5249 = vmul.f32 %v5185, %v5241
        %v5250 = vmul.f32 %v5186, %v5242
        %v5251 = vmul.f32 %v5187, %v5243
        %v5252 = vmul.f32 %v5188, %v5244
        %v5253 = vpack.c.bf16 %v5246, %v5245
        %v5254 = vpack.c.bf16 %v5248, %v5247
        %v5255 = vpack.c.bf16 %v5250, %v5249
        %v5256 = vpack.c.bf16 %v5252, %v5251
        %v5265 = vunpack.c.l.b16 %v5077
        %v5266 = vunpack.c.l.b16 %v5078
        %v5267 = vunpack.c.l.b16 %v5079
        %v5268 = vunpack.c.l.b16 %v5080
        %v5269 = vunpack.c.l.b16 %v5081
        %v5270 = vunpack.c.l.b16 %v5082
        %v5271 = vunpack.c.l.b16 %v5083
        %v5272 = vunpack.c.l.b16 %v5084
        %v5273 = vpack.c.b16 %v5266, %v5265
        %v5274 = vpack.c.b16 %v5268, %v5267
        %v5275 = vpack.c.b16 %v5270, %v5269
        %v5276 = vpack.c.b16 %v5272, %v5271
        %vm5281 = vcmask 523264
        %v5283 = vsel %vm5281, %v5253, 0
        %v5286 = vsel %vm5281, %v5254, 0
        %v5289 = vsel %vm5281, %v5255, 0
        %v5292 = vsel %vm5281, %v5256, 0
        %5294 = vmatprep.subr.bf16.mxu0 0
        %5295 = vmatpush1.bf16.msra.mxu0 %v5273
        %5296 = vmatprep.subr.bf16.mxu0 0
        %5297 = vmatpush1.bf16.msra.mxu0 %v5274
        %5298 = vmatprep.subr.bf16.mxu0 0
        %5299 = vmatpush1.bf16.msra.mxu0 %v5275
        %5300 = vmatprep.subr.bf16.mxu0 0
        %5301 = vmatpush1.bf16.msra.mxu0 %v5276
        %5302 = vmatprep.subr.bf16.mxu0 0
        %5303 = vmatpush1.bf16.msra.mxu0 0
        %5304 = vmatprep.subr.bf16.mxu0 0
        %5305 = vmatpush1.bf16.msra.mxu0 0
        %5306 = vmatprep.subr.bf16.mxu0 0
        %5307 = vmatpush1.bf16.msra.mxu0 0
        %5308 = vmatprep.subr.bf16.mxu0 0
        %5309 = vmatpush1.bf16.msra.mxu0 0
        %5310 = vmatprep.subr.bf16.mxu0 0
        %5311 = vmatpush1.bf16.msra.mxu0 0
        %5312 = vmatprep.subr.bf16.mxu0 0
        %5313 = vmatpush1.bf16.msra.mxu0 0
        %5314 = vmatprep.subr.bf16.mxu0 0
        %5315 = vmatpush1.bf16.msra.mxu0 0
        %5316 = vmatprep.subr.bf16.mxu0 0
        %5317 = vmatpush1.bf16.msra.mxu0 0
        %5318 = vmatprep.subr.bf16.mxu0 0
        %5319 = vmatpush1.bf16.msra.mxu0 0
        %5320 = vmatprep.subr.bf16.mxu0 0
        %5321 = vmatpush1.bf16.msra.mxu0 0
        %5322 = vmatprep.subr.bf16.mxu0 0
        %5323 = vmatpush1.bf16.msra.mxu0 0
        %5324 = vmatprep.subr.bf16.mxu0 0
        %5325 = vmatpush1.bf16.msra.mxu0 0
        %5326 = vmatprep.mubr.bf16.mxu0 0
        %5327 = vmatmul.mubr.bf16.gmra.mrb[0].mxu0 %v5283
        %v5328 = vpop.f32.mrb[0].mxu0
        %v5329 = vadd.f32 0.0, %v5328
        %v5330 = vpop.f32.mrb[0].mxu0
        %v5331 = vpop.f32.mrb[0].mxu0
        %v5332 = vadd.f32 0.0, %v5331
        %v5333 = vpop.f32.mrb[0].mxu0
        %5334 = vmatprep.mubr.bf16.mxu0 0
        %5335 = vmatmul.mubr.bf16.gmra.mrb[0].mxu0 %v5286
        %v5336 = vpop.f32.mrb[0].mxu0
        %v5337 = vadd.f32 0.0, %v5336
        %v5338 = vpop.f32.mrb[0].mxu0
        %v5339 = vpop.f32.mrb[0].mxu0
        %v5340 = vadd.f32 0.0, %v5339
        %v5341 = vpop.f32.mrb[0].mxu0
        %5342 = vmatprep.mubr.bf16.mxu0 0
        %5343 = vmatmul.mubr.bf16.gmra.mrb[0].mxu0 %v5289
        %v5344 = vpop.f32.mrb[0].mxu0
        %v5345 = vadd.f32 0.0, %v5344
        %v5346 = vpop.f32.mrb[0].mxu0
        %v5347 = vpop.f32.mrb[0].mxu0
        %v5348 = vadd.f32 0.0, %v5347
        %v5349 = vpop.f32.mrb[0].mxu0
        %5350 = vmatprep.mubr.bf16.mxu0 0
        %5351 = vmatmul.mubr.bf16.gmra.mrb[0].mxu0 %v5292
        %v5352 = vpop.f32.mrb[0].mxu0
        %v5353 = vadd.f32 0.0, %v5352
        %v5354 = vpop.f32.mrb[0].mxu0
        %v5355 = vpop.f32.mrb[0].mxu0
        %v5356 = vadd.f32 0.0, %v5355
        %v5357 = vpop.f32.mrb[0].mxu0
        %5358 = vdwg.mxu0
        %v5359 = vadd.f32 %v4927, %v5329
        %v5360 = vadd.f32 %v4928, %v5332
        %v5361 = vadd.f32 %v4929, %v5337
        %v5362 = vadd.f32 %v4930, %v5340
        %v5363 = vadd.f32 %v4931, %v5345
        %v5364 = vadd.f32 %v4932, %v5348
        %v5365 = vadd.f32 %v4933, %v5353
        %v5366 = vadd.f32 %v4934, %v5356
        %v5367 = vld [vmem:[%s731] sm:$0x1]
        %v5369 = vlaneseq
        %v5370 = vshrl.u32 %v5369, 7
        %v5371 = vsub.s32 0, %v5370
        %v5372 = vrot.slane %v5367, %v5371
        %v5374 = vadd.f32 %v5359, %v5372
        %v5375 = vadd.f32 %v5360, %v5372
        %v5376 = vadd.f32 %v5361, %v5372
        %v5377 = vadd.f32 %v5362, %v5372
        %v5378 = vadd.f32 %v5363, %v5372
        %v5379 = vadd.f32 %v5364, %v5372
        %v5380 = vadd.f32 %v5365, %v5372
        %v5381 = vadd.f32 %v5366, %v5372
        %5382 = vst.msk [vmem:[#allocation2] sm:$0xff] %vm764, %v5374
        %5383 = vst.msk [vmem:[#allocation2 + $0x8] sm:$0xff] %vm764, %v5375
        %5384 = vst.msk [vmem:[#allocation2 + $0x10] sm:$0xff] %vm764, %v5376
        %5385 = vst.msk [vmem:[#allocation2 + $0x18] sm:$0xff] %vm764, %v5377
        %5386 = vst.msk [vmem:[#allocation2 + $0x20] sm:$0xff] %vm764, %v5378
        %5387 = vst.msk [vmem:[#allocation2 + $0x28] sm:$0xff] %vm764, %v5379
        %5388 = vst.msk [vmem:[#allocation2 + $0x30] sm:$0xff] %vm764, %v5380
        %5389 = vst.msk [vmem:[#allocation2 + $0x38] sm:$0xff] %vm764, %v5381
        %p5390 = scmp.eq.s32.totalorder %s39, 1
        // Predicated region
        $region97: #{tpu_custom_call.1} parent=71 // pred_check
          %p5391 = pneg %p5390
        $region98: #{tpu_custom_call.1} parent=71 // pred_check_branch
          %5393 = sbr.rel (%p5391) target = $region100
        $region99: #{tpu_custom_call.1} parent=71 // pred_region
          %v5394 = vsel %vm764, %v5374, 0.0
          %v5395 = vrot.slane %v5394, 4
          %v5396 = vadd.f32 %v5394, %v5395
          %v5397 = vrot.slane %v5396, 2
          %v5398 = vadd.f32 %v5396, %v5397
          %v5399 = vrot.slane %v5398, 1
          %v5400 = vadd.f32 %v5398, %v5399
          %v5401 = vsel %vm764, %v5375, 0.0
          %v5402 = vrot.slane %v5401, 4
          %v5403 = vadd.f32 %v5401, %v5402
          %v5404 = vrot.slane %v5403, 2
          %v5405 = vadd.f32 %v5403, %v5404
          %v5406 = vrot.slane %v5405, 1
          %v5407 = vadd.f32 %v5405, %v5406
          %v5408 = vsel %vm764, %v5376, 0.0
          %v5409 = vrot.slane %v5408, 4
          %v5410 = vadd.f32 %v5408, %v5409
          %v5411 = vrot.slane %v5410, 2
          %v5412 = vadd.f32 %v5410, %v5411
          %v5413 = vrot.slane %v5412, 1
          %v5414 = vadd.f32 %v5412, %v5413
          %v5415 = vsel %vm764, %v5377, 0.0
          %v5416 = vrot.slane %v5415, 4
          %v5417 = vadd.f32 %v5415, %v5416
          %v5418 = vrot.slane %v5417, 2
          %v5419 = vadd.f32 %v5417, %v5418
          %v5420 = vrot.slane %v5419, 1
          %v5421 = vadd.f32 %v5419, %v5420
          %v5422 = vsel %vm764, %v5378, 0.0
          %v5423 = vrot.slane %v5422, 4
          %v5424 = vadd.f32 %v5422, %v5423
          %v5425 = vrot.slane %v5424, 2
          %v5426 = vadd.f32 %v5424, %v5425
          %v5427 = vrot.slane %v5426, 1
          %v5428 = vadd.f32 %v5426, %v5427
          %v5429 = vsel %vm764, %v5379, 0.0
          %v5430 = vrot.slane %v5429, 4
          %v5431 = vadd.f32 %v5429, %v5430
          %v5432 = vrot.slane %v5431, 2
          %v5433 = vadd.f32 %v5431, %v5432
          %v5434 = vrot.slane %v5433, 1
          %v5435 = vadd.f32 %v5433, %v5434
          %v5436 = vsel %vm764, %v5380, 0.0
          %v5437 = vrot.slane %v5436, 4
          %v5438 = vadd.f32 %v5436, %v5437
          %v5439 = vrot.slane %v5438, 2
          %v5440 = vadd.f32 %v5438, %v5439
          %v5441 = vrot.slane %v5440, 1
          %v5442 = vadd.f32 %v5440, %v5441
          %v5443 = vsel %vm764, %v5381, 0.0
          %v5444 = vrot.slane %v5443, 4
          %v5445 = vadd.f32 %v5443, %v5444
          %v5446 = vrot.slane %v5445, 2
          %v5447 = vadd.f32 %v5445, %v5446
          %v5448 = vrot.slane %v5447, 1
          %v5449 = vadd.f32 %v5447, %v5448
          %v5450 = vmul.f32 %v5400, 0.125
          %v5451 = vmul.f32 %v5407, 0.125
          %v5452 = vmul.f32 %v5414, 0.125
          %v5453 = vmul.f32 %v5421, 0.125
          %v5454 = vmul.f32 %v5428, 0.125
          %v5455 = vmul.f32 %v5435, 0.125
          %v5456 = vmul.f32 %v5442, 0.125
          %v5457 = vmul.f32 %v5449, 0.125
          %v5458 = vmul.f32 %v5450, %v5450
          %v5459 = vmul.f32 %v5451, %v5451
          %v5460 = vmul.f32 %v5452, %v5452
          %v5461 = vmul.f32 %v5453, %v5453
          %v5462 = vmul.f32 %v5454, %v5454
          %v5463 = vmul.f32 %v5455, %v5455
          %v5464 = vmul.f32 %v5456, %v5456
          %v5465 = vmul.f32 %v5457, %v5457
          %vm5474 = vcmask 1041409
          %v5475 = vsel %vm5474, %v5459, %v5458
          %vm5476 = vcmask 1042434
          %v5477 = vsel %vm5476, %v5460, %v5475
          %vm5478 = vcmask 1043459
          %v5479 = vsel %vm5478, %v5461, %v5477
          %vm5480 = vcmask 1044484
          %v5481 = vsel %vm5480, %v5462, %v5479
          %vm5482 = vcmask 1045509
          %v5483 = vsel %vm5482, %v5463, %v5481
          %vm5484 = vcmask 1046534
          %v5485 = vsel %vm5484, %v5464, %v5483
          %vm5486 = vcmask 1047559
          %v5487 = vsel %vm5486, %v5465, %v5485
          %v5489 = vsel %vm764, %v5487, 0.0
          %5490 = vadd.xlane.f32.xlu0 %v5489
          %v5491 = vpop.xlane.xlu0 %5490
          %v5492 = vadd.f32 %v5491, 1e-12
          %v5493 = vrsqrt.pop %v5492
          %v5495 = vrot.slane %v5493, 1
          %v5496 = vrot.slane %v5493, 2
          %v5497 = vrot.slane %v5493, 3
          %v5498 = vrot.slane %v5493, 4
          %v5499 = vrot.slane %v5493, 5
          %v5500 = vrot.slane %v5493, 6
          %v5501 = vrot.slane %v5493, 7
          %v5510 = vmul.f32 %v5450, %v5493
          %v5511 = vmul.f32 %v5451, %v5495
          %v5512 = vmul.f32 %v5452, %v5496
          %v5513 = vmul.f32 %v5453, %v5497
          %v5514 = vmul.f32 %v5454, %v5498
          %v5515 = vmul.f32 %v5455, %v5499
          %v5516 = vmul.f32 %v5456, %v5500
          %v5517 = vmul.f32 %v5457, %v5501
          %v5526 = vrot.slane %v5511, 7
          %v5527 = vsel %vm5474, %v5526, %v5510
          %v5528 = vrot.slane %v5512, 6
          %v5529 = vsel %vm5476, %v5528, %v5527
          %v5530 = vrot.slane %v5513, 5
          %v5531 = vsel %vm5478, %v5530, %v5529
          %v5532 = vrot.slane %v5514, 4
          %v5533 = vsel %vm5480, %v5532, %v5531
          %v5534 = vrot.slane %v5515, 3
          %v5535 = vsel %vm5482, %v5534, %v5533
          %v5536 = vrot.slane %v5516, 2
          %v5537 = vsel %vm5484, %v5536, %v5535
          %v5538 = vrot.slane %v5517, 1
          %v5539 = vsel %vm5486, %v5538, %v5537
          %5541 = vst.msk [vmem:[#allocation12] sm:$0xff] %vm764, %v5539
        $region100: #{tpu_custom_call.1} parent=71 // pred_fallthru
          _
        // Predicated region
        $region101: #{tpu_custom_call.1} parent=71 // pred_check
          %p5542 = pneg %p402
        $region102: #{tpu_custom_call.1} parent=71 // pred_check_branch
          %5544 = sbr.rel (%p5542) target = $region104
        $region103: #{tpu_custom_call.1} parent=71 // pred_region
          %s5546 = ssub.s32 128, 128
          %5547 = vsyncadd [#allocation5], %s5546
          %s5548 = smul.addr %s38, 128
          %s5549 = scalar_lea.hbm %s13, %s5548
          %s5551 = sshll.u32 [#allocation12], 4
          %s5552 = int_to_ptr.vmem [resolvable:$true] %s5551
          %5554 = dma.vmem_to_hbm [thread:$0]  %s5552, 128, %s5549, [#allocation5]
        $region104: #{tpu_custom_call.1} parent=71 // pred_fallthru
          _
        // Predicated region
        $region105: #{tpu_custom_call.1} parent=71 // pred_check
          %p5555 = pneg %p402
        $region106: #{tpu_custom_call.1} parent=71 // pred_check_branch
          %5557 = sbr.rel (%p5555) target = $region108
        $region107: #{tpu_custom_call.1} parent=71 // pred_region
          %5558 = dma.done [#allocation5], 128
        $region108: #{tpu_custom_call.1} parent=71 // pred_fallthru
          _
      $region72: #{tpu_custom_call.1} parent=5 // pred_fallthru
        _
      %p5559 = scmp.le.s32.totalorder 2, %s29
      // Predicated region
      $region109: #{tpu_custom_call.1} parent=5 // pred_check
        %p5560 = pneg %p5559
      $region110: #{tpu_custom_call.1} parent=5 // pred_check_branch
        %5562 = sbr.rel (%p5560) target = $region112
      $region111: #{tpu_custom_call.1} parent=5 // pred_region
        %s5563 = ssub.s32 %s29, 2
      $region112: #{tpu_custom_call.1} parent=5 // pred_fallthru
        _
    $region6: #{tpu_custom_call.1} parent=1 // loop_footer
      %s33 = sadd.s32 1, %s29
    $region7: #{tpu_custom_call.1} parent=1 // loop_footer_branch
      %28 = sbr.rel target = $region3
    $region8: #{tpu_custom_call.1} parent=1 // loop_exit
      _
    %5564 = vsyncpa [#allocation4], 1
    %s5565 = scalar_lea.sflag [#allocation4], 1
    %5566 = vsyncpa %s5565, 1
    %5567 = vsyncpa [#allocation7], 1
    %s5568 = scalar_lea.sflag [#allocation7], 1
    %5569 = vsyncpa %s5568, 1
    %5570 = vsyncpa [#allocation10], 1
    %s5571 = scalar_lea.sflag [#allocation10], 1
    %5572 = vsyncpa %s5571, 1
    %5573 = vsyncpa [#allocation5], 1
    %s5574 = scalar_lea.sflag [#allocation5], 1
    %5575 = vsyncpa %s5574, 1

</llo_original>
